<compile_context>
chip_gen: v7x
topology: tpu7x:2x2x1
jax: 0.10.0
libtpu: 0.0.40
codegen_flags: <defaults>
</compile_context>

<pallas_src>
import functools

import jax
import jax.numpy as jnp
import numpy as np
from jax import lax
from jax.experimental import pallas as pl
from jax.experimental.pallas import tpu as pltpu


def down_kernel(x_ref, w1_ref, s1_ref, b1_ref, w2_ref, s2_ref, b2_ref,
                out_ref, pad1_ref, pad2_ref, *, cast_bf16):
    """Fused AvgPool2d(2) + (conv3x3 -> BN -> ReLU) x 2 for one batch block.

    x_ref  : (NB, 2*Hp, 2*Wp*Cin)   lane-packed NHWC input block
    w*_ref : (3, 3*C, Co)           per-ky im2col-flattened HWIO conv weights
    s*/b*  : (1, Co)                folded BatchNorm scale / bias
    out_ref: (NB*Hp*Wp, Co)         row-flattened output block
    pad*   : (NB, Hp+2, Wp+2, C)    VMEM halo scratch (zero border)
    """
    NB, H, WCin = x_ref.shape
    Cin = pad1_ref.shape[-1]
    Hp = H // 2
    Wp = WCin // (2 * Cin)
    Cmid = w1_ref.shape[-1]

    # ----------------- AvgPool2d(2): sums only (0.25 folded into s1) --------
    xv = x_ref[...]                                    # (NB, 2Hp, 2Wp*Cin)
    xh = xv.reshape(NB, Hp, 2, WCin)
    hsum = xh[:, :, 0, :] + xh[:, :, 1, :]             # (NB, Hp, 2Wp*Cin)
    hw = hsum.reshape(NB, Hp, Wp, 2 * Cin)
    pooled = hw[..., :Cin] + hw[..., Cin:]             # (NB, Hp, Wp, Cin)

    # ----------------- zero-halo scratch fill (border writes only) ----------
    def fill_halo(pad_ref, interior):
        nb, hp2, wp2, c = pad_ref.shape
        zrow = jnp.zeros((nb, 1, wp2, c), jnp.float32)
        zcol = jnp.zeros((nb, hp2, 1, c), jnp.float32)
        pad_ref[:, 0:1, :, :] = zrow
        pad_ref[:, hp2 - 1:hp2, :, :] = zrow
        pad_ref[:, :, 0:1, :] = zcol
        pad_ref[:, :, wp2 - 1:wp2, :] = zcol
        pad_ref[:, 1:hp2 - 1, 1:wp2 - 1, :] = interior

    # ----------------- conv3x3 (pad=1, no bias) as 3 per-ky matmuls ---------
    def conv3x3(pad_ref, w_ref):
        nb, hp2, wp2, c = pad_ref.shape
        hp, wp = hp2 - 2, wp2 - 2
        m = nb * hp * wp
        co = w_ref.shape[-1]
        acc = jnp.zeros((m, co), jnp.float32)
        for ky in range(3):                            # static unroll
            taps = [pad_ref[:, ky:ky + hp, kx:kx + wp, :] for kx in range(3)]
            patch = jnp.concatenate(taps, axis=-1).reshape(m, 3 * c)
            if cast_bf16:
                patch = patch.astype(jnp.bfloat16)     # weights pre-cast
            acc = acc + jnp.dot(patch, w_ref[ky],
                                preferred_element_type=jnp.float32)
        return acc                                     # (m, co) float32

    fill_halo(pad1_ref, pooled)
    h1 = jnp.maximum(conv3x3(pad1_ref, w1_ref) * s1_ref[...] + b1_ref[...], 0.0)
    fill_halo(pad2_ref, h1.reshape(NB, Hp, Wp, Cmid))
    h2 = jnp.maximum(conv3x3(pad2_ref, w2_ref) * s2_ref[...] + b2_ref[...], 0.0)

    out_ref[...] = h2.astype(out_ref.dtype)            # (NB*Hp*Wp, Cout)


def down_pallas(x, w1, scale1, bias1, w2, scale2, bias2, *,
                batch_block=8, use_bf16=False):
    """x: (N, H, W, Cin) NHWC float32.  Returns (N, H//2, W//2, Cout)."""
    N, H, W, Cin = x.shape
    assert H % 2 == 0 and W % 2 == 0
    Hp, Wp = H // 2, W // 2
    Cmid = w1.shape[3]
    Cout = w2.shape[3]

    # Batch elements per grid step.  Keep >= 2 grid steps whenever N >= 2 so
    # both v7x TensorCores get work and the input/output pipeline overlaps.
    NB = max(1, min(batch_block, N))
    if N >= 2:
        NB = min(NB, (N + 1) // 2)
    grid = (pl.cdiv(N, NB),)

    # ---- layout plumbing (free XLA reshapes / casts) ------------------------
    x_p = x.reshape(N, H, W * Cin)                     # lane-packed input view
    wdt = jnp.bfloat16 if use_bf16 else jnp.float32
    w1r = w1.reshape(3, 3 * Cin, Cmid).astype(wdt)     # per-ky im2col weights
    w2r = w2.reshape(3, 3 * Cmid, Cout).astype(wdt)
    s1 = (scale1 * 0.25).reshape(1, Cmid).astype(jnp.float32)  # fold avg-pool
    b1 = bias1.reshape(1, Cmid).astype(jnp.float32)
    s2 = scale2.reshape(1, Cout).astype(jnp.float32)
    b2 = bias2.reshape(1, Cout).astype(jnp.float32)

    kernel = functools.partial(down_kernel, cast_bf16=use_bf16)

    def call(single_buffer_consts):
        def const_spec(shape):
            idx = lambda i: (0,) * len(shape)
            if single_buffer_consts:
                # Grid-invariant operand: no need for double buffering.
                return pl.BlockSpec(shape, idx, pipeline_mode=pl.Buffered(1))
            return pl.BlockSpec(shape, idx)

        return pl.pallas_call(
            kernel,
            out_shape=jax.ShapeDtypeStruct((N * Hp * Wp, Cout), jnp.float32),
            grid_spec=pltpu.PrefetchScalarGridSpec(
                num_scalar_prefetch=0,
                grid=grid,
                in_specs=[
                    pl.BlockSpec((NB, H, W * Cin), lambda i: (i, 0, 0)),
                    const_spec((3, 3 * Cin, Cmid)),
                    const_spec((1, Cmid)),
                    const_spec((1, Cmid)),
                    const_spec((3, 3 * Cmid, Cout)),
                    const_spec((1, Cout)),
                    const_spec((1, Cout)),
                ],
                out_specs=pl.BlockSpec((NB * Hp * Wp, Cout),
                                       lambda i: (i, 0)),
                scratch_shapes=[
                    pltpu.VMEM((NB, Hp + 2, Wp + 2, Cin), jnp.float32),
                    pltpu.VMEM((NB, Hp + 2, Wp + 2, Cmid), jnp.float32),
                ],
            ),
            compiler_params=pltpu.CompilerParams(
                dimension_semantics=("parallel",),
                vmem_limit_bytes=48 * 1024 * 1024,
            ),
        )(x_p, w1r, s1, b1, w2r, s2, b2)

    try:
        out_flat = call(True)
    except Exception:
        # This jax build does not honor pipeline_mode on pallas_call specs;
        # fall back to default (double) buffering for the constant operands.
        out_flat = call(False)

    return out_flat.reshape(N, Hp, Wp, Cout)


def down_reference(x, w1, scale1, bias1, w2, scale2, bias2):
    """Pure-JAX reference (NHWC)."""
    N, H, W, C = x.shape
    pooled = x.reshape(N, H // 2, 2, W // 2, 2, C).mean(axis=(2, 4))
    dn = ('NHWC', 'HWIO', 'NHWC')
    h1 = lax.conv_general_dilated(pooled, w1, (1, 1), 'SAME',
                                  dimension_numbers=dn)
    h1 = jnp.maximum(h1 * scale1 + bias1, 0.0)
    h2 = lax.conv_general_dilated(h1, w2, (1, 1), 'SAME',
                                  dimension_numbers=dn)
    return jnp.maximum(h2 * scale2 + bias2, 0.0)


def fold_bn(gamma, beta, mean, var, eps=1e-5):
    scale = gamma / jnp.sqrt(var + eps)
    bias = beta - mean * scale
    return scale, bias


if __name__ == "__main__":
    key = jax.random.PRNGKey(0)
    N, Cin, H, W = 2, 4, 16, 16
    Cout = 8          # DoubleConv(in=4, out=8): mid == out == 8
    Cmid = Cout

    ks = jax.random.split(key, 4)
    x = jax.random.normal(ks[0], (N, H, W, Cin), jnp.float32)   # NHWC

    # Deterministic conv weights (HWIO), kaiming-ish scaling.
    w1 = jax.random.normal(ks[1], (3, 3, Cin, Cmid), jnp.float32) * (
        1.0 / np.sqrt(9 * Cin))
    w2 = jax.random.normal(ks[2], (3, 3, Cmid, Cout), jnp.float32) * (
        1.0 / np.sqrt(9 * Cmid))

    # Deterministic BatchNorm parameters (inference mode, folded).
    g1 = 1.0 + 0.1 * jnp.arange(Cmid, dtype=jnp.float32)
    be1 = 0.05 * jnp.arange(Cmid, dtype=jnp.float32)
    m1 = 0.01 * jnp.arange(Cmid, dtype=jnp.float32)
    v1 = 1.0 + 0.02 * jnp.arange(Cmid, dtype=jnp.float32)
    g2 = 1.0 - 0.03 * jnp.arange(Cout, dtype=jnp.float32)
    be2 = -0.02 * jnp.arange(Cout, dtype=jnp.float32)
    m2 = 0.005 * jnp.arange(Cout, dtype=jnp.float32)
    v2 = 1.0 + 0.01 * jnp.arange(Cout, dtype=jnp.float32)

    scale1, bias1 = fold_bn(g1, be1, m1, v1)
    scale2, bias2 = fold_bn(g2, be2, m2, v2)

    # --- f32 path (exact PyTorch semantics) ---------------------------------
    out = down_pallas(x, w1, scale1, bias1, w2, scale2, bias2)
    out = jax.block_until_ready(out)
    ref = down_reference(x, w1, scale1, bias1, w2, scale2, bias2)
    np.testing.assert_allclose(np.asarray(out), np.asarray(ref),
                               rtol=1e-4, atol=1e-4)

    # --- bf16 matmul operands, f32 accumulation (v6e/v7x MXU fast path) -----
    out_bf16 = down_pallas(x, w1, scale1, bias1, w2, scale2, bias2,
                           use_bf16=True)
    out_bf16 = jax.block_until_ready(out_bf16)
    np.testing.assert_allclose(np.asarray(out_bf16), np.asarray(ref),
                               rtol=5e-2, atol=5e-2)

    # --- partial last batch block (N not divisible by the batch block) ------
    x3 = jax.random.normal(ks[3], (3, H, W, Cin), jnp.float32)
    out3 = down_pallas(x3, w1, scale1, bias1, w2, scale2, bias2)
    out3 = jax.block_until_ready(out3)
    ref3 = down_reference(x3, w1, scale1, bias1, w2, scale2, bias2)
    np.testing.assert_allclose(np.asarray(out3), np.asarray(ref3),
                               rtol=1e-4, atol=1e-4)

    print("KERNEL_OK")
</pallas_src>

<mosaic_0001>
module attributes {stable_mosaic.version = 11 : i64} {
  func.func @down_kernel(%arg0: i32, %arg1: memref<1x16x64xf32, #tpu.memory_space<vmem>>, %arg2: memref<3x12x8xf32, #tpu.memory_space<vmem>>, %arg3: memref<1x8xf32, #tpu.memory_space<vmem>>, %arg4: memref<1x8xf32, #tpu.memory_space<vmem>>, %arg5: memref<3x24x8xf32, #tpu.memory_space<vmem>>, %arg6: memref<1x8xf32, #tpu.memory_space<vmem>>, %arg7: memref<1x8xf32, #tpu.memory_space<vmem>>, %arg8: memref<64x8xf32, #tpu.memory_space<vmem>>, %arg9: memref<1x10x10x4xf32, #tpu.memory_space<vmem>>, %arg10: memref<1x10x10x8xf32, #tpu.memory_space<vmem>>) attributes {dimension_semantics = [#tpu.dimension_semantics<parallel>], iteration_bounds = array<i64: 2>, scalar_prefetch = 0 : i64, scratch_operands = 2 : i64, tpu.core_type = #tpu.core_type<tc>, window_params = [{transform_indices = @transform_0, window_bounds = array<i64: 1, 16, 64>}, {pipeline_mode = #tpu.pipeline_mode<synchronous>, transform_indices = @transform_1, window_bounds = array<i64: 3, 12, 8>}, {pipeline_mode = #tpu.pipeline_mode<synchronous>, transform_indices = @transform_2, window_bounds = array<i64: 1, 8>}, {pipeline_mode = #tpu.pipeline_mode<synchronous>, transform_indices = @transform_3, window_bounds = array<i64: 1, 8>}, {pipeline_mode = #tpu.pipeline_mode<synchronous>, transform_indices = @transform_4, window_bounds = array<i64: 3, 24, 8>}, {pipeline_mode = #tpu.pipeline_mode<synchronous>, transform_indices = @transform_5, window_bounds = array<i64: 1, 8>}, {pipeline_mode = #tpu.pipeline_mode<synchronous>, transform_indices = @transform_6, window_bounds = array<i64: 1, 8>}, {transform_indices = @transform_7, window_bounds = array<i64: 64, 8>}]} {
    %c0 = arith.constant 0 : index
    %c0_0 = arith.constant 0 : index
    %c0_1 = arith.constant 0 : index
    %0 = vector.load %arg1[%c0, %c0_0, %c0_1] : memref<1x16x64xf32, #tpu.memory_space<vmem>>, vector<1x16x64xf32>
    %1 = vector.shape_cast %0 : vector<1x16x64xf32> to vector<1x8x2x64xf32>
    %2 = vector.extract_strided_slice %1 {offsets = [0, 0, 0, 0], sizes = [1, 8, 1, 64], strides = [1, 1, 1, 1]} : vector<1x8x2x64xf32> to vector<1x8x1x64xf32>
    %3 = vector.shape_cast %2 : vector<1x8x1x64xf32> to vector<1x8x64xf32>
    %4 = vector.extract_strided_slice %1 {offsets = [0, 0, 1, 0], sizes = [1, 8, 1, 64], strides = [1, 1, 1, 1]} : vector<1x8x2x64xf32> to vector<1x8x1x64xf32>
    %5 = vector.shape_cast %4 : vector<1x8x1x64xf32> to vector<1x8x64xf32>
    %6 = arith.addf %3, %5 : vector<1x8x64xf32>
    %7 = vector.shape_cast %6 : vector<1x8x64xf32> to vector<1x8x8x8xf32>
    %8 = vector.extract_strided_slice %7 {offsets = [0, 0, 0, 0], sizes = [1, 8, 8, 4], strides = [1, 1, 1, 1]} : vector<1x8x8x8xf32> to vector<1x8x8x4xf32>
    %9 = vector.extract_strided_slice %7 {offsets = [0, 0, 0, 4], sizes = [1, 8, 8, 4], strides = [1, 1, 1, 1]} : vector<1x8x8x8xf32> to vector<1x8x8x4xf32>
    %10 = arith.addf %8, %9 : vector<1x8x8x4xf32>
    %cst = arith.constant 0.000000e+00 : f32
    %11 = vector.broadcast %cst : f32 to vector<1x1x10x4xf32>
    %cst_2 = arith.constant 0.000000e+00 : f32
    %12 = vector.broadcast %cst_2 : f32 to vector<1x10x1x4xf32>
    %c0_3 = arith.constant 0 : index
    %c0_4 = arith.constant 0 : index
    %c0_5 = arith.constant 0 : index
    %c0_6 = arith.constant 0 : index
    %13 = vector.load %arg9[%c0_3, %c0_4, %c0_5, %c0_6] : memref<1x10x10x4xf32, #tpu.memory_space<vmem>>, vector<1x1x10x4xf32>
    tpu.vector_store %arg9[%c0_3, %c0_4, %c0_5, %c0_6], %11 {strides = array<i32>} : memref<1x10x10x4xf32, #tpu.memory_space<vmem>>, vector<1x1x10x4xf32>,
    %c0_7 = arith.constant 0 : index
    %c9 = arith.constant 9 : index
    %c0_8 = arith.constant 0 : index
    %c0_9 = arith.constant 0 : index
    %14 = vector.load %arg9[%c0_7, %c9, %c0_8, %c0_9] : memref<1x10x10x4xf32, #tpu.memory_space<vmem>>, vector<1x1x10x4xf32>
    tpu.vector_store %arg9[%c0_7, %c9, %c0_8, %c0_9], %11 {strides = array<i32>} : memref<1x10x10x4xf32, #tpu.memory_space<vmem>>, vector<1x1x10x4xf32>,
    %c0_10 = arith.constant 0 : index
    %c0_11 = arith.constant 0 : index
    %c0_12 = arith.constant 0 : index
    %c0_13 = arith.constant 0 : index
    %15 = vector.load %arg9[%c0_10, %c0_11, %c0_12, %c0_13] : memref<1x10x10x4xf32, #tpu.memory_space<vmem>>, vector<1x10x1x4xf32>
    tpu.vector_store %arg9[%c0_10, %c0_11, %c0_12, %c0_13], %12 {strides = array<i32>} : memref<1x10x10x4xf32, #tpu.memory_space<vmem>>, vector<1x10x1x4xf32>,
    %c0_14 = arith.constant 0 : index
    %c0_15 = arith.constant 0 : index
    %c9_16 = arith.constant 9 : index
    %c0_17 = arith.constant 0 : index
    %16 = vector.load %arg9[%c0_14, %c0_15, %c9_16, %c0_17] : memref<1x10x10x4xf32, #tpu.memory_space<vmem>>, vector<1x10x1x4xf32>
    tpu.vector_store %arg9[%c0_14, %c0_15, %c9_16, %c0_17], %12 {strides = array<i32>} : memref<1x10x10x4xf32, #tpu.memory_space<vmem>>, vector<1x10x1x4xf32>,
    %c0_18 = arith.constant 0 : index
    %c1 = arith.constant 1 : index
    %c1_19 = arith.constant 1 : index
    %c0_20 = arith.constant 0 : index
    %17 = vector.load %arg9[%c0_18, %c1, %c1_19, %c0_20] : memref<1x10x10x4xf32, #tpu.memory_space<vmem>>, vector<1x8x8x4xf32>
    tpu.vector_store %arg9[%c0_18, %c1, %c1_19, %c0_20], %10 {strides = array<i32>} : memref<1x10x10x4xf32, #tpu.memory_space<vmem>>, vector<1x8x8x4xf32>,
    %cst_21 = arith.constant 0.000000e+00 : f32
    %18 = vector.broadcast %cst_21 : f32 to vector<64x8xf32>
    %c0_22 = arith.constant 0 : index
    %c0_23 = arith.constant 0 : index
    %c0_24 = arith.constant 0 : index
    %c0_25 = arith.constant 0 : index
    %19 = vector.load %arg9[%c0_22, %c0_23, %c0_24, %c0_25] : memref<1x10x10x4xf32, #tpu.memory_space<vmem>>, vector<1x8x8x4xf32>
    %c0_26 = arith.constant 0 : index
    %c0_27 = arith.constant 0 : index
    %c1_28 = arith.constant 1 : index
    %c0_29 = arith.constant 0 : index
    %20 = vector.load %arg9[%c0_26, %c0_27, %c1_28, %c0_29] : memref<1x10x10x4xf32, #tpu.memory_space<vmem>>, vector<1x8x8x4xf32>
    %c0_30 = arith.constant 0 : index
    %c0_31 = arith.constant 0 : index
    %c2 = arith.constant 2 : index
    %c0_32 = arith.constant 0 : index
    %21 = vector.load %arg9[%c0_30, %c0_31, %c2, %c0_32] : memref<1x10x10x4xf32, #tpu.memory_space<vmem>>, vector<1x8x8x4xf32>
    %22 = tpu.concatenate %19, %20, %21 in 3 : vector<1x8x8x4xf32>, vector<1x8x8x4xf32>, vector<1x8x8x4xf32> -> vector<1x8x8x12xf32>
    %23 = vector.shape_cast %22 : vector<1x8x8x12xf32> to vector<64x12xf32>
    %c0_33 = arith.constant 0 : index
    %c0_34 = arith.constant 0 : index
    %c0_35 = arith.constant 0 : index
    %24 = vector.load %arg2[%c0_33, %c0_34, %c0_35] : memref<3x12x8xf32, #tpu.memory_space<vmem>>, vector<1x12x8xf32>
    %25 = vector.shape_cast %24 : vector<1x12x8xf32> to vector<12x8xf32>
    %cst_36 = arith.constant dense<0.000000e+00> : vector<64x8xf32>
    %26 = tpu.matmul %23, %25, %cst_36 {dimension_numbers = #tpu.dot_dimension_numbers<[1], [0], [0], [1], [0, 0, 1, 1], [], []>} : vector<64x12xf32>, vector<12x8xf32>, vector<64x8xf32> -> vector<64x8xf32>
    %27 = arith.addf %18, %26 : vector<64x8xf32>
    %c0_37 = arith.constant 0 : index
    %c1_38 = arith.constant 1 : index
    %c0_39 = arith.constant 0 : index
    %c0_40 = arith.constant 0 : index
    %28 = vector.load %arg9[%c0_37, %c1_38, %c0_39, %c0_40] : memref<1x10x10x4xf32, #tpu.memory_space<vmem>>, vector<1x8x8x4xf32>
    %c0_41 = arith.constant 0 : index
    %c1_42 = arith.constant 1 : index
    %c1_43 = arith.constant 1 : index
    %c0_44 = arith.constant 0 : index
    %29 = vector.load %arg9[%c0_41, %c1_42, %c1_43, %c0_44] : memref<1x10x10x4xf32, #tpu.memory_space<vmem>>, vector<1x8x8x4xf32>
    %c0_45 = arith.constant 0 : index
    %c1_46 = arith.constant 1 : index
    %c2_47 = arith.constant 2 : index
    %c0_48 = arith.constant 0 : index
    %30 = vector.load %arg9[%c0_45, %c1_46, %c2_47, %c0_48] : memref<1x10x10x4xf32, #tpu.memory_space<vmem>>, vector<1x8x8x4xf32>
    %31 = tpu.concatenate %28, %29, %30 in 3 : vector<1x8x8x4xf32>, vector<1x8x8x4xf32>, vector<1x8x8x4xf32> -> vector<1x8x8x12xf32>
    %32 = vector.shape_cast %31 : vector<1x8x8x12xf32> to vector<64x12xf32>
    %c1_49 = arith.constant 1 : index
    %c0_50 = arith.constant 0 : index
    %c0_51 = arith.constant 0 : index
    %33 = vector.load %arg2[%c1_49, %c0_50, %c0_51] : memref<3x12x8xf32, #tpu.memory_space<vmem>>, vector<1x12x8xf32>
    %34 = vector.shape_cast %33 : vector<1x12x8xf32> to vector<12x8xf32>
    %cst_52 = arith.constant dense<0.000000e+00> : vector<64x8xf32>
    %35 = tpu.matmul %32, %34, %cst_52 {dimension_numbers = #tpu.dot_dimension_numbers<[1], [0], [0], [1], [0, 0, 1, 1], [], []>} : vector<64x12xf32>, vector<12x8xf32>, vector<64x8xf32> -> vector<64x8xf32>
    %36 = arith.addf %27, %35 : vector<64x8xf32>
    %c0_53 = arith.constant 0 : index
    %c2_54 = arith.constant 2 : index
    %c0_55 = arith.constant 0 : index
    %c0_56 = arith.constant 0 : index
    %37 = vector.load %arg9[%c0_53, %c2_54, %c0_55, %c0_56] : memref<1x10x10x4xf32, #tpu.memory_space<vmem>>, vector<1x8x8x4xf32>
    %c0_57 = arith.constant 0 : index
    %c2_58 = arith.constant 2 : index
    %c1_59 = arith.constant 1 : index
    %c0_60 = arith.constant 0 : index
    %38 = vector.load %arg9[%c0_57, %c2_58, %c1_59, %c0_60] : memref<1x10x10x4xf32, #tpu.memory_space<vmem>>, vector<1x8x8x4xf32>
    %c0_61 = arith.constant 0 : index
    %c2_62 = arith.constant 2 : index
    %c2_63 = arith.constant 2 : index
    %c0_64 = arith.constant 0 : index
    %39 = vector.load %arg9[%c0_61, %c2_62, %c2_63, %c0_64] : memref<1x10x10x4xf32, #tpu.memory_space<vmem>>, vector<1x8x8x4xf32>
    %40 = tpu.concatenate %37, %38, %39 in 3 : vector<1x8x8x4xf32>, vector<1x8x8x4xf32>, vector<1x8x8x4xf32> -> vector<1x8x8x12xf32>
    %41 = vector.shape_cast %40 : vector<1x8x8x12xf32> to vector<64x12xf32>
    %c2_65 = arith.constant 2 : index
    %c0_66 = arith.constant 0 : index
    %c0_67 = arith.constant 0 : index
    %42 = vector.load %arg2[%c2_65, %c0_66, %c0_67] : memref<3x12x8xf32, #tpu.memory_space<vmem>>, vector<1x12x8xf32>
    %43 = vector.shape_cast %42 : vector<1x12x8xf32> to vector<12x8xf32>
    %cst_68 = arith.constant dense<0.000000e+00> : vector<64x8xf32>
    %44 = tpu.matmul %41, %43, %cst_68 {dimension_numbers = #tpu.dot_dimension_numbers<[1], [0], [0], [1], [0, 0, 1, 1], [], []>} : vector<64x12xf32>, vector<12x8xf32>, vector<64x8xf32> -> vector<64x8xf32>
    %45 = arith.addf %36, %44 : vector<64x8xf32>
    %c0_69 = arith.constant 0 : index
    %c0_70 = arith.constant 0 : index
    %46 = vector.load %arg3[%c0_69, %c0_70] : memref<1x8xf32, #tpu.memory_space<vmem>>, vector<1x8xf32>
    %47 = vector.broadcast %46 : vector<1x8xf32> to vector<64x8xf32>
    %48 = arith.mulf %45, %47 : vector<64x8xf32>
    %c0_71 = arith.constant 0 : index
    %c0_72 = arith.constant 0 : index
    %49 = vector.load %arg4[%c0_71, %c0_72] : memref<1x8xf32, #tpu.memory_space<vmem>>, vector<1x8xf32>
    %50 = vector.broadcast %49 : vector<1x8xf32> to vector<64x8xf32>
    %51 = arith.addf %48, %50 : vector<64x8xf32>
    %cst_73 = arith.constant 0.000000e+00 : f32
    %52 = vector.broadcast %cst_73 : f32 to vector<64x8xf32>
    %53 = arith.maximumf %51, %52 : vector<64x8xf32>
    %54 = vector.shape_cast %53 : vector<64x8xf32> to vector<1x8x8x8xf32>
    %cst_74 = arith.constant 0.000000e+00 : f32
    %55 = vector.broadcast %cst_74 : f32 to vector<1x1x10x8xf32>
    %cst_75 = arith.constant 0.000000e+00 : f32
    %56 = vector.broadcast %cst_75 : f32 to vector<1x10x1x8xf32>
    %c0_76 = arith.constant 0 : index
    %c0_77 = arith.constant 0 : index
    %c0_78 = arith.constant 0 : index
    %c0_79 = arith.constant 0 : index
    %57 = vector.load %arg10[%c0_76, %c0_77, %c0_78, %c0_79] : memref<1x10x10x8xf32, #tpu.memory_space<vmem>>, vector<1x1x10x8xf32>
    tpu.vector_store %arg10[%c0_76, %c0_77, %c0_78, %c0_79], %55 {strides = array<i32>} : memref<1x10x10x8xf32, #tpu.memory_space<vmem>>, vector<1x1x10x8xf32>,
    %c0_80 = arith.constant 0 : index
    %c9_81 = arith.constant 9 : index
    %c0_82 = arith.constant 0 : index
    %c0_83 = arith.constant 0 : index
    %58 = vector.load %arg10[%c0_80, %c9_81, %c0_82, %c0_83] : memref<1x10x10x8xf32, #tpu.memory_space<vmem>>, vector<1x1x10x8xf32>
    tpu.vector_store %arg10[%c0_80, %c9_81, %c0_82, %c0_83], %55 {strides = array<i32>} : memref<1x10x10x8xf32, #tpu.memory_space<vmem>>, vector<1x1x10x8xf32>,
    %c0_84 = arith.constant 0 : index
    %c0_85 = arith.constant 0 : index
    %c0_86 = arith.constant 0 : index
    %c0_87 = arith.constant 0 : index
    %59 = vector.load %arg10[%c0_84, %c0_85, %c0_86, %c0_87] : memref<1x10x10x8xf32, #tpu.memory_space<vmem>>, vector<1x10x1x8xf32>
    tpu.vector_store %arg10[%c0_84, %c0_85, %c0_86, %c0_87], %56 {strides = array<i32>} : memref<1x10x10x8xf32, #tpu.memory_space<vmem>>, vector<1x10x1x8xf32>,
    %c0_88 = arith.constant 0 : index
    %c0_89 = arith.constant 0 : index
    %c9_90 = arith.constant 9 : index
    %c0_91 = arith.constant 0 : index
    %60 = vector.load %arg10[%c0_88, %c0_89, %c9_90, %c0_91] : memref<1x10x10x8xf32, #tpu.memory_space<vmem>>, vector<1x10x1x8xf32>
    tpu.vector_store %arg10[%c0_88, %c0_89, %c9_90, %c0_91], %56 {strides = array<i32>} : memref<1x10x10x8xf32, #tpu.memory_space<vmem>>, vector<1x10x1x8xf32>,
    %c0_92 = arith.constant 0 : index
    %c1_93 = arith.constant 1 : index
    %c1_94 = arith.constant 1 : index
    %c0_95 = arith.constant 0 : index
    %61 = vector.load %arg10[%c0_92, %c1_93, %c1_94, %c0_95] : memref<1x10x10x8xf32, #tpu.memory_space<vmem>>, vector<1x8x8x8xf32>
    tpu.vector_store %arg10[%c0_92, %c1_93, %c1_94, %c0_95], %54 {strides = array<i32>} : memref<1x10x10x8xf32, #tpu.memory_space<vmem>>, vector<1x8x8x8xf32>,
    %cst_96 = arith.constant 0.000000e+00 : f32
    %62 = vector.broadcast %cst_96 : f32 to vector<64x8xf32>
    %c0_97 = arith.constant 0 : index
    %c0_98 = arith.constant 0 : index
    %c0_99 = arith.constant 0 : index
    %c0_100 = arith.constant 0 : index
    %63 = vector.load %arg10[%c0_97, %c0_98, %c0_99, %c0_100] : memref<1x10x10x8xf32, #tpu.memory_space<vmem>>, vector<1x8x8x8xf32>
    %c0_101 = arith.constant 0 : index
    %c0_102 = arith.constant 0 : index
    %c1_103 = arith.constant 1 : index
    %c0_104 = arith.constant 0 : index
    %64 = vector.load %arg10[%c0_101, %c0_102, %c1_103, %c0_104] : memref<1x10x10x8xf32, #tpu.memory_space<vmem>>, vector<1x8x8x8xf32>
    %c0_105 = arith.constant 0 : index
    %c0_106 = arith.constant 0 : index
    %c2_107 = arith.constant 2 : index
    %c0_108 = arith.constant 0 : index
    %65 = vector.load %arg10[%c0_105, %c0_106, %c2_107, %c0_108] : memref<1x10x10x8xf32, #tpu.memory_space<vmem>>, vector<1x8x8x8xf32>
    %66 = tpu.concatenate %63, %64, %65 in 3 : vector<1x8x8x8xf32>, vector<1x8x8x8xf32>, vector<1x8x8x8xf32> -> vector<1x8x8x24xf32>
    %67 = vector.shape_cast %66 : vector<1x8x8x24xf32> to vector<64x24xf32>
    %c0_109 = arith.constant 0 : index
    %c0_110 = arith.constant 0 : index
    %c0_111 = arith.constant 0 : index
    %68 = vector.load %arg5[%c0_109, %c0_110, %c0_111] : memref<3x24x8xf32, #tpu.memory_space<vmem>>, vector<1x24x8xf32>
    %69 = vector.shape_cast %68 : vector<1x24x8xf32> to vector<24x8xf32>
    %cst_112 = arith.constant dense<0.000000e+00> : vector<64x8xf32>
    %70 = tpu.matmul %67, %69, %cst_112 {dimension_numbers = #tpu.dot_dimension_numbers<[1], [0], [0], [1], [0, 0, 1, 1], [], []>} : vector<64x24xf32>, vector<24x8xf32>, vector<64x8xf32> -> vector<64x8xf32>
    %71 = arith.addf %62, %70 : vector<64x8xf32>
    %c0_113 = arith.constant 0 : index
    %c1_114 = arith.constant 1 : index
    %c0_115 = arith.constant 0 : index
    %c0_116 = arith.constant 0 : index
    %72 = vector.load %arg10[%c0_113, %c1_114, %c0_115, %c0_116] : memref<1x10x10x8xf32, #tpu.memory_space<vmem>>, vector<1x8x8x8xf32>
    %c0_117 = arith.constant 0 : index
    %c1_118 = arith.constant 1 : index
    %c1_119 = arith.constant 1 : index
    %c0_120 = arith.constant 0 : index
    %73 = vector.load %arg10[%c0_117, %c1_118, %c1_119, %c0_120] : memref<1x10x10x8xf32, #tpu.memory_space<vmem>>, vector<1x8x8x8xf32>
    %c0_121 = arith.constant 0 : index
    %c1_122 = arith.constant 1 : index
    %c2_123 = arith.constant 2 : index
    %c0_124 = arith.constant 0 : index
    %74 = vector.load %arg10[%c0_121, %c1_122, %c2_123, %c0_124] : memref<1x10x10x8xf32, #tpu.memory_space<vmem>>, vector<1x8x8x8xf32>
    %75 = tpu.concatenate %72, %73, %74 in 3 : vector<1x8x8x8xf32>, vector<1x8x8x8xf32>, vector<1x8x8x8xf32> -> vector<1x8x8x24xf32>
    %76 = vector.shape_cast %75 : vector<1x8x8x24xf32> to vector<64x24xf32>
    %c1_125 = arith.constant 1 : index
    %c0_126 = arith.constant 0 : index
    %c0_127 = arith.constant 0 : index
    %77 = vector.load %arg5[%c1_125, %c0_126, %c0_127] : memref<3x24x8xf32, #tpu.memory_space<vmem>>, vector<1x24x8xf32>
    %78 = vector.shape_cast %77 : vector<1x24x8xf32> to vector<24x8xf32>
    %cst_128 = arith.constant dense<0.000000e+00> : vector<64x8xf32>
    %79 = tpu.matmul %76, %78, %cst_128 {dimension_numbers = #tpu.dot_dimension_numbers<[1], [0], [0], [1], [0, 0, 1, 1], [], []>} : vector<64x24xf32>, vector<24x8xf32>, vector<64x8xf32> -> vector<64x8xf32>
    %80 = arith.addf %71, %79 : vector<64x8xf32>
    %c0_129 = arith.constant 0 : index
    %c2_130 = arith.constant 2 : index
    %c0_131 = arith.constant 0 : index
    %c0_132 = arith.constant 0 : index
    %81 = vector.load %arg10[%c0_129, %c2_130, %c0_131, %c0_132] : memref<1x10x10x8xf32, #tpu.memory_space<vmem>>, vector<1x8x8x8xf32>
    %c0_133 = arith.constant 0 : index
    %c2_134 = arith.constant 2 : index
    %c1_135 = arith.constant 1 : index
    %c0_136 = arith.constant 0 : index
    %82 = vector.load %arg10[%c0_133, %c2_134, %c1_135, %c0_136] : memref<1x10x10x8xf32, #tpu.memory_space<vmem>>, vector<1x8x8x8xf32>
    %c0_137 = arith.constant 0 : index
    %c2_138 = arith.constant 2 : index
    %c2_139 = arith.constant 2 : index
    %c0_140 = arith.constant 0 : index
    %83 = vector.load %arg10[%c0_137, %c2_138, %c2_139, %c0_140] : memref<1x10x10x8xf32, #tpu.memory_space<vmem>>, vector<1x8x8x8xf32>
    %84 = tpu.concatenate %81, %82, %83 in 3 : vector<1x8x8x8xf32>, vector<1x8x8x8xf32>, vector<1x8x8x8xf32> -> vector<1x8x8x24xf32>
    %85 = vector.shape_cast %84 : vector<1x8x8x24xf32> to vector<64x24xf32>
    %c2_141 = arith.constant 2 : index
    %c0_142 = arith.constant 0 : index
    %c0_143 = arith.constant 0 : index
    %86 = vector.load %arg5[%c2_141, %c0_142, %c0_143] : memref<3x24x8xf32, #tpu.memory_space<vmem>>, vector<1x24x8xf32>
    %87 = vector.shape_cast %86 : vector<1x24x8xf32> to vector<24x8xf32>
    %cst_144 = arith.constant dense<0.000000e+00> : vector<64x8xf32>
    %88 = tpu.matmul %85, %87, %cst_144 {dimension_numbers = #tpu.dot_dimension_numbers<[1], [0], [0], [1], [0, 0, 1, 1], [], []>} : vector<64x24xf32>, vector<24x8xf32>, vector<64x8xf32> -> vector<64x8xf32>
    %89 = arith.addf %80, %88 : vector<64x8xf32>
    %c0_145 = arith.constant 0 : index
    %c0_146 = arith.constant 0 : index
    %90 = vector.load %arg6[%c0_145, %c0_146] : memref<1x8xf32, #tpu.memory_space<vmem>>, vector<1x8xf32>
    %91 = vector.broadcast %90 : vector<1x8xf32> to vector<64x8xf32>
    %92 = arith.mulf %89, %91 : vector<64x8xf32>
    %c0_147 = arith.constant 0 : index
    %c0_148 = arith.constant 0 : index
    %93 = vector.load %arg7[%c0_147, %c0_148] : memref<1x8xf32, #tpu.memory_space<vmem>>, vector<1x8xf32>
    %94 = vector.broadcast %93 : vector<1x8xf32> to vector<64x8xf32>
    %95 = arith.addf %92, %94 : vector<64x8xf32>
    %cst_149 = arith.constant 0.000000e+00 : f32
    %96 = vector.broadcast %cst_149 : f32 to vector<64x8xf32>
    %97 = arith.maximumf %95, %96 : vector<64x8xf32>
    %c0_150 = arith.constant 0 : index
    %c0_151 = arith.constant 0 : index
    %98 = vector.load %arg8[%c0_150, %c0_151] : memref<64x8xf32, #tpu.memory_space<vmem>>, vector<64x8xf32>
    tpu.vector_store %arg8[%c0_150, %c0_151], %97 {strides = array<i32>} : memref<64x8xf32, #tpu.memory_space<vmem>>, vector<64x8xf32>,
    return
  }
  func.func @transform_0(%arg0: i32) -> (i32, i32, i32) {
    %c0_i32 = arith.constant 0 : i32
    %c0_i32_0 = arith.constant 0 : i32
    %c0_i32_1 = arith.constant 0 : i32
    return %arg0, %c0_i32, %c0_i32_0 : i32, i32, i32
  }
  func.func @transform_1(%arg0: i32) -> (i32, i32, i32) {
    %c0_i32 = arith.constant 0 : i32
    %c0_i32_0 = arith.constant 0 : i32
    %c0_i32_1 = arith.constant 0 : i32
    %c0_i32_2 = arith.constant 0 : i32
    return %c0_i32, %c0_i32_0, %c0_i32_1 : i32, i32, i32
  }
  func.func @transform_2(%arg0: i32) -> (i32, i32) {
    %c0_i32 = arith.constant 0 : i32
    %c0_i32_0 = arith.constant 0 : i32
    %c0_i32_1 = arith.constant 0 : i32
    return %c0_i32, %c0_i32_0 : i32, i32
  }
  func.func @transform_3(%arg0: i32) -> (i32, i32) {
    %c0_i32 = arith.constant 0 : i32
    %c0_i32_0 = arith.constant 0 : i32
    %c0_i32_1 = arith.constant 0 : i32
    return %c0_i32, %c0_i32_0 : i32, i32
  }
  func.func @transform_4(%arg0: i32) -> (i32, i32, i32) {
    %c0_i32 = arith.constant 0 : i32
    %c0_i32_0 = arith.constant 0 : i32
    %c0_i32_1 = arith.constant 0 : i32
    %c0_i32_2 = arith.constant 0 : i32
    return %c0_i32, %c0_i32_0, %c0_i32_1 : i32, i32, i32
  }
  func.func @transform_5(%arg0: i32) -> (i32, i32) {
    %c0_i32 = arith.constant 0 : i32
    %c0_i32_0 = arith.constant 0 : i32
    %c0_i32_1 = arith.constant 0 : i32
    return %c0_i32, %c0_i32_0 : i32, i32
  }
  func.func @transform_6(%arg0: i32) -> (i32, i32) {
    %c0_i32 = arith.constant 0 : i32
    %c0_i32_0 = arith.constant 0 : i32
    %c0_i32_1 = arith.constant 0 : i32
    return %c0_i32, %c0_i32_0 : i32, i32
  }
  func.func @transform_7(%arg0: i32) -> (i32, i32) {
    %c0_i32 = arith.constant 0 : i32
    %c0_i32_0 = arith.constant 0 : i32
    return %arg0, %c0_i32 : i32, i32
  }
}

module attributes {stable_mosaic.version = 11 : i64} {
  func.func @down_kernel(%arg0: i32, %arg1: memref<1x16x64xf32, #tpu.memory_space<vmem>>, %arg2: memref<3x12x8xf32, #tpu.memory_space<vmem>>, %arg3: memref<1x8xf32, #tpu.memory_space<vmem>>, %arg4: memref<1x8xf32, #tpu.memory_space<vmem>>, %arg5: memref<3x24x8xf32, #tpu.memory_space<vmem>>, %arg6: memref<1x8xf32, #tpu.memory_space<vmem>>, %arg7: memref<1x8xf32, #tpu.memory_space<vmem>>, %arg8: memref<64x8xf32, #tpu.memory_space<vmem>>, %arg9: memref<1x10x10x4xf32, #tpu.memory_space<vmem>>, %arg10: memref<1x10x10x8xf32, #tpu.memory_space<vmem>>) attributes {dimension_semantics = [#tpu.dimension_semantics<parallel>], iteration_bounds = array<i64: 2>, scalar_prefetch = 0 : i64, scratch_operands = 2 : i64, tpu.core_type = #tpu.core_type<tc>, window_params = [{transform_indices = @transform_0, window_bounds = array<i64: 1, 16, 64>}, {pipeline_mode = #tpu.pipeline_mode<synchronous>, transform_indices = @transform_1, window_bounds = array<i64: 3, 12, 8>}, {pipeline_mode = #tpu.pipeline_mode<synchronous>, transform_indices = @transform_2, window_bounds = array<i64: 1, 8>}, {pipeline_mode = #tpu.pipeline_mode<synchronous>, transform_indices = @transform_3, window_bounds = array<i64: 1, 8>}, {pipeline_mode = #tpu.pipeline_mode<synchronous>, transform_indices = @transform_4, window_bounds = array<i64: 3, 24, 8>}, {pipeline_mode = #tpu.pipeline_mode<synchronous>, transform_indices = @transform_5, window_bounds = array<i64: 1, 8>}, {pipeline_mode = #tpu.pipeline_mode<synchronous>, transform_indices = @transform_6, window_bounds = array<i64: 1, 8>}, {transform_indices = @transform_7, window_bounds = array<i64: 64, 8>}]} {
    %c0 = arith.constant 0 : index
    %c0_0 = arith.constant 0 : index
    %c0_1 = arith.constant 0 : index
    %0 = vector.load %arg1[%c0, %c0_0, %c0_1] : memref<1x16x64xf32, #tpu.memory_space<vmem>>, vector<1x16x64xf32>
    %1 = vector.shape_cast %0 : vector<1x16x64xf32> to vector<1x8x2x64xf32>
    %2 = vector.extract_strided_slice %1 {offsets = [0, 0, 0, 0], sizes = [1, 8, 1, 64], strides = [1, 1, 1, 1]} : vector<1x8x2x64xf32> to vector<1x8x1x64xf32>
    %3 = vector.shape_cast %2 : vector<1x8x1x64xf32> to vector<1x8x64xf32>
    %4 = vector.extract_strided_slice %1 {offsets = [0, 0, 1, 0], sizes = [1, 8, 1, 64], strides = [1, 1, 1, 1]} : vector<1x8x2x64xf32> to vector<1x8x1x64xf32>
    %5 = vector.shape_cast %4 : vector<1x8x1x64xf32> to vector<1x8x64xf32>
    %6 = arith.addf %3, %5 : vector<1x8x64xf32>
    %7 = vector.shape_cast %6 : vector<1x8x64xf32> to vector<1x8x8x8xf32>
    %8 = vector.extract_strided_slice %7 {offsets = [0, 0, 0, 0], sizes = [1, 8, 8, 4], strides = [1, 1, 1, 1]} : vector<1x8x8x8xf32> to vector<1x8x8x4xf32>
    %9 = vector.extract_strided_slice %7 {offsets = [0, 0, 0, 4], sizes = [1, 8, 8, 4], strides = [1, 1, 1, 1]} : vector<1x8x8x8xf32> to vector<1x8x8x4xf32>
    %10 = arith.addf %8, %9 : vector<1x8x8x4xf32>
    %cst = arith.constant 0.000000e+00 : f32
    %11 = vector.broadcast %cst : f32 to vector<1x1x10x4xf32>
    %cst_2 = arith.constant 0.000000e+00 : f32
    %12 = vector.broadcast %cst_2 : f32 to vector<1x10x1x4xf32>
    %c0_3 = arith.constant 0 : index
    %c0_4 = arith.constant 0 : index
    %c0_5 = arith.constant 0 : index
    %c0_6 = arith.constant 0 : index
    %13 = vector.load %arg9[%c0_3, %c0_4, %c0_5, %c0_6] : memref<1x10x10x4xf32, #tpu.memory_space<vmem>>, vector<1x1x10x4xf32>
    tpu.vector_store %arg9[%c0_3, %c0_4, %c0_5, %c0_6], %11 {strides = array<i32>} : memref<1x10x10x4xf32, #tpu.memory_space<vmem>>, vector<1x1x10x4xf32>,
    %c0_7 = arith.constant 0 : index
    %c9 = arith.constant 9 : index
    %c0_8 = arith.constant 0 : index
    %c0_9 = arith.constant 0 : index
    %14 = vector.load %arg9[%c0_7, %c9, %c0_8, %c0_9] : memref<1x10x10x4xf32, #tpu.memory_space<vmem>>, vector<1x1x10x4xf32>
    tpu.vector_store %arg9[%c0_7, %c9, %c0_8, %c0_9], %11 {strides = array<i32>} : memref<1x10x10x4xf32, #tpu.memory_space<vmem>>, vector<1x1x10x4xf32>,
    %c0_10 = arith.constant 0 : index
    %c0_11 = arith.constant 0 : index
    %c0_12 = arith.constant 0 : index
    %c0_13 = arith.constant 0 : index
    %15 = vector.load %arg9[%c0_10, %c0_11, %c0_12, %c0_13] : memref<1x10x10x4xf32, #tpu.memory_space<vmem>>, vector<1x10x1x4xf32>
    tpu.vector_store %arg9[%c0_10, %c0_11, %c0_12, %c0_13], %12 {strides = array<i32>} : memref<1x10x10x4xf32, #tpu.memory_space<vmem>>, vector<1x10x1x4xf32>,
    %c0_14 = arith.constant 0 : index
    %c0_15 = arith.constant 0 : index
    %c9_16 = arith.constant 9 : index
    %c0_17 = arith.constant 0 : index
    %16 = vector.load %arg9[%c0_14, %c0_15, %c9_16, %c0_17] : memref<1x10x10x4xf32, #tpu.memory_space<vmem>>, vector<1x10x1x4xf32>
    tpu.vector_store %arg9[%c0_14, %c0_15, %c9_16, %c0_17], %12 {strides = array<i32>} : memref<1x10x10x4xf32, #tpu.memory_space<vmem>>, vector<1x10x1x4xf32>,
    %c0_18 = arith.constant 0 : index
    %c1 = arith.constant 1 : index
    %c1_19 = arith.constant 1 : index
    %c0_20 = arith.constant 0 : index
    %17 = vector.load %arg9[%c0_18, %c1, %c1_19, %c0_20] : memref<1x10x10x4xf32, #tpu.memory_space<vmem>>, vector<1x8x8x4xf32>
    tpu.vector_store %arg9[%c0_18, %c1, %c1_19, %c0_20], %10 {strides = array<i32>} : memref<1x10x10x4xf32, #tpu.memory_space<vmem>>, vector<1x8x8x4xf32>,
    %cst_21 = arith.constant 0.000000e+00 : f32
    %18 = vector.broadcast %cst_21 : f32 to vector<64x8xf32>
    %c0_22 = arith.constant 0 : index
    %c0_23 = arith.constant 0 : index
    %c0_24 = arith.constant 0 : index
    %c0_25 = arith.constant 0 : index
    %19 = vector.load %arg9[%c0_22, %c0_23, %c0_24, %c0_25] : memref<1x10x10x4xf32, #tpu.memory_space<vmem>>, vector<1x8x8x4xf32>
    %c0_26 = arith.constant 0 : index
    %c0_27 = arith.constant 0 : index
    %c1_28 = arith.constant 1 : index
    %c0_29 = arith.constant 0 : index
    %20 = vector.load %arg9[%c0_26, %c0_27, %c1_28, %c0_29] : memref<1x10x10x4xf32, #tpu.memory_space<vmem>>, vector<1x8x8x4xf32>
    %c0_30 = arith.constant 0 : index
    %c0_31 = arith.constant 0 : index
    %c2 = arith.constant 2 : index
    %c0_32 = arith.constant 0 : index
    %21 = vector.load %arg9[%c0_30, %c0_31, %c2, %c0_32] : memref<1x10x10x4xf32, #tpu.memory_space<vmem>>, vector<1x8x8x4xf32>
    %22 = tpu.concatenate %19, %20, %21 in 3 : vector<1x8x8x4xf32>, vector<1x8x8x4xf32>, vector<1x8x8x4xf32> -> vector<1x8x8x12xf32>
    %23 = vector.shape_cast %22 : vector<1x8x8x12xf32> to vector<64x12xf32>
    %c0_33 = arith.constant 0 : index
    %c0_34 = arith.constant 0 : index
    %c0_35 = arith.constant 0 : index
    %24 = vector.load %arg2[%c0_33, %c0_34, %c0_35] : memref<3x12x8xf32, #tpu.memory_space<vmem>>, vector<1x12x8xf32>
    %25 = vector.shape_cast %24 : vector<1x12x8xf32> to vector<12x8xf32>
    %cst_36 = arith.constant dense<0.000000e+00> : vector<64x8xf32>
    %26 = tpu.matmul %23, %25, %cst_36 {dimension_numbers = #tpu.dot_dimension_numbers<[1], [0], [0], [1], [0, 0, 1, 1], [], []>} : vector<64x12xf32>, vector<12x8xf32>, vector<64x8xf32> -> vector<64x8xf32>
    %27 = arith.addf %18, %26 : vector<64x8xf32>
    %c0_37 = arith.constant 0 : index
    %c1_38 = arith.constant 1 : index
    %c0_39 = arith.constant 0 : index
    %c0_40 = arith.constant 0 : index
    %28 = vector.load %arg9[%c0_37, %c1_38, %c0_39, %c0_40] : memref<1x10x10x4xf32, #tpu.memory_space<vmem>>, vector<1x8x8x4xf32>
    %c0_41 = arith.constant 0 : index
    %c1_42 = arith.constant 1 : index
    %c1_43 = arith.constant 1 : index
    %c0_44 = arith.constant 0 : index
    %29 = vector.load %arg9[%c0_41, %c1_42, %c1_43, %c0_44] : memref<1x10x10x4xf32, #tpu.memory_space<vmem>>, vector<1x8x8x4xf32>
    %c0_45 = arith.constant 0 : index
    %c1_46 = arith.constant 1 : index
    %c2_47 = arith.constant 2 : index
    %c0_48 = arith.constant 0 : index
    %30 = vector.load %arg9[%c0_45, %c1_46, %c2_47, %c0_48] : memref<1x10x10x4xf32, #tpu.memory_space<vmem>>, vector<1x8x8x4xf32>
    %31 = tpu.concatenate %28, %29, %30 in 3 : vector<1x8x8x4xf32>, vector<1x8x8x4xf32>, vector<1x8x8x4xf32> -> vector<1x8x8x12xf32>
    %32 = vector.shape_cast %31 : vector<1x8x8x12xf32> to vector<64x12xf32>
    %c1_49 = arith.constant 1 : index
    %c0_50 = arith.constant 0 : index
    %c0_51 = arith.constant 0 : index
    %33 = vector.load %arg2[%c1_49, %c0_50, %c0_51] : memref<3x12x8xf32, #tpu.memory_space<vmem>>, vector<1x12x8xf32>
    %34 = vector.shape_cast %33 : vector<1x12x8xf32> to vector<12x8xf32>
    %cst_52 = arith.constant dense<0.000000e+00> : vector<64x8xf32>
    %35 = tpu.matmul %32, %34, %cst_52 {dimension_numbers = #tpu.dot_dimension_numbers<[1], [0], [0], [1], [0, 0, 1, 1], [], []>} : vector<64x12xf32>, vector<12x8xf32>, vector<64x8xf32> -> vector<64x8xf32>
    %36 = arith.addf %27, %35 : vector<64x8xf32>
    %c0_53 = arith.constant 0 : index
    %c2_54 = arith.constant 2 : index
    %c0_55 = arith.constant 0 : index
    %c0_56 = arith.constant 0 : index
    %37 = vector.load %arg9[%c0_53, %c2_54, %c0_55, %c0_56] : memref<1x10x10x4xf32, #tpu.memory_space<vmem>>, vector<1x8x8x4xf32>
    %c0_57 = arith.constant 0 : index
    %c2_58 = arith.constant 2 : index
    %c1_59 = arith.constant 1 : index
    %c0_60 = arith.constant 0 : index
    %38 = vector.load %arg9[%c0_57, %c2_58, %c1_59, %c0_60] : memref<1x10x10x4xf32, #tpu.memory_space<vmem>>, vector<1x8x8x4xf32>
    %c0_61 = arith.constant 0 : index
    %c2_62 = arith.constant 2 : index
    %c2_63 = arith.constant 2 : index
    %c0_64 = arith.constant 0 : index
    %39 = vector.load %arg9[%c0_61, %c2_62, %c2_63, %c0_64] : memref<1x10x10x4xf32, #tpu.memory_space<vmem>>, vector<1x8x8x4xf32>
    %40 = tpu.concatenate %37, %38, %39 in 3 : vector<1x8x8x4xf32>, vector<1x8x8x4xf32>, vector<1x8x8x4xf32> -> vector<1x8x8x12xf32>
    %41 = vector.shape_cast %40 : vector<1x8x8x12xf32> to vector<64x12xf32>
    %c2_65 = arith.constant 2 : index
    %c0_66 = arith.constant 0 : index
    %c0_67 = arith.constant 0 : index
    %42 = vector.load %arg2[%c2_65, %c0_66, %c0_67] : memref<3x12x8xf32, #tpu.memory_space<vmem>>, vector<1x12x8xf32>
    %43 = vector.shape_cast %42 : vector<1x12x8xf32> to vector<12x8xf32>
    %cst_68 = arith.constant dense<0.000000e+00> : vector<64x8xf32>
    %44 = tpu.matmul %41, %43, %cst_68 {dimension_numbers = #tpu.dot_dimension_numbers<[1], [0], [0], [1], [0, 0, 1, 1], [], []>} : vector<64x12xf32>, vector<12x8xf32>, vector<64x8xf32> -> vector<64x8xf32>
    %45 = arith.addf %36, %44 : vector<64x8xf32>
    %c0_69 = arith.constant 0 : index
    %c0_70 = arith.constant 0 : index
    %46 = vector.load %arg3[%c0_69, %c0_70] : memref<1x8xf32, #tpu.memory_space<vmem>>, vector<1x8xf32>
    %47 = vector.broadcast %46 : vector<1x8xf32> to vector<64x8xf32>
    %48 = arith.mulf %45, %47 : vector<64x8xf32>
    %c0_71 = arith.constant 0 : index
    %c0_72 = arith.constant 0 : index
    %49 = vector.load %arg4[%c0_71, %c0_72] : memref<1x8xf32, #tpu.memory_space<vmem>>, vector<1x8xf32>
    %50 = vector.broadcast %49 : vector<1x8xf32> to vector<64x8xf32>
    %51 = arith.addf %48, %50 : vector<64x8xf32>
    %cst_73 = arith.constant 0.000000e+00 : f32
    %52 = vector.broadcast %cst_73 : f32 to vector<64x8xf32>
    %53 = arith.maximumf %51, %52 : vector<64x8xf32>
    %54 = vector.shape_cast %53 : vector<64x8xf32> to vector<1x8x8x8xf32>
    %cst_74 = arith.constant 0.000000e+00 : f32
    %55 = vector.broadcast %cst_74 : f32 to vector<1x1x10x8xf32>
    %cst_75 = arith.constant 0.000000e+00 : f32
    %56 = vector.broadcast %cst_75 : f32 to vector<1x10x1x8xf32>
    %c0_76 = arith.constant 0 : index
    %c0_77 = arith.constant 0 : index
    %c0_78 = arith.constant 0 : index
    %c0_79 = arith.constant 0 : index
    %57 = vector.load %arg10[%c0_76, %c0_77, %c0_78, %c0_79] : memref<1x10x10x8xf32, #tpu.memory_space<vmem>>, vector<1x1x10x8xf32>
    tpu.vector_store %arg10[%c0_76, %c0_77, %c0_78, %c0_79], %55 {strides = array<i32>} : memref<1x10x10x8xf32, #tpu.memory_space<vmem>>, vector<1x1x10x8xf32>,
    %c0_80 = arith.constant 0 : index
    %c9_81 = arith.constant 9 : index
    %c0_82 = arith.constant 0 : index
    %c0_83 = arith.constant 0 : index
    %58 = vector.load %arg10[%c0_80, %c9_81, %c0_82, %c0_83] : memref<1x10x10x8xf32, #tpu.memory_space<vmem>>, vector<1x1x10x8xf32>
    tpu.vector_store %arg10[%c0_80, %c9_81, %c0_82, %c0_83], %55 {strides = array<i32>} : memref<1x10x10x8xf32, #tpu.memory_space<vmem>>, vector<1x1x10x8xf32>,
    %c0_84 = arith.constant 0 : index
    %c0_85 = arith.constant 0 : index
    %c0_86 = arith.constant 0 : index
    %c0_87 = arith.constant 0 : index
    %59 = vector.load %arg10[%c0_84, %c0_85, %c0_86, %c0_87] : memref<1x10x10x8xf32, #tpu.memory_space<vmem>>, vector<1x10x1x8xf32>
    tpu.vector_store %arg10[%c0_84, %c0_85, %c0_86, %c0_87], %56 {strides = array<i32>} : memref<1x10x10x8xf32, #tpu.memory_space<vmem>>, vector<1x10x1x8xf32>,
    %c0_88 = arith.constant 0 : index
    %c0_89 = arith.constant 0 : index
    %c9_90 = arith.constant 9 : index
    %c0_91 = arith.constant 0 : index
    %60 = vector.load %arg10[%c0_88, %c0_89, %c9_90, %c0_91] : memref<1x10x10x8xf32, #tpu.memory_space<vmem>>, vector<1x10x1x8xf32>
    tpu.vector_store %arg10[%c0_88, %c0_89, %c9_90, %c0_91], %56 {strides = array<i32>} : memref<1x10x10x8xf32, #tpu.memory_space<vmem>>, vector<1x10x1x8xf32>,
    %c0_92 = arith.constant 0 : index
    %c1_93 = arith.constant 1 : index
    %c1_94 = arith.constant 1 : index
    %c0_95 = arith.constant 0 : index
    %61 = vector.load %arg10[%c0_92, %c1_93, %c1_94, %c0_95] : memref<1x10x10x8xf32, #tpu.memory_space<vmem>>, vector<1x8x8x8xf32>
    tpu.vector_store %arg10[%c0_92, %c1_93, %c1_94, %c0_95], %54 {strides = array<i32>} : memref<1x10x10x8xf32, #tpu.memory_space<vmem>>, vector<1x8x8x8xf32>,
    %cst_96 = arith.constant 0.000000e+00 : f32
    %62 = vector.broadcast %cst_96 : f32 to vector<64x8xf32>
    %c0_97 = arith.constant 0 : index
    %c0_98 = arith.constant 0 : index
    %c0_99 = arith.constant 0 : index
    %c0_100 = arith.constant 0 : index
    %63 = vector.load %arg10[%c0_97, %c0_98, %c0_99, %c0_100] : memref<1x10x10x8xf32, #tpu.memory_space<vmem>>, vector<1x8x8x8xf32>
    %c0_101 = arith.constant 0 : index
    %c0_102 = arith.constant 0 : index
    %c1_103 = arith.constant 1 : index
    %c0_104 = arith.constant 0 : index
    %64 = vector.load %arg10[%c0_101, %c0_102, %c1_103, %c0_104] : memref<1x10x10x8xf32, #tpu.memory_space<vmem>>, vector<1x8x8x8xf32>
    %c0_105 = arith.constant 0 : index
    %c0_106 = arith.constant 0 : index
    %c2_107 = arith.constant 2 : index
    %c0_108 = arith.constant 0 : index
    %65 = vector.load %arg10[%c0_105, %c0_106, %c2_107, %c0_108] : memref<1x10x10x8xf32, #tpu.memory_space<vmem>>, vector<1x8x8x8xf32>
    %66 = tpu.concatenate %63, %64, %65 in 3 : vector<1x8x8x8xf32>, vector<1x8x8x8xf32>, vector<1x8x8x8xf32> -> vector<1x8x8x24xf32>
    %67 = vector.shape_cast %66 : vector<1x8x8x24xf32> to vector<64x24xf32>
    %c0_109 = arith.constant 0 : index
    %c0_110 = arith.constant 0 : index
    %c0_111 = arith.constant 0 : index
    %68 = vector.load %arg5[%c0_109, %c0_110, %c0_111] : memref<3x24x8xf32, #tpu.memory_space<vmem>>, vector<1x24x8xf32>
    %69 = vector.shape_cast %68 : vector<1x24x8xf32> to vector<24x8xf32>
    %cst_112 = arith.constant dense<0.000000e+00> : vector<64x8xf32>
    %70 = tpu.matmul %67, %69, %cst_112 {dimension_numbers = #tpu.dot_dimension_numbers<[1], [0], [0], [1], [0, 0, 1, 1], [], []>} : vector<64x24xf32>, vector<24x8xf32>, vector<64x8xf32> -> vector<64x8xf32>
    %71 = arith.addf %62, %70 : vector<64x8xf32>
    %c0_113 = arith.constant 0 : index
    %c1_114 = arith.constant 1 : index
    %c0_115 = arith.constant 0 : index
    %c0_116 = arith.constant 0 : index
    %72 = vector.load %arg10[%c0_113, %c1_114, %c0_115, %c0_116] : memref<1x10x10x8xf32, #tpu.memory_space<vmem>>, vector<1x8x8x8xf32>
    %c0_117 = arith.constant 0 : index
    %c1_118 = arith.constant 1 : index
    %c1_119 = arith.constant 1 : index
    %c0_120 = arith.constant 0 : index
    %73 = vector.load %arg10[%c0_117, %c1_118, %c1_119, %c0_120] : memref<1x10x10x8xf32, #tpu.memory_space<vmem>>, vector<1x8x8x8xf32>
    %c0_121 = arith.constant 0 : index
    %c1_122 = arith.constant 1 : index
    %c2_123 = arith.constant 2 : index
    %c0_124 = arith.constant 0 : index
    %74 = vector.load %arg10[%c0_121, %c1_122, %c2_123, %c0_124] : memref<1x10x10x8xf32, #tpu.memory_space<vmem>>, vector<1x8x8x8xf32>
    %75 = tpu.concatenate %72, %73, %74 in 3 : vector<1x8x8x8xf32>, vector<1x8x8x8xf32>, vector<1x8x8x8xf32> -> vector<1x8x8x24xf32>
    %76 = vector.shape_cast %75 : vector<1x8x8x24xf32> to vector<64x24xf32>
    %c1_125 = arith.constant 1 : index
    %c0_126 = arith.constant 0 : index
    %c0_127 = arith.constant 0 : index
    %77 = vector.load %arg5[%c1_125, %c0_126, %c0_127] : memref<3x24x8xf32, #tpu.memory_space<vmem>>, vector<1x24x8xf32>
    %78 = vector.shape_cast %77 : vector<1x24x8xf32> to vector<24x8xf32>
    %cst_128 = arith.constant dense<0.000000e+00> : vector<64x8xf32>
    %79 = tpu.matmul %76, %78, %cst_128 {dimension_numbers = #tpu.dot_dimension_numbers<[1], [0], [0], [1], [0, 0, 1, 1], [], []>} : vector<64x24xf32>, vector<24x8xf32>, vector<64x8xf32> -> vector<64x8xf32>
    %80 = arith.addf %71, %79 : vector<64x8xf32>
    %c0_129 = arith.constant 0 : index
    %c2_130 = arith.constant 2 : index
    %c0_131 = arith.constant 0 : index
    %c0_132 = arith.constant 0 : index
    %81 = vector.load %arg10[%c0_129, %c2_130, %c0_131, %c0_132] : memref<1x10x10x8xf32, #tpu.memory_space<vmem>>, vector<1x8x8x8xf32>
    %c0_133 = arith.constant 0 : index
    %c2_134 = arith.constant 2 : index
    %c1_135 = arith.constant 1 : index
    %c0_136 = arith.constant 0 : index
    %82 = vector.load %arg10[%c0_133, %c2_134, %c1_135, %c0_136] : memref<1x10x10x8xf32, #tpu.memory_space<vmem>>, vector<1x8x8x8xf32>
    %c0_137 = arith.constant 0 : index
    %c2_138 = arith.constant 2 : index
    %c2_139 = arith.constant 2 : index
    %c0_140 = arith.constant 0 : index
    %83 = vector.load %arg10[%c0_137, %c2_138, %c2_139, %c0_140] : memref<1x10x10x8xf32, #tpu.memory_space<vmem>>, vector<1x8x8x8xf32>
    %84 = tpu.concatenate %81, %82, %83 in 3 : vector<1x8x8x8xf32>, vector<1x8x8x8xf32>, vector<1x8x8x8xf32> -> vector<1x8x8x24xf32>
    %85 = vector.shape_cast %84 : vector<1x8x8x24xf32> to vector<64x24xf32>
    %c2_141 = arith.constant 2 : index
    %c0_142 = arith.constant 0 : index
    %c0_143 = arith.constant 0 : index
    %86 = vector.load %arg5[%c2_141, %c0_142, %c0_143] : memref<3x24x8xf32, #tpu.memory_space<vmem>>, vector<1x24x8xf32>
    %87 = vector.shape_cast %86 : vector<1x24x8xf32> to vector<24x8xf32>
    %cst_144 = arith.constant dense<0.000000e+00> : vector<64x8xf32>
    %88 = tpu.matmul %85, %87, %cst_144 {dimension_numbers = #tpu.dot_dimension_numbers<[1], [0], [0], [1], [0, 0, 1, 1], [], []>} : vector<64x24xf32>, vector<24x8xf32>, vector<64x8xf32> -> vector<64x8xf32>
    %89 = arith.addf %80, %88 : vector<64x8xf32>
    %c0_145 = arith.constant 0 : index
    %c0_146 = arith.constant 0 : index
    %90 = vector.load %arg6[%c0_145, %c0_146] : memref<1x8xf32, #tpu.memory_space<vmem>>, vector<1x8xf32>
    %91 = vector.broadcast %90 : vector<1x8xf32> to vector<64x8xf32>
    %92 = arith.mulf %89, %91 : vector<64x8xf32>
    %c0_147 = arith.constant 0 : index
    %c0_148 = arith.constant 0 : index
    %93 = vector.load %arg7[%c0_147, %c0_148] : memref<1x8xf32, #tpu.memory_space<vmem>>, vector<1x8xf32>
    %94 = vector.broadcast %93 : vector<1x8xf32> to vector<64x8xf32>
    %95 = arith.addf %92, %94 : vector<64x8xf32>
    %cst_149 = arith.constant 0.000000e+00 : f32
    %96 = vector.broadcast %cst_149 : f32 to vector<64x8xf32>
    %97 = arith.maximumf %95, %96 : vector<64x8xf32>
    %c0_150 = arith.constant 0 : index
    %c0_151 = arith.constant 0 : index
    %98 = vector.load %arg8[%c0_150, %c0_151] : memref<64x8xf32, #tpu.memory_space<vmem>>, vector<64x8xf32>
    tpu.vector_store %arg8[%c0_150, %c0_151], %97 {strides = array<i32>} : memref<64x8xf32, #tpu.memory_space<vmem>>, vector<64x8xf32>,
    return
  }
  func.func @transform_0(%arg0: i32) -> (i32, i32, i32) {
    %c0_i32 = arith.constant 0 : i32
    %c0_i32_0 = arith.constant 0 : i32
    %c0_i32_1 = arith.constant 0 : i32
    return %arg0, %c0_i32, %c0_i32_0 : i32, i32, i32
  }
  func.func @transform_1(%arg0: i32) -> (i32, i32, i32) {
    %c0_i32 = arith.constant 0 : i32
    %c0_i32_0 = arith.constant 0 : i32
    %c0_i32_1 = arith.constant 0 : i32
    %c0_i32_2 = arith.constant 0 : i32
    return %c0_i32, %c0_i32_0, %c0_i32_1 : i32, i32, i32
  }
  func.func @transform_2(%arg0: i32) -> (i32, i32) {
    %c0_i32 = arith.constant 0 : i32
    %c0_i32_0 = arith.constant 0 : i32
    %c0_i32_1 = arith.constant 0 : i32
    return %c0_i32, %c0_i32_0 : i32, i32
  }
  func.func @transform_3(%arg0: i32) -> (i32, i32) {
    %c0_i32 = arith.constant 0 : i32
    %c0_i32_0 = arith.constant 0 : i32
    %c0_i32_1 = arith.constant 0 : i32
    return %c0_i32, %c0_i32_0 : i32, i32
  }
  func.func @transform_4(%arg0: i32) -> (i32, i32, i32) {
    %c0_i32 = arith.constant 0 : i32
    %c0_i32_0 = arith.constant 0 : i32
    %c0_i32_1 = arith.constant 0 : i32
    %c0_i32_2 = arith.constant 0 : i32
    return %c0_i32, %c0_i32_0, %c0_i32_1 : i32, i32, i32
  }
  func.func @transform_5(%arg0: i32) -> (i32, i32) {
    %c0_i32 = arith.constant 0 : i32
    %c0_i32_0 = arith.constant 0 : i32
    %c0_i32_1 = arith.constant 0 : i32
    return %c0_i32, %c0_i32_0 : i32, i32
  }
  func.func @transform_6(%arg0: i32) -> (i32, i32) {
    %c0_i32 = arith.constant 0 : i32
    %c0_i32_0 = arith.constant 0 : i32
    %c0_i32_1 = arith.constant 0 : i32
    return %c0_i32, %c0_i32_0 : i32, i32
  }
  func.func @transform_7(%arg0: i32) -> (i32, i32) {
    %c0_i32 = arith.constant 0 : i32
    %c0_i32_0 = arith.constant 0 : i32
    return %arg0, %c0_i32 : i32, i32
  }
}

</mosaic_0001>

<llo_original>
// kernel: tpu_custom_call.1
$region0: #{tpu_custom_call.1}
  #allocation0 [shape = 'u32[]', space=smem, size = 0x4, offset = 0x4, fixed_abs, tag = 'smem constant byte address 0x4 - core index']
  #allocation1 [shape = 'u32[144,128]{1,0:T(1,128)}', space=vmem, size = 0x12000, scoped, tag = 'internal scratch']
  #allocation2 [shape = 'f32[1,10,10,4]{3,2,1,0:T(8,128)}', space=vmem, size = 0x14000, scoped, tag = 'scratch operand']
  #allocation3 [shape = 'f32[1,10,10,8]{3,2,1,0:T(8,128)}', space=vmem, size = 0x14000, scoped, tag = 'scratch operand']
  %s0 = inlined_call_operand.vmem [shape: f32[2,16,64], index: 0, kind: input, shape index: {}]
  %s1 = inlined_call_operand.vmem [shape: f32[3,12,8], index: 1, kind: input, shape index: {}]
  %s2 = inlined_call_operand.vmem [shape: f32[1,8], index: 2, kind: input, shape index: {}]
  %s3 = inlined_call_operand.vmem [shape: f32[1,8], index: 3, kind: input, shape index: {}]
  %s4 = inlined_call_operand.vmem [shape: f32[3,24,8], index: 4, kind: input, shape index: {}]
  %s5 = inlined_call_operand.vmem [shape: f32[1,8], index: 5, kind: input, shape index: {}]
  %s6 = inlined_call_operand.vmem [shape: f32[1,8], index: 6, kind: input, shape index: {}]
  %s7 = inlined_call_operand.vmem [shape: f32[128,8], index: 7, kind: output, shape index: {}]
  %s8 = sld [smem:[#allocation0]]
  $region61: #{tpu_custom_call.1} parent=0
    _
  %s10 = ssub.s32 1, %s8
  %s11 = scalar_select 0, %s10, %s8
  loop: start=0, step=1, limit=4
  $region2: #{tpu_custom_call.1} parent=0 // loop_pre_header
    _
  $region3: #{tpu_custom_call.1} parent=0 // loop_header
    %s13 = sphi 0, %s17
    %p14 = scmp.ge.s32.totalorder %s13, 4
    %s23 = sphi 0, %s25
    %s26 = sphi 0, %s23
    %s27 = sphi 0, %s26
    %s43 = sphi 0, %s27
    %s47 = sphi 0, %s47
    %s49 = sphi 0, %s47
    %s50 = sphi 0, %s49
    %s64 = sphi 0, %s50
    %s68 = sphi 0, %s68
    %s70 = sphi 0, %s68
    %s71 = sphi 0, %s70
    %s85 = sphi 0, %s71
    %s89 = sphi 0, %s89
    %s91 = sphi 0, %s89
    %s92 = sphi 0, %s91
    %s106 = sphi 0, %s92
    %s110 = sphi 0, %s110
    %s112 = sphi 0, %s110
    %s113 = sphi 0, %s112
    %s127 = sphi 0, %s113
    %s131 = sphi 0, %s131
    %s133 = sphi 0, %s131
    %s134 = sphi 0, %s133
    %s148 = sphi 0, %s134
    %s152 = sphi 0, %s152
    %s154 = sphi 0, %s152
    %s155 = sphi 0, %s154
    %s169 = sphi 0, %s155
    %s175 = sphi 0, %s177
    %s178 = sphi 0, %s175
    %s179 = sphi 0, %s178
    %s195 = sphi 0, %s179
  $region4: #{tpu_custom_call.1} parent=0 // loop_header_branch
    %16 = sbr.rel (%p14) target = $region8
  $region5: #{tpu_custom_call.1} parent=0 // loop_body
    %s18 = ssub.s32 %s13, 1
    %s19 = ssub.s32 %s13, 2
    %s20 = sadd.s32 %s13, 1
    %s21 = ssub.s32 %s13, %s20
    %p22 = scmp.eq.s32.totalorder %s21, 0
    %s24 = sadd.s32 %s23, 1
    %s25 = scalar_select %p22, %s23, %s24
    %p28 = pneg %p22
    %p29 = scmp.eq.s32.totalorder %s13, 1
    %p30 = por %p28, %p29
    %p31 = scmp.ne.s32.totalorder %s23, %s26
    %p32 = scmp.eq.s32.totalorder %s13, 0
    %p33 = por %p31, %p32
    %p34 = scmp.ne.s32.totalorder %s23, %s26
    %p35 = scmp.eq.s32.totalorder %s18, 1
    %p36 = por %p34, %p35
    %p37 = scmp.ne.s32.totalorder %s26, %s27
    %p38 = scmp.eq.s32.totalorder %s18, 0
    %p39 = por %p37, %p38
    %p40 = scmp.ne.s32.totalorder %s26, %s27
    %p41 = scmp.eq.s32.totalorder %s19, 1
    %p42 = por %p40, %p41
    %p44 = scmp.ne.s32.totalorder %s27, %s43
    %p45 = scmp.eq.s32.totalorder %s19, 0
    %p46 = por %p44, %p45
    %s48 = sadd.s32 %s47, 1
    %p51 = scmp.eq.s32.totalorder %s13, 1
    %p52 = scmp.ne.s32.totalorder %s47, %s49
    %p53 = scmp.eq.s32.totalorder %s13, 0
    %p54 = por %p52, %p53
    %p55 = scmp.ne.s32.totalorder %s47, %s49
    %p56 = scmp.eq.s32.totalorder %s18, 1
    %p57 = por %p55, %p56
    %p58 = scmp.ne.s32.totalorder %s49, %s50
    %p59 = scmp.eq.s32.totalorder %s18, 0
    %p60 = por %p58, %p59
    %p61 = scmp.ne.s32.totalorder %s49, %s50
    %p62 = scmp.eq.s32.totalorder %s19, 1
    %p63 = por %p61, %p62
    %p65 = scmp.ne.s32.totalorder %s50, %s64
    %p66 = scmp.eq.s32.totalorder %s19, 0
    %p67 = por %p65, %p66
    %s69 = sadd.s32 %s68, 1
    %p72 = scmp.eq.s32.totalorder %s13, 1
    %p73 = scmp.ne.s32.totalorder %s68, %s70
    %p74 = scmp.eq.s32.totalorder %s13, 0
    %p75 = por %p73, %p74
    %p76 = scmp.ne.s32.totalorder %s68, %s70
    %p77 = scmp.eq.s32.totalorder %s18, 1
    %p78 = por %p76, %p77
    %p79 = scmp.ne.s32.totalorder %s70, %s71
    %p80 = scmp.eq.s32.totalorder %s18, 0
    %p81 = por %p79, %p80
    %p82 = scmp.ne.s32.totalorder %s70, %s71
    %p83 = scmp.eq.s32.totalorder %s19, 1
    %p84 = por %p82, %p83
    %p86 = scmp.ne.s32.totalorder %s71, %s85
    %p87 = scmp.eq.s32.totalorder %s19, 0
    %p88 = por %p86, %p87
    %s90 = sadd.s32 %s89, 1
    %p93 = scmp.eq.s32.totalorder %s13, 1
    %p94 = scmp.ne.s32.totalorder %s89, %s91
    %p95 = scmp.eq.s32.totalorder %s13, 0
    %p96 = por %p94, %p95
    %p97 = scmp.ne.s32.totalorder %s89, %s91
    %p98 = scmp.eq.s32.totalorder %s18, 1
    %p99 = por %p97, %p98
    %p100 = scmp.ne.s32.totalorder %s91, %s92
    %p101 = scmp.eq.s32.totalorder %s18, 0
    %p102 = por %p100, %p101
    %p103 = scmp.ne.s32.totalorder %s91, %s92
    %p104 = scmp.eq.s32.totalorder %s19, 1
    %p105 = por %p103, %p104
    %p107 = scmp.ne.s32.totalorder %s92, %s106
    %p108 = scmp.eq.s32.totalorder %s19, 0
    %p109 = por %p107, %p108
    %s111 = sadd.s32 %s110, 1
    %p114 = scmp.eq.s32.totalorder %s13, 1
    %p115 = scmp.ne.s32.totalorder %s110, %s112
    %p116 = scmp.eq.s32.totalorder %s13, 0
    %p117 = por %p115, %p116
    %p118 = scmp.ne.s32.totalorder %s110, %s112
    %p119 = scmp.eq.s32.totalorder %s18, 1
    %p120 = por %p118, %p119
    %p121 = scmp.ne.s32.totalorder %s112, %s113
    %p122 = scmp.eq.s32.totalorder %s18, 0
    %p123 = por %p121, %p122
    %p124 = scmp.ne.s32.totalorder %s112, %s113
    %p125 = scmp.eq.s32.totalorder %s19, 1
    %p126 = por %p124, %p125
    %p128 = scmp.ne.s32.totalorder %s113, %s127
    %p129 = scmp.eq.s32.totalorder %s19, 0
    %p130 = por %p128, %p129
    %s132 = sadd.s32 %s131, 1
    %p135 = scmp.eq.s32.totalorder %s13, 1
    %p136 = scmp.ne.s32.totalorder %s131, %s133
    %p137 = scmp.eq.s32.totalorder %s13, 0
    %p138 = por %p136, %p137
    %p139 = scmp.ne.s32.totalorder %s131, %s133
    %p140 = scmp.eq.s32.totalorder %s18, 1
    %p141 = por %p139, %p140
    %p142 = scmp.ne.s32.totalorder %s133, %s134
    %p143 = scmp.eq.s32.totalorder %s18, 0
    %p144 = por %p142, %p143
    %p145 = scmp.ne.s32.totalorder %s133, %s134
    %p146 = scmp.eq.s32.totalorder %s19, 1
    %p147 = por %p145, %p146
    %p149 = scmp.ne.s32.totalorder %s134, %s148
    %p150 = scmp.eq.s32.totalorder %s19, 0
    %p151 = por %p149, %p150
    %s153 = sadd.s32 %s152, 1
    %p156 = scmp.eq.s32.totalorder %s13, 1
    %p157 = scmp.ne.s32.totalorder %s152, %s154
    %p158 = scmp.eq.s32.totalorder %s13, 0
    %p159 = por %p157, %p158
    %p160 = scmp.ne.s32.totalorder %s152, %s154
    %p161 = scmp.eq.s32.totalorder %s18, 1
    %p162 = por %p160, %p161
    %p163 = scmp.ne.s32.totalorder %s154, %s155
    %p164 = scmp.eq.s32.totalorder %s18, 0
    %p165 = por %p163, %p164
    %p166 = scmp.ne.s32.totalorder %s154, %s155
    %p167 = scmp.eq.s32.totalorder %s19, 1
    %p168 = por %p166, %p167
    %p170 = scmp.ne.s32.totalorder %s155, %s169
    %p171 = scmp.eq.s32.totalorder %s19, 0
    %p172 = por %p170, %p171
    %s173 = ssub.s32 %s13, %s20
    %p174 = scmp.eq.s32.totalorder %s173, 0
    %s176 = sadd.s32 %s175, 1
    %s177 = scalar_select %p174, %s175, %s176
    %p180 = pneg %p174
    %p181 = scmp.eq.s32.totalorder %s13, 1
    %p182 = por %p180, %p181
    %p183 = scmp.ne.s32.totalorder %s175, %s178
    %p184 = scmp.eq.s32.totalorder %s13, 0
    %p185 = por %p183, %p184
    %p186 = scmp.ne.s32.totalorder %s175, %s178
    %p187 = scmp.eq.s32.totalorder %s18, 1
    %p188 = por %p186, %p187
    %p189 = scmp.ne.s32.totalorder %s178, %s179
    %p190 = scmp.eq.s32.totalorder %s18, 0
    %p191 = por %p189, %p190
    %p192 = scmp.ne.s32.totalorder %s178, %s179
    %p193 = scmp.eq.s32.totalorder %s19, 1
    %p194 = por %p192, %p193
    %p196 = scmp.ne.s32.totalorder %s179, %s195
    %p197 = scmp.eq.s32.totalorder %s19, 0
    %p198 = por %p196, %p197
    %p199 = scmp.le.s32.totalorder 1, %s13
    %p200 = scmp.lt.s32.totalorder %s13, 3
    %p201 = pnand %p199, %p200
    %p202 = pneg %p201
    // Predicated region
    $region9: #{tpu_custom_call.1} parent=5 // pred_check
      _
    $region10: #{tpu_custom_call.1} parent=5 // pred_check_branch
      %204 = sbr.rel (%p201) target = $region12
    $region11: #{tpu_custom_call.1} parent=5 // pred_region
      %s205 = ssub.s32 %s13, 1
      // Predicated region
      $region13: #{tpu_custom_call.1} parent=11 // pred_check
        %p206 = pneg %p60
      $region14: #{tpu_custom_call.1} parent=11 // pred_check_branch
        %208 = sbr.rel (%p206) target = $region16
      $region15: #{tpu_custom_call.1} parent=11 // pred_region
        _
      $region16: #{tpu_custom_call.1} parent=11 // pred_fallthru
        _
      // Predicated region
      $region17: #{tpu_custom_call.1} parent=11 // pred_check
        %p209 = pneg %p81
      $region18: #{tpu_custom_call.1} parent=11 // pred_check_branch
        %211 = sbr.rel (%p209) target = $region20
      $region19: #{tpu_custom_call.1} parent=11 // pred_region
        _
      $region20: #{tpu_custom_call.1} parent=11 // pred_fallthru
        _
      // Predicated region
      $region21: #{tpu_custom_call.1} parent=11 // pred_check
        %p212 = pneg %p102
      $region22: #{tpu_custom_call.1} parent=11 // pred_check_branch
        %214 = sbr.rel (%p212) target = $region24
      $region23: #{tpu_custom_call.1} parent=11 // pred_region
        _
      $region24: #{tpu_custom_call.1} parent=11 // pred_fallthru
        _
      // Predicated region
      $region25: #{tpu_custom_call.1} parent=11 // pred_check
        %p215 = pneg %p123
      $region26: #{tpu_custom_call.1} parent=11 // pred_check_branch
        %217 = sbr.rel (%p215) target = $region28
      $region27: #{tpu_custom_call.1} parent=11 // pred_region
        _
      $region28: #{tpu_custom_call.1} parent=11 // pred_fallthru
        _
      // Predicated region
      $region29: #{tpu_custom_call.1} parent=11 // pred_check
        %p218 = pneg %p144
      $region30: #{tpu_custom_call.1} parent=11 // pred_check_branch
        %220 = sbr.rel (%p218) target = $region32
      $region31: #{tpu_custom_call.1} parent=11 // pred_region
        _
      $region32: #{tpu_custom_call.1} parent=11 // pred_fallthru
        _
      // Predicated region
      $region33: #{tpu_custom_call.1} parent=11 // pred_check
        %p221 = pneg %p165
      $region34: #{tpu_custom_call.1} parent=11 // pred_check_branch
        %223 = sbr.rel (%p221) target = $region36
      $region35: #{tpu_custom_call.1} parent=11 // pred_region
        _
      $region36: #{tpu_custom_call.1} parent=11 // pred_fallthru
        _
    $region12: #{tpu_custom_call.1} parent=5 // pred_fallthru
      _
    %p224 = scmp.lt.s32.totalorder %s13, 2
    // Predicated region
    $region37: #{tpu_custom_call.1} parent=5 // pred_check
      %p225 = pneg %p224
    $region38: #{tpu_custom_call.1} parent=5 // pred_check_branch
      %227 = sbr.rel (%p225) target = $region40
    $region39: #{tpu_custom_call.1} parent=5 // pred_region
      // Predicated region
      $region41: #{tpu_custom_call.1} parent=39 // pred_check
        %p228 = pneg %p33
      $region42: #{tpu_custom_call.1} parent=39 // pred_check_branch
        %230 = sbr.rel (%p228) target = $region44
      $region43: #{tpu_custom_call.1} parent=39 // pred_region
        %p231 = scmp.lt.s32.totalorder %s13, 1
        %s232 = scalar_select %p231, %s13, 1
        %s233 = smul.addr %s232, 2
        %s234 = smul.addr %s233, 8
        %s235 = scalar_lea.vmem %s0, %s234
      $region44: #{tpu_custom_call.1} parent=39 // pred_fallthru
        _
    $region40: #{tpu_custom_call.1} parent=5 // pred_fallthru
      _
    %p236 = scmp.le.s32.totalorder 1, %s13
    %p237 = scmp.lt.s32.totalorder %s13, 3
    %p238 = pnand %p236, %p237
    %p239 = pneg %p238
    // Predicated region
    $region45: #{tpu_custom_call.1} parent=5 // pred_check
      _
    $region46: #{tpu_custom_call.1} parent=5 // pred_check_branch
      %241 = sbr.rel (%p238) target = $region48
    $region47: #{tpu_custom_call.1} parent=5 // pred_region
      %s242 = ssub.s32 %s13, 1
      %p243 = scmp.lt.s32.totalorder %s18, 1
      %s244 = scalar_select %p243, %s18, 1
      %s245 = smul.addr %s244, 2
      %s246 = smul.addr %s245, 8
      %s247 = scalar_lea.vmem %s0, %s246
      %p248 = pneg %p39
      %p249 = pneg %p36
      %p250 = pneg %p60
      %p251 = pneg %p57
      %p252 = pneg %p81
      %p253 = pneg %p78
      %p254 = pneg %p102
      %p255 = pneg %p99
      %p256 = pneg %p123
      %p257 = pneg %p120
      %p258 = pneg %p144
      %p259 = pneg %p141
      %p260 = pneg %p165
      %p261 = pneg %p162
      %p262 = pneg %p191
      %p263 = pneg %p188
      %s264 = smul.u32 8, %s18
      %p265 = scmp.lt.s32.totalorder %s264, 15
      %s266 = scalar_select %p265, %s264, 15
      %s267 = smul.addr %s266, 8
      %s268 = scalar_lea.vmem %s7, %s267
      %p269 = scmp.lt.s32.totalorder %s18, 1
      %s270 = scalar_select %p269, %s18, 1
      %s271 = smul.addr %s270, 2
      %s272 = smul.addr %s271, 8
      %s273 = scalar_lea.vmem %s0, %s272
      %s274 = smul.u32 8, %s18
      %p275 = scmp.lt.s32.totalorder %s274, 15
      %s276 = scalar_select %p275, %s274, 15
      %s277 = smul.addr %s276, 8
      %s278 = scalar_lea.vmem %s7, %s277
      %s279 = smul.u32 8, %s18
      %v280 = vld [vmem:[%s273] sm:$0xff]
      %v281 = vld [vmem:[%s273 + $0x8] sm:$0xff]
      %v284 = vcombine.high %v280, %v280
      %v286 = vunpack.c.l.s4 1983009808
      %v287 = vunpack.c.0.s8 %v286
      %v288 = vlaneseq
      %v289 = vshrl.u32 %v288, 7
      %v290 = vsub.s32 %v287, %v289
      %v291 = vrot.slane %v280, %v290
      %v293 = vunpack.c.l.s4 1983009808
      %v294 = vunpack.c.0.s8 %v293
      %v295 = vlaneseq
      %v296 = vshrl.u32 %v295, 7
      %v297 = vsub.s32 %v294, %v296
      %v298 = vrot.slane %v284, %v297
      %v299 = vcombine.high %v291, %v291
      %v300 = vcombine.high %v298, %v298
      %v301 = vcombine.high %v281, %v281
      %v303 = vunpack.c.l.s4 1983009808
      %v304 = vunpack.c.0.s8 %v303
      %v305 = vlaneseq
      %v306 = vshrl.u32 %v305, 7
      %v307 = vsub.s32 %v304, %v306
      %v308 = vrot.slane %v281, %v307
      %v310 = vunpack.c.l.s4 1983009808
      %v311 = vunpack.c.0.s8 %v310
      %v312 = vlaneseq
      %v313 = vshrl.u32 %v312, 7
      %v314 = vsub.s32 %v311, %v313
      %v315 = vrot.slane %v301, %v314
      %v316 = vcombine.high %v308, %v308
      %v317 = vcombine.high %v315, %v315
      %v326 = vrot.slane %v291, 7
      %v327 = vrot.slane %v326, 2
      %v328 = vrot.slane %v299, 7
      %v329 = vrot.slane %v328, 2
      %v330 = vrot.slane %v298, 7
      %v331 = vrot.slane %v330, 2
      %v332 = vrot.slane %v300, 7
      %v333 = vrot.slane %v332, 2
      %v334 = vrot.slane %v308, 7
      %v335 = vrot.slane %v334, 2
      %v336 = vrot.slane %v316, 7
      %v337 = vrot.slane %v336, 2
      %v338 = vrot.slane %v315, 7
      %v339 = vrot.slane %v338, 2
      %v340 = vrot.slane %v317, 7
      %v341 = vrot.slane %v340, 2
      %v350 = vadd.f32 %v291, %v327
      %v351 = vadd.f32 %v299, %v329
      %v352 = vadd.f32 %v298, %v331
      %v353 = vadd.f32 %v300, %v333
      %v354 = vadd.f32 %v308, %v335
      %v355 = vadd.f32 %v316, %v337
      %v356 = vadd.f32 %v315, %v339
      %v357 = vadd.f32 %v317, %v341
      %366 = vrot.lane.b32.xlu0 %v350, 120
      %v367 = vpop.permute.xlu0 %366
      %368 = vrot.lane.b32.xlu0 %v351, 120
      %v369 = vpop.permute.xlu0 %368
      %370 = vrot.lane.b32.xlu0 %v352, 120
      %v371 = vpop.permute.xlu0 %370
      %372 = vrot.lane.b32.xlu0 %v353, 120
      %v373 = vpop.permute.xlu0 %372
      %374 = vrot.lane.b32.xlu0 %v354, 120
      %v375 = vpop.permute.xlu0 %374
      %376 = vrot.lane.b32.xlu0 %v355, 120
      %v377 = vpop.permute.xlu0 %376
      %378 = vrot.lane.b32.xlu0 %v356, 120
      %v379 = vpop.permute.xlu0 %378
      %380 = vrot.lane.b32.xlu0 %v357, 120
      %v381 = vpop.permute.xlu0 %380
      %382 = vrot.lane.b32.xlu0 %v350, 112
      %v383 = vpop.permute.xlu0 %382
      %384 = vrot.lane.b32.xlu0 %v351, 112
      %v385 = vpop.permute.xlu0 %384
      %386 = vrot.lane.b32.xlu0 %v352, 112
      %v387 = vpop.permute.xlu0 %386
      %388 = vrot.lane.b32.xlu0 %v353, 112
      %v389 = vpop.permute.xlu0 %388
      %390 = vrot.lane.b32.xlu0 %v354, 112
      %v391 = vpop.permute.xlu0 %390
      %392 = vrot.lane.b32.xlu0 %v355, 112
      %v393 = vpop.permute.xlu0 %392
      %394 = vrot.lane.b32.xlu0 %v356, 112
      %v395 = vpop.permute.xlu0 %394
      %396 = vrot.lane.b32.xlu0 %v357, 112
      %v397 = vpop.permute.xlu0 %396
      %398 = vrot.lane.b32.xlu0 %v350, 104
      %v399 = vpop.permute.xlu0 %398
      %400 = vrot.lane.b32.xlu0 %v351, 104
      %v401 = vpop.permute.xlu0 %400
      %402 = vrot.lane.b32.xlu0 %v352, 104
      %v403 = vpop.permute.xlu0 %402
      %404 = vrot.lane.b32.xlu0 %v353, 104
      %v405 = vpop.permute.xlu0 %404
      %406 = vrot.lane.b32.xlu0 %v354, 104
      %v407 = vpop.permute.xlu0 %406
      %408 = vrot.lane.b32.xlu0 %v355, 104
      %v409 = vpop.permute.xlu0 %408
      %410 = vrot.lane.b32.xlu0 %v356, 104
      %v411 = vpop.permute.xlu0 %410
      %412 = vrot.lane.b32.xlu0 %v357, 104
      %v413 = vpop.permute.xlu0 %412
      %414 = vrot.lane.b32.xlu0 %v350, 96
      %v415 = vpop.permute.xlu0 %414
      %416 = vrot.lane.b32.xlu0 %v351, 96
      %v417 = vpop.permute.xlu0 %416
      %418 = vrot.lane.b32.xlu0 %v352, 96
      %v419 = vpop.permute.xlu0 %418
      %420 = vrot.lane.b32.xlu0 %v353, 96
      %v421 = vpop.permute.xlu0 %420
      %422 = vrot.lane.b32.xlu0 %v354, 96
      %v423 = vpop.permute.xlu0 %422
      %424 = vrot.lane.b32.xlu0 %v355, 96
      %v425 = vpop.permute.xlu0 %424
      %426 = vrot.lane.b32.xlu0 %v356, 96
      %v427 = vpop.permute.xlu0 %426
      %428 = vrot.lane.b32.xlu0 %v357, 96
      %v429 = vpop.permute.xlu0 %428
      %430 = vrot.lane.b32.xlu0 %v350, 88
      %v431 = vpop.permute.xlu0 %430
      %432 = vrot.lane.b32.xlu0 %v351, 88
      %v433 = vpop.permute.xlu0 %432
      %434 = vrot.lane.b32.xlu0 %v352, 88
      %v435 = vpop.permute.xlu0 %434
      %436 = vrot.lane.b32.xlu0 %v353, 88
      %v437 = vpop.permute.xlu0 %436
      %438 = vrot.lane.b32.xlu0 %v354, 88
      %v439 = vpop.permute.xlu0 %438
      %440 = vrot.lane.b32.xlu0 %v355, 88
      %v441 = vpop.permute.xlu0 %440
      %442 = vrot.lane.b32.xlu0 %v356, 88
      %v443 = vpop.permute.xlu0 %442
      %444 = vrot.lane.b32.xlu0 %v357, 88
      %v445 = vpop.permute.xlu0 %444
      %446 = vrot.lane.b32.xlu0 %v350, 80
      %v447 = vpop.permute.xlu0 %446
      %448 = vrot.lane.b32.xlu0 %v351, 80
      %v449 = vpop.permute.xlu0 %448
      %450 = vrot.lane.b32.xlu0 %v352, 80
      %v451 = vpop.permute.xlu0 %450
      %452 = vrot.lane.b32.xlu0 %v353, 80
      %v453 = vpop.permute.xlu0 %452
      %454 = vrot.lane.b32.xlu0 %v354, 80
      %v455 = vpop.permute.xlu0 %454
      %456 = vrot.lane.b32.xlu0 %v355, 80
      %v457 = vpop.permute.xlu0 %456
      %458 = vrot.lane.b32.xlu0 %v356, 80
      %v459 = vpop.permute.xlu0 %458
      %460 = vrot.lane.b32.xlu0 %v357, 80
      %v461 = vpop.permute.xlu0 %460
      %462 = vrot.lane.b32.xlu0 %v350, 72
      %v463 = vpop.permute.xlu0 %462
      %464 = vrot.lane.b32.xlu0 %v351, 72
      %v465 = vpop.permute.xlu0 %464
      %466 = vrot.lane.b32.xlu0 %v352, 72
      %v467 = vpop.permute.xlu0 %466
      %468 = vrot.lane.b32.xlu0 %v353, 72
      %v469 = vpop.permute.xlu0 %468
      %470 = vrot.lane.b32.xlu0 %v354, 72
      %v471 = vpop.permute.xlu0 %470
      %472 = vrot.lane.b32.xlu0 %v355, 72
      %v473 = vpop.permute.xlu0 %472
      %474 = vrot.lane.b32.xlu0 %v356, 72
      %v475 = vpop.permute.xlu0 %474
      %476 = vrot.lane.b32.xlu0 %v357, 72
      %v477 = vpop.permute.xlu0 %476
      %vm478 = vcmask 1044484
      %v479 = vsel %vm478, %v350, %v350
      %vm480 = vcmask 1046534
      %v481 = vsel %vm480, %v350, %v479
      %v482 = vrot.slane %v351, 7
      %vm483 = vcmask 1041409
      %v484 = vsel %vm483, %v482, %v481
      %vm485 = vcmask 1043459
      %v486 = vsel %vm485, %v482, %v484
      %vm487 = vcmask 1045509
      %v488 = vsel %vm487, %v482, %v486
      %vm489 = vcmask 1047559
      %v490 = vsel %vm489, %v482, %v488
      %v491 = vsel %vm478, %v352, %v352
      %v492 = vsel %vm480, %v352, %v491
      %v493 = vrot.slane %v353, 7
      %v494 = vsel %vm483, %v493, %v492
      %v495 = vsel %vm485, %v493, %v494
      %v496 = vsel %vm487, %v493, %v495
      %v497 = vsel %vm489, %v493, %v496
      %v498 = vsel %vm478, %v354, %v354
      %v499 = vsel %vm480, %v354, %v498
      %v500 = vrot.slane %v355, 7
      %v501 = vsel %vm483, %v500, %v499
      %v502 = vsel %vm485, %v500, %v501
      %v503 = vsel %vm487, %v500, %v502
      %v504 = vsel %vm489, %v500, %v503
      %v505 = vsel %vm478, %v356, %v356
      %v506 = vsel %vm480, %v356, %v505
      %v507 = vrot.slane %v357, 7
      %v508 = vsel %vm483, %v507, %v506
      %v509 = vsel %vm485, %v507, %v508
      %v510 = vsel %vm487, %v507, %v509
      %v511 = vsel %vm489, %v507, %v510
      %v512 = vsel %vm478, %v367, %v367
      %v513 = vsel %vm480, %v367, %v512
      %v514 = vrot.slane %v369, 7
      %v515 = vsel %vm483, %v514, %v513
      %v516 = vsel %vm485, %v514, %v515
      %v517 = vsel %vm487, %v514, %v516
      %v518 = vsel %vm489, %v514, %v517
      %v519 = vsel %vm478, %v371, %v371
      %v520 = vsel %vm480, %v371, %v519
      %v521 = vrot.slane %v373, 7
      %v522 = vsel %vm483, %v521, %v520
      %v523 = vsel %vm485, %v521, %v522
      %v524 = vsel %vm487, %v521, %v523
      %v525 = vsel %vm489, %v521, %v524
      %v526 = vsel %vm478, %v375, %v375
      %v527 = vsel %vm480, %v375, %v526
      %v528 = vrot.slane %v377, 7
      %v529 = vsel %vm483, %v528, %v527
      %v530 = vsel %vm485, %v528, %v529
      %v531 = vsel %vm487, %v528, %v530
      %v532 = vsel %vm489, %v528, %v531
      %v533 = vsel %vm478, %v379, %v379
      %v534 = vsel %vm480, %v379, %v533
      %v535 = vrot.slane %v381, 7
      %v536 = vsel %vm483, %v535, %v534
      %v537 = vsel %vm485, %v535, %v536
      %v538 = vsel %vm487, %v535, %v537
      %v539 = vsel %vm489, %v535, %v538
      %v540 = vsel %vm478, %v383, %v383
      %v541 = vsel %vm480, %v383, %v540
      %v542 = vrot.slane %v385, 7
      %v543 = vsel %vm483, %v542, %v541
      %v544 = vsel %vm485, %v542, %v543
      %v545 = vsel %vm487, %v542, %v544
      %v546 = vsel %vm489, %v542, %v545
      %v547 = vsel %vm478, %v387, %v387
      %v548 = vsel %vm480, %v387, %v547
      %v549 = vrot.slane %v389, 7
      %v550 = vsel %vm483, %v549, %v548
      %v551 = vsel %vm485, %v549, %v550
      %v552 = vsel %vm487, %v549, %v551
      %v553 = vsel %vm489, %v549, %v552
      %v554 = vsel %vm478, %v391, %v391
      %v555 = vsel %vm480, %v391, %v554
      %v556 = vrot.slane %v393, 7
      %v557 = vsel %vm483, %v556, %v555
      %v558 = vsel %vm485, %v556, %v557
      %v559 = vsel %vm487, %v556, %v558
      %v560 = vsel %vm489, %v556, %v559
      %v561 = vsel %vm478, %v395, %v395
      %v562 = vsel %vm480, %v395, %v561
      %v563 = vrot.slane %v397, 7
      %v564 = vsel %vm483, %v563, %v562
      %v565 = vsel %vm485, %v563, %v564
      %v566 = vsel %vm487, %v563, %v565
      %v567 = vsel %vm489, %v563, %v566
      %v568 = vsel %vm478, %v399, %v399
      %v569 = vsel %vm480, %v399, %v568
      %v570 = vrot.slane %v401, 7
      %v571 = vsel %vm483, %v570, %v569
      %v572 = vsel %vm485, %v570, %v571
      %v573 = vsel %vm487, %v570, %v572
      %v574 = vsel %vm489, %v570, %v573
      %v575 = vsel %vm478, %v403, %v403
      %v576 = vsel %vm480, %v403, %v575
      %v577 = vrot.slane %v405, 7
      %v578 = vsel %vm483, %v577, %v576
      %v579 = vsel %vm485, %v577, %v578
      %v580 = vsel %vm487, %v577, %v579
      %v581 = vsel %vm489, %v577, %v580
      %v582 = vsel %vm478, %v407, %v407
      %v583 = vsel %vm480, %v407, %v582
      %v584 = vrot.slane %v409, 7
      %v585 = vsel %vm483, %v584, %v583
      %v586 = vsel %vm485, %v584, %v585
      %v587 = vsel %vm487, %v584, %v586
      %v588 = vsel %vm489, %v584, %v587
      %v589 = vsel %vm478, %v411, %v411
      %v590 = vsel %vm480, %v411, %v589
      %v591 = vrot.slane %v413, 7
      %v592 = vsel %vm483, %v591, %v590
      %v593 = vsel %vm485, %v591, %v592
      %v594 = vsel %vm487, %v591, %v593
      %v595 = vsel %vm489, %v591, %v594
      %v596 = vsel %vm478, %v415, %v415
      %v597 = vsel %vm480, %v415, %v596
      %v598 = vrot.slane %v417, 7
      %v599 = vsel %vm483, %v598, %v597
      %v600 = vsel %vm485, %v598, %v599
      %v601 = vsel %vm487, %v598, %v600
      %v602 = vsel %vm489, %v598, %v601
      %v603 = vsel %vm478, %v419, %v419
      %v604 = vsel %vm480, %v419, %v603
      %v605 = vrot.slane %v421, 7
      %v606 = vsel %vm483, %v605, %v604
      %v607 = vsel %vm485, %v605, %v606
      %v608 = vsel %vm487, %v605, %v607
      %v609 = vsel %vm489, %v605, %v608
      %v610 = vsel %vm478, %v423, %v423
      %v611 = vsel %vm480, %v423, %v610
      %v612 = vrot.slane %v425, 7
      %v613 = vsel %vm483, %v612, %v611
      %v614 = vsel %vm485, %v612, %v613
      %v615 = vsel %vm487, %v612, %v614
      %v616 = vsel %vm489, %v612, %v615
      %v617 = vsel %vm478, %v427, %v427
      %v618 = vsel %vm480, %v427, %v617
      %v619 = vrot.slane %v429, 7
      %v620 = vsel %vm483, %v619, %v618
      %v621 = vsel %vm485, %v619, %v620
      %v622 = vsel %vm487, %v619, %v621
      %v623 = vsel %vm489, %v619, %v622
      %v624 = vsel %vm478, %v431, %v431
      %v625 = vsel %vm480, %v431, %v624
      %v626 = vrot.slane %v433, 7
      %v627 = vsel %vm483, %v626, %v625
      %v628 = vsel %vm485, %v626, %v627
      %v629 = vsel %vm487, %v626, %v628
      %v630 = vsel %vm489, %v626, %v629
      %v631 = vsel %vm478, %v435, %v435
      %v632 = vsel %vm480, %v435, %v631
      %v633 = vrot.slane %v437, 7
      %v634 = vsel %vm483, %v633, %v632
      %v635 = vsel %vm485, %v633, %v634
      %v636 = vsel %vm487, %v633, %v635
      %v637 = vsel %vm489, %v633, %v636
      %v638 = vsel %vm478, %v439, %v439
      %v639 = vsel %vm480, %v439, %v638
      %v640 = vrot.slane %v441, 7
      %v641 = vsel %vm483, %v640, %v639
      %v642 = vsel %vm485, %v640, %v641
      %v643 = vsel %vm487, %v640, %v642
      %v644 = vsel %vm489, %v640, %v643
      %v645 = vsel %vm478, %v443, %v443
      %v646 = vsel %vm480, %v443, %v645
      %v647 = vrot.slane %v445, 7
      %v648 = vsel %vm483, %v647, %v646
      %v649 = vsel %vm485, %v647, %v648
      %v650 = vsel %vm487, %v647, %v649
      %v651 = vsel %vm489, %v647, %v650
      %v652 = vsel %vm478, %v447, %v447
      %v653 = vsel %vm480, %v447, %v652
      %v654 = vrot.slane %v449, 7
      %v655 = vsel %vm483, %v654, %v653
      %v656 = vsel %vm485, %v654, %v655
      %v657 = vsel %vm487, %v654, %v656
      %v658 = vsel %vm489, %v654, %v657
      %v659 = vsel %vm478, %v451, %v451
      %v660 = vsel %vm480, %v451, %v659
      %v661 = vrot.slane %v453, 7
      %v662 = vsel %vm483, %v661, %v660
      %v663 = vsel %vm485, %v661, %v662
      %v664 = vsel %vm487, %v661, %v663
      %v665 = vsel %vm489, %v661, %v664
      %v666 = vsel %vm478, %v455, %v455
      %v667 = vsel %vm480, %v455, %v666
      %v668 = vrot.slane %v457, 7
      %v669 = vsel %vm483, %v668, %v667
      %v670 = vsel %vm485, %v668, %v669
      %v671 = vsel %vm487, %v668, %v670
      %v672 = vsel %vm489, %v668, %v671
      %v673 = vsel %vm478, %v459, %v459
      %v674 = vsel %vm480, %v459, %v673
      %v675 = vrot.slane %v461, 7
      %v676 = vsel %vm483, %v675, %v674
      %v677 = vsel %vm485, %v675, %v676
      %v678 = vsel %vm487, %v675, %v677
      %v679 = vsel %vm489, %v675, %v678
      %v680 = vsel %vm478, %v463, %v463
      %v681 = vsel %vm480, %v463, %v680
      %v682 = vrot.slane %v465, 7
      %v683 = vsel %vm483, %v682, %v681
      %v684 = vsel %vm485, %v682, %v683
      %v685 = vsel %vm487, %v682, %v684
      %v686 = vsel %vm489, %v682, %v685
      %v687 = vsel %vm478, %v467, %v467
      %v688 = vsel %vm480, %v467, %v687
      %v689 = vrot.slane %v469, 7
      %v690 = vsel %vm483, %v689, %v688
      %v691 = vsel %vm485, %v689, %v690
      %v692 = vsel %vm487, %v689, %v691
      %v693 = vsel %vm489, %v689, %v692
      %v694 = vsel %vm478, %v471, %v471
      %v695 = vsel %vm480, %v471, %v694
      %v696 = vrot.slane %v473, 7
      %v697 = vsel %vm483, %v696, %v695
      %v698 = vsel %vm485, %v696, %v697
      %v699 = vsel %vm487, %v696, %v698
      %v700 = vsel %vm489, %v696, %v699
      %v701 = vsel %vm478, %v475, %v475
      %v702 = vsel %vm480, %v475, %v701
      %v703 = vrot.slane %v477, 7
      %v704 = vsel %vm483, %v703, %v702
      %v705 = vsel %vm485, %v703, %v704
      %v706 = vsel %vm487, %v703, %v705
      %v707 = vsel %vm489, %v703, %v706
      %v740 = vcombine.low %v490, %v518
      %v742 = vunpack.c.l.s4 1934713408
      %v743 = vunpack.c.0.s8 %v742
      %v744 = vlaneseq
      %v745 = vshrl.u32 %v744, 7
      %v746 = vsub.s32 %v743, %v745
      %v747 = vrot.slane %v740, %v746
      %v748 = vcombine.high %v747, 0.0
      %v749 = vcombine.low %v546, %v574
      %v751 = vunpack.c.l.s4 1934713408
      %v752 = vunpack.c.0.s8 %v751
      %v753 = vlaneseq
      %v754 = vshrl.u32 %v753, 7
      %v755 = vsub.s32 %v752, %v754
      %v756 = vrot.slane %v749, %v755
      %v757 = vcombine.high %v756, 0.0
      %v758 = vcombine.low %v602, %v630
      %v760 = vunpack.c.l.s4 1934713408
      %v761 = vunpack.c.0.s8 %v760
      %v762 = vlaneseq
      %v763 = vshrl.u32 %v762, 7
      %v764 = vsub.s32 %v761, %v763
      %v765 = vrot.slane %v758, %v764
      %v766 = vcombine.high %v765, 0.0
      %v767 = vcombine.low %v658, %v686
      %v769 = vunpack.c.l.s4 1934713408
      %v770 = vunpack.c.0.s8 %v769
      %v771 = vlaneseq
      %v772 = vshrl.u32 %v771, 7
      %v773 = vsub.s32 %v770, %v772
      %v774 = vrot.slane %v767, %v773
      %v775 = vcombine.high %v774, 0.0
      %v776 = vcombine.low %v497, %v525
      %v778 = vunpack.c.l.s4 1934713408
      %v779 = vunpack.c.0.s8 %v778
      %v780 = vlaneseq
      %v781 = vshrl.u32 %v780, 7
      %v782 = vsub.s32 %v779, %v781
      %v783 = vrot.slane %v776, %v782
      %v784 = vcombine.high %v783, 0.0
      %v785 = vcombine.low %v553, %v581
      %v787 = vunpack.c.l.s4 1934713408
      %v788 = vunpack.c.0.s8 %v787
      %v789 = vlaneseq
      %v790 = vshrl.u32 %v789, 7
      %v791 = vsub.s32 %v788, %v790
      %v792 = vrot.slane %v785, %v791
      %v793 = vcombine.high %v792, 0.0
      %v794 = vcombine.low %v609, %v637
      %v796 = vunpack.c.l.s4 1934713408
      %v797 = vunpack.c.0.s8 %v796
      %v798 = vlaneseq
      %v799 = vshrl.u32 %v798, 7
      %v800 = vsub.s32 %v797, %v799
      %v801 = vrot.slane %v794, %v800
      %v802 = vcombine.high %v801, 0.0
      %v803 = vcombine.low %v665, %v693
      %v805 = vunpack.c.l.s4 1934713408
      %v806 = vunpack.c.0.s8 %v805
      %v807 = vlaneseq
      %v808 = vshrl.u32 %v807, 7
      %v809 = vsub.s32 %v806, %v808
      %v810 = vrot.slane %v803, %v809
      %v811 = vcombine.high %v810, 0.0
      %v812 = vcombine.low %v504, %v532
      %v814 = vunpack.c.l.s4 1934713408
      %v815 = vunpack.c.0.s8 %v814
      %v816 = vlaneseq
      %v817 = vshrl.u32 %v816, 7
      %v818 = vsub.s32 %v815, %v817
      %v819 = vrot.slane %v812, %v818
      %v820 = vcombine.high %v819, 0.0
      %v821 = vcombine.low %v560, %v588
      %v823 = vunpack.c.l.s4 1934713408
      %v824 = vunpack.c.0.s8 %v823
      %v825 = vlaneseq
      %v826 = vshrl.u32 %v825, 7
      %v827 = vsub.s32 %v824, %v826
      %v828 = vrot.slane %v821, %v827
      %v829 = vcombine.high %v828, 0.0
      %v830 = vcombine.low %v616, %v644
      %v832 = vunpack.c.l.s4 1934713408
      %v833 = vunpack.c.0.s8 %v832
      %v834 = vlaneseq
      %v835 = vshrl.u32 %v834, 7
      %v836 = vsub.s32 %v833, %v835
      %v837 = vrot.slane %v830, %v836
      %v838 = vcombine.high %v837, 0.0
      %v839 = vcombine.low %v672, %v700
      %v841 = vunpack.c.l.s4 1934713408
      %v842 = vunpack.c.0.s8 %v841
      %v843 = vlaneseq
      %v844 = vshrl.u32 %v843, 7
      %v845 = vsub.s32 %v842, %v844
      %v846 = vrot.slane %v839, %v845
      %v847 = vcombine.high %v846, 0.0
      %v848 = vcombine.low %v511, %v539
      %v850 = vunpack.c.l.s4 1934713408
      %v851 = vunpack.c.0.s8 %v850
      %v852 = vlaneseq
      %v853 = vshrl.u32 %v852, 7
      %v854 = vsub.s32 %v851, %v853
      %v855 = vrot.slane %v848, %v854
      %v856 = vcombine.high %v855, 0.0
      %v857 = vcombine.low %v567, %v595
      %v859 = vunpack.c.l.s4 1934713408
      %v860 = vunpack.c.0.s8 %v859
      %v861 = vlaneseq
      %v862 = vshrl.u32 %v861, 7
      %v863 = vsub.s32 %v860, %v862
      %v864 = vrot.slane %v857, %v863
      %v865 = vcombine.high %v864, 0.0
      %v866 = vcombine.low %v623, %v651
      %v868 = vunpack.c.l.s4 1934713408
      %v869 = vunpack.c.0.s8 %v868
      %v870 = vlaneseq
      %v871 = vshrl.u32 %v870, 7
      %v872 = vsub.s32 %v869, %v871
      %v873 = vrot.slane %v866, %v872
      %v874 = vcombine.high %v873, 0.0
      %v875 = vcombine.low %v679, %v707
      %v877 = vunpack.c.l.s4 1934713408
      %v878 = vunpack.c.0.s8 %v877
      %v879 = vlaneseq
      %v880 = vshrl.u32 %v879, 7
      %v881 = vsub.s32 %v878, %v880
      %v882 = vrot.slane %v875, %v881
      %v883 = vcombine.high %v882, 0.0
      %916 = vrot.lane.b32.xlu0 %v747, 124
      %v917 = vpop.permute.xlu0 %916
      %918 = vrot.lane.b32.xlu0 %v756, 124
      %v919 = vpop.permute.xlu0 %918
      %920 = vrot.lane.b32.xlu0 %v765, 124
      %v921 = vpop.permute.xlu0 %920
      %922 = vrot.lane.b32.xlu0 %v774, 124
      %v923 = vpop.permute.xlu0 %922
      %924 = vrot.lane.b32.xlu0 %v748, 124
      %v925 = vpop.permute.xlu0 %924
      %926 = vrot.lane.b32.xlu0 %v757, 124
      %v927 = vpop.permute.xlu0 %926
      %928 = vrot.lane.b32.xlu0 %v766, 124
      %v929 = vpop.permute.xlu0 %928
      %930 = vrot.lane.b32.xlu0 %v775, 124
      %v931 = vpop.permute.xlu0 %930
      %932 = vrot.lane.b32.xlu0 %v783, 124
      %v933 = vpop.permute.xlu0 %932
      %934 = vrot.lane.b32.xlu0 %v792, 124
      %v935 = vpop.permute.xlu0 %934
      %936 = vrot.lane.b32.xlu0 %v801, 124
      %v937 = vpop.permute.xlu0 %936
      %938 = vrot.lane.b32.xlu0 %v810, 124
      %v939 = vpop.permute.xlu0 %938
      %940 = vrot.lane.b32.xlu0 %v784, 124
      %v941 = vpop.permute.xlu0 %940
      %942 = vrot.lane.b32.xlu0 %v793, 124
      %v943 = vpop.permute.xlu0 %942
      %944 = vrot.lane.b32.xlu0 %v802, 124
      %v945 = vpop.permute.xlu0 %944
      %946 = vrot.lane.b32.xlu0 %v811, 124
      %v947 = vpop.permute.xlu0 %946
      %948 = vrot.lane.b32.xlu0 %v819, 124
      %v949 = vpop.permute.xlu0 %948
      %950 = vrot.lane.b32.xlu0 %v828, 124
      %v951 = vpop.permute.xlu0 %950
      %952 = vrot.lane.b32.xlu0 %v837, 124
      %v953 = vpop.permute.xlu0 %952
      %954 = vrot.lane.b32.xlu0 %v846, 124
      %v955 = vpop.permute.xlu0 %954
      %956 = vrot.lane.b32.xlu0 %v820, 124
      %v957 = vpop.permute.xlu0 %956
      %958 = vrot.lane.b32.xlu0 %v829, 124
      %v959 = vpop.permute.xlu0 %958
      %960 = vrot.lane.b32.xlu0 %v838, 124
      %v961 = vpop.permute.xlu0 %960
      %962 = vrot.lane.b32.xlu0 %v847, 124
      %v963 = vpop.permute.xlu0 %962
      %964 = vrot.lane.b32.xlu0 %v855, 124
      %v965 = vpop.permute.xlu0 %964
      %966 = vrot.lane.b32.xlu0 %v864, 124
      %v967 = vpop.permute.xlu0 %966
      %968 = vrot.lane.b32.xlu0 %v873, 124
      %v969 = vpop.permute.xlu0 %968
      %970 = vrot.lane.b32.xlu0 %v882, 124
      %v971 = vpop.permute.xlu0 %970
      %972 = vrot.lane.b32.xlu0 %v856, 124
      %v973 = vpop.permute.xlu0 %972
      %974 = vrot.lane.b32.xlu0 %v865, 124
      %v975 = vpop.permute.xlu0 %974
      %976 = vrot.lane.b32.xlu0 %v874, 124
      %v977 = vpop.permute.xlu0 %976
      %978 = vrot.lane.b32.xlu0 %v883, 124
      %v979 = vpop.permute.xlu0 %978
      %v1012 = vadd.f32 %v747, %v917
      %v1013 = vadd.f32 %v756, %v919
      %v1014 = vadd.f32 %v765, %v921
      %v1015 = vadd.f32 %v774, %v923
      %v1016 = vadd.f32 %v748, %v925
      %v1017 = vadd.f32 %v757, %v927
      %v1018 = vadd.f32 %v766, %v929
      %v1019 = vadd.f32 %v775, %v931
      %v1020 = vadd.f32 %v783, %v933
      %v1021 = vadd.f32 %v792, %v935
      %v1022 = vadd.f32 %v801, %v937
      %v1023 = vadd.f32 %v810, %v939
      %v1024 = vadd.f32 %v784, %v941
      %v1025 = vadd.f32 %v793, %v943
      %v1026 = vadd.f32 %v802, %v945
      %v1027 = vadd.f32 %v811, %v947
      %v1028 = vadd.f32 %v819, %v949
      %v1029 = vadd.f32 %v828, %v951
      %v1030 = vadd.f32 %v837, %v953
      %v1031 = vadd.f32 %v846, %v955
      %v1032 = vadd.f32 %v820, %v957
      %v1033 = vadd.f32 %v829, %v959
      %v1034 = vadd.f32 %v838, %v961
      %v1035 = vadd.f32 %v847, %v963
      %v1036 = vadd.f32 %v855, %v965
      %v1037 = vadd.f32 %v864, %v967
      %v1038 = vadd.f32 %v873, %v969
      %v1039 = vadd.f32 %v882, %v971
      %v1040 = vadd.f32 %v856, %v973
      %v1041 = vadd.f32 %v865, %v975
      %v1042 = vadd.f32 %v874, %v977
      %v1043 = vadd.f32 %v883, %v979
      %vm1044 = vcmask 31744
      %1045 = vst.msk [vmem:[#allocation2] sm:$0xff] %vm1044, 0.0
      %vm1046 = vcmask 25600
      %1047 = vst.msk [vmem:[#allocation2 + $0x8] sm:$0x3] %vm1046, 0.0
      %s1048 = scalar_lea.vmem [#allocation2], 144
      %1049 = vst.msk [vmem:[%s1048] sm:$0xff] %vm1044, 0.0
      %1050 = vst.msk [vmem:[%s1048 + $0x8] sm:$0x3] %vm1046, 0.0
      %vm1051 = vcmask 24576
      %1052 = vst.msk [vmem:[#allocation2] sm:$0x1] %vm1051, 0.0
      %1053 = vst.msk [vmem:[#allocation2 + $0x10] sm:$0x1] %vm1051, 0.0
      %1054 = vst.msk [vmem:[#allocation2 + $0x20] sm:$0x1] %vm1051, 0.0
      %1055 = vst.msk [vmem:[#allocation2 + $0x30] sm:$0x1] %vm1051, 0.0
      %1056 = vst.msk [vmem:[#allocation2 + $0x40] sm:$0x1] %vm1051, 0.0
      %1057 = vst.msk [vmem:[#allocation2 + $0x50] sm:$0x1] %vm1051, 0.0
      %1058 = vst.msk [vmem:[#allocation2 + $0x60] sm:$0x1] %vm1051, 0.0
      %1059 = vst.msk [vmem:[#allocation2 + $0x70] sm:$0x1] %vm1051, 0.0
      %1060 = vst.msk [vmem:[#allocation2 + $0x80] sm:$0x1] %vm1051, 0.0
      %1061 = vst.msk [vmem:[#allocation2 + $0x90] sm:$0x1] %vm1051, 0.0
      %1062 = vst.msk [vmem:[#allocation2 + $0x9] sm:$0x1] %vm1051, 0.0
      %1063 = vst.msk [vmem:[#allocation2 + $0x19] sm:$0x1] %vm1051, 0.0
      %1064 = vst.msk [vmem:[#allocation2 + $0x29] sm:$0x1] %vm1051, 0.0
      %1065 = vst.msk [vmem:[#allocation2 + $0x39] sm:$0x1] %vm1051, 0.0
      %1066 = vst.msk [vmem:[#allocation2 + $0x49] sm:$0x1] %vm1051, 0.0
      %1067 = vst.msk [vmem:[#allocation2 + $0x59] sm:$0x1] %vm1051, 0.0
      %1068 = vst.msk [vmem:[#allocation2 + $0x69] sm:$0x1] %vm1051, 0.0
      %1069 = vst.msk [vmem:[#allocation2 + $0x79] sm:$0x1] %vm1051, 0.0
      %1070 = vst.msk [vmem:[#allocation2 + $0x89] sm:$0x1] %vm1051, 0.0
      %1071 = vst.msk [vmem:[#allocation2 + $0x99] sm:$0x1] %vm1051, 0.0
      %v1104 = vcombine.low %v1012, %v1013
      %v1105 = vcombine.low %v1014, %v1015
      %v1107 = vunpack.c.l.s4 1983009808
      %v1108 = vunpack.c.0.s8 %v1107
      %v1109 = vlaneseq
      %v1110 = vshrl.u32 %v1109, 7
      %v1111 = vsub.s32 %v1108, %v1110
      %v1112 = vrot.slane %v1104, %v1111
      %v1114 = vunpack.c.l.s4 1983009808
      %v1115 = vunpack.c.0.s8 %v1114
      %v1116 = vlaneseq
      %v1117 = vshrl.u32 %v1116, 7
      %v1118 = vsub.s32 %v1115, %v1117
      %v1119 = vrot.slane %v1105, %v1118
      %v1120 = vcombine.low %v1112, %v1119
      %v1121 = vcombine.low %v1016, %v1017
      %v1122 = vcombine.low %v1018, %v1019
      %v1124 = vunpack.c.l.s4 1983009808
      %v1125 = vunpack.c.0.s8 %v1124
      %v1126 = vlaneseq
      %v1127 = vshrl.u32 %v1126, 7
      %v1128 = vsub.s32 %v1125, %v1127
      %v1129 = vrot.slane %v1121, %v1128
      %v1131 = vunpack.c.l.s4 1983009808
      %v1132 = vunpack.c.0.s8 %v1131
      %v1133 = vlaneseq
      %v1134 = vshrl.u32 %v1133, 7
      %v1135 = vsub.s32 %v1132, %v1134
      %v1136 = vrot.slane %v1122, %v1135
      %v1137 = vcombine.low %v1129, %v1136
      %v1138 = vcombine.low %v1020, %v1021
      %v1139 = vcombine.low %v1022, %v1023
      %v1141 = vunpack.c.l.s4 1983009808
      %v1142 = vunpack.c.0.s8 %v1141
      %v1143 = vlaneseq
      %v1144 = vshrl.u32 %v1143, 7
      %v1145 = vsub.s32 %v1142, %v1144
      %v1146 = vrot.slane %v1138, %v1145
      %v1148 = vunpack.c.l.s4 1983009808
      %v1149 = vunpack.c.0.s8 %v1148
      %v1150 = vlaneseq
      %v1151 = vshrl.u32 %v1150, 7
      %v1152 = vsub.s32 %v1149, %v1151
      %v1153 = vrot.slane %v1139, %v1152
      %v1154 = vcombine.low %v1146, %v1153
      %v1155 = vcombine.low %v1024, %v1025
      %v1156 = vcombine.low %v1026, %v1027
      %v1158 = vunpack.c.l.s4 1983009808
      %v1159 = vunpack.c.0.s8 %v1158
      %v1160 = vlaneseq
      %v1161 = vshrl.u32 %v1160, 7
      %v1162 = vsub.s32 %v1159, %v1161
      %v1163 = vrot.slane %v1155, %v1162
      %v1165 = vunpack.c.l.s4 1983009808
      %v1166 = vunpack.c.0.s8 %v1165
      %v1167 = vlaneseq
      %v1168 = vshrl.u32 %v1167, 7
      %v1169 = vsub.s32 %v1166, %v1168
      %v1170 = vrot.slane %v1156, %v1169
      %v1171 = vcombine.low %v1163, %v1170
      %v1172 = vcombine.low %v1028, %v1029
      %v1173 = vcombine.low %v1030, %v1031
      %v1175 = vunpack.c.l.s4 1983009808
      %v1176 = vunpack.c.0.s8 %v1175
      %v1177 = vlaneseq
      %v1178 = vshrl.u32 %v1177, 7
      %v1179 = vsub.s32 %v1176, %v1178
      %v1180 = vrot.slane %v1172, %v1179
      %v1182 = vunpack.c.l.s4 1983009808
      %v1183 = vunpack.c.0.s8 %v1182
      %v1184 = vlaneseq
      %v1185 = vshrl.u32 %v1184, 7
      %v1186 = vsub.s32 %v1183, %v1185
      %v1187 = vrot.slane %v1173, %v1186
      %v1188 = vcombine.low %v1180, %v1187
      %v1189 = vcombine.low %v1032, %v1033
      %v1190 = vcombine.low %v1034, %v1035
      %v1192 = vunpack.c.l.s4 1983009808
      %v1193 = vunpack.c.0.s8 %v1192
      %v1194 = vlaneseq
      %v1195 = vshrl.u32 %v1194, 7
      %v1196 = vsub.s32 %v1193, %v1195
      %v1197 = vrot.slane %v1189, %v1196
      %v1199 = vunpack.c.l.s4 1983009808
      %v1200 = vunpack.c.0.s8 %v1199
      %v1201 = vlaneseq
      %v1202 = vshrl.u32 %v1201, 7
      %v1203 = vsub.s32 %v1200, %v1202
      %v1204 = vrot.slane %v1190, %v1203
      %v1205 = vcombine.low %v1197, %v1204
      %v1206 = vcombine.low %v1036, %v1037
      %v1207 = vcombine.low %v1038, %v1039
      %v1209 = vunpack.c.l.s4 1983009808
      %v1210 = vunpack.c.0.s8 %v1209
      %v1211 = vlaneseq
      %v1212 = vshrl.u32 %v1211, 7
      %v1213 = vsub.s32 %v1210, %v1212
      %v1214 = vrot.slane %v1206, %v1213
      %v1216 = vunpack.c.l.s4 1983009808
      %v1217 = vunpack.c.0.s8 %v1216
      %v1218 = vlaneseq
      %v1219 = vshrl.u32 %v1218, 7
      %v1220 = vsub.s32 %v1217, %v1219
      %v1221 = vrot.slane %v1207, %v1220
      %v1222 = vcombine.low %v1214, %v1221
      %v1223 = vcombine.low %v1040, %v1041
      %v1224 = vcombine.low %v1042, %v1043
      %v1226 = vunpack.c.l.s4 1983009808
      %v1227 = vunpack.c.0.s8 %v1226
      %v1228 = vlaneseq
      %v1229 = vshrl.u32 %v1228, 7
      %v1230 = vsub.s32 %v1227, %v1229
      %v1231 = vrot.slane %v1223, %v1230
      %v1233 = vunpack.c.l.s4 1983009808
      %v1234 = vunpack.c.0.s8 %v1233
      %v1235 = vlaneseq
      %v1236 = vshrl.u32 %v1235, 7
      %v1237 = vsub.s32 %v1234, %v1236
      %v1238 = vrot.slane %v1224, %v1237
      %v1239 = vcombine.low %v1231, %v1238
      %s1248 = scalar_lea.vmem [#allocation2], 16
      %1249 = vst.msk [vmem:[%s1248 + $0x1] sm:$0xff] %vm1044, %v1120
      %1250 = vst.msk [vmem:[%s1248 + $0x11] sm:$0xff] %vm1044, %v1137
      %1251 = vst.msk [vmem:[%s1248 + $0x21] sm:$0xff] %vm1044, %v1154
      %1252 = vst.msk [vmem:[%s1248 + $0x31] sm:$0xff] %vm1044, %v1171
      %1253 = vst.msk [vmem:[%s1248 + $0x41] sm:$0xff] %vm1044, %v1188
      %1254 = vst.msk [vmem:[%s1248 + $0x51] sm:$0xff] %vm1044, %v1205
      %1255 = vst.msk [vmem:[%s1248 + $0x61] sm:$0xff] %vm1044, %v1222
      %1256 = vst.msk [vmem:[%s1248 + $0x71] sm:$0xff] %vm1044, %v1239
      %v1257 = vld [vmem:[#allocation2] sm:$0xff]
      %v1258 = vld [vmem:[#allocation2 + $0x10] sm:$0xff]
      %v1259 = vld [vmem:[#allocation2 + $0x20] sm:$0xff]
      %v1260 = vld [vmem:[#allocation2 + $0x30] sm:$0xff]
      %v1261 = vld [vmem:[#allocation2 + $0x40] sm:$0xff]
      %v1262 = vld [vmem:[#allocation2 + $0x50] sm:$0xff]
      %v1263 = vld [vmem:[#allocation2 + $0x60] sm:$0xff]
      %v1264 = vld [vmem:[#allocation2 + $0x70] sm:$0xff]
      %v1265 = vld [vmem:[#allocation2 + $0x1] sm:$0xff]
      %v1266 = vld [vmem:[#allocation2 + $0x11] sm:$0xff]
      %v1267 = vld [vmem:[#allocation2 + $0x21] sm:$0xff]
      %v1268 = vld [vmem:[#allocation2 + $0x31] sm:$0xff]
      %v1269 = vld [vmem:[#allocation2 + $0x41] sm:$0xff]
      %v1270 = vld [vmem:[#allocation2 + $0x51] sm:$0xff]
      %v1271 = vld [vmem:[#allocation2 + $0x61] sm:$0xff]
      %v1272 = vld [vmem:[#allocation2 + $0x71] sm:$0xff]
      %v1273 = vld [vmem:[#allocation2 + $0x2] sm:$0xff]
      %v1274 = vld [vmem:[#allocation2 + $0x12] sm:$0xff]
      %v1275 = vld [vmem:[#allocation2 + $0x22] sm:$0xff]
      %v1276 = vld [vmem:[#allocation2 + $0x32] sm:$0xff]
      %v1277 = vld [vmem:[#allocation2 + $0x42] sm:$0xff]
      %v1278 = vld [vmem:[#allocation2 + $0x52] sm:$0xff]
      %v1279 = vld [vmem:[#allocation2 + $0x62] sm:$0xff]
      %v1280 = vld [vmem:[#allocation2 + $0x72] sm:$0xff]
      %1289 = vrot.lane.b32.xlu0 %v1265, 4
      %v1290 = vpop.permute.xlu0 %1289
      %1291 = vrot.lane.b32.xlu0 %v1266, 4
      %v1292 = vpop.permute.xlu0 %1291
      %1293 = vrot.lane.b32.xlu0 %v1267, 4
      %v1294 = vpop.permute.xlu0 %1293
      %1295 = vrot.lane.b32.xlu0 %v1268, 4
      %v1296 = vpop.permute.xlu0 %1295
      %1297 = vrot.lane.b32.xlu0 %v1269, 4
      %v1298 = vpop.permute.xlu0 %1297
      %1299 = vrot.lane.b32.xlu0 %v1270, 4
      %v1300 = vpop.permute.xlu0 %1299
      %1301 = vrot.lane.b32.xlu0 %v1271, 4
      %v1302 = vpop.permute.xlu0 %1301
      %1303 = vrot.lane.b32.xlu0 %v1272, 4
      %v1304 = vpop.permute.xlu0 %1303
      %1321 = vrot.lane.b32.xlu0 %v1273, 8
      %v1322 = vpop.permute.xlu0 %1321
      %1323 = vrot.lane.b32.xlu0 %v1274, 8
      %v1324 = vpop.permute.xlu0 %1323
      %1325 = vrot.lane.b32.xlu0 %v1275, 8
      %v1326 = vpop.permute.xlu0 %1325
      %1327 = vrot.lane.b32.xlu0 %v1276, 8
      %v1328 = vpop.permute.xlu0 %1327
      %1329 = vrot.lane.b32.xlu0 %v1277, 8
      %v1330 = vpop.permute.xlu0 %1329
      %1331 = vrot.lane.b32.xlu0 %v1278, 8
      %v1332 = vpop.permute.xlu0 %1331
      %1333 = vrot.lane.b32.xlu0 %v1279, 8
      %v1334 = vpop.permute.xlu0 %1333
      %1335 = vrot.lane.b32.xlu0 %v1280, 8
      %v1336 = vpop.permute.xlu0 %1335
      %v1345 = vsel %vm1044, %v1257, %v1290
      %v1346 = vsel %vm1044, %v1258, %v1292
      %v1347 = vsel %vm1044, %v1259, %v1294
      %v1348 = vsel %vm1044, %v1260, %v1296
      %v1349 = vsel %vm1044, %v1261, %v1298
      %v1350 = vsel %vm1044, %v1262, %v1300
      %v1351 = vsel %vm1044, %v1263, %v1302
      %v1352 = vsel %vm1044, %v1264, %v1304
      %vm1353 = vcmask 64512
      %v1354 = vsel %vm1353, %v1345, %v1322
      %v1355 = vsel %vm1353, %v1346, %v1324
      %v1356 = vsel %vm1353, %v1347, %v1326
      %v1357 = vsel %vm1353, %v1348, %v1328
      %v1358 = vsel %vm1353, %v1349, %v1330
      %v1359 = vsel %vm1353, %v1350, %v1332
      %v1360 = vsel %vm1353, %v1351, %v1334
      %v1361 = vsel %vm1353, %v1352, %v1336
      %v1362 = vld [vmem:[%s1] sm:$0xff]
      %v1363 = vld [vmem:[%s1 + $0x8] sm:$0xf]
      %v1364 = vld [vmem:[%s1248] sm:$0xff]
      %v1365 = vld [vmem:[%s1248 + $0x10] sm:$0xff]
      %v1366 = vld [vmem:[%s1248 + $0x20] sm:$0xff]
      %v1367 = vld [vmem:[%s1248 + $0x30] sm:$0xff]
      %v1368 = vld [vmem:[%s1248 + $0x40] sm:$0xff]
      %v1369 = vld [vmem:[%s1248 + $0x50] sm:$0xff]
      %v1370 = vld [vmem:[%s1248 + $0x60] sm:$0xff]
      %v1371 = vld [vmem:[%s1248 + $0x70] sm:$0xff]
      %v1372 = vld [vmem:[%s1248 + $0x1] sm:$0xff]
      %v1373 = vld [vmem:[%s1248 + $0x11] sm:$0xff]
      %v1374 = vld [vmem:[%s1248 + $0x21] sm:$0xff]
      %v1375 = vld [vmem:[%s1248 + $0x31] sm:$0xff]
      %v1376 = vld [vmem:[%s1248 + $0x41] sm:$0xff]
      %v1377 = vld [vmem:[%s1248 + $0x51] sm:$0xff]
      %v1378 = vld [vmem:[%s1248 + $0x61] sm:$0xff]
      %v1379 = vld [vmem:[%s1248 + $0x71] sm:$0xff]
      %v1380 = vld [vmem:[%s1248 + $0x2] sm:$0xff]
      %v1381 = vld [vmem:[%s1248 + $0x12] sm:$0xff]
      %v1382 = vld [vmem:[%s1248 + $0x22] sm:$0xff]
      %v1383 = vld [vmem:[%s1248 + $0x32] sm:$0xff]
      %v1384 = vld [vmem:[%s1248 + $0x42] sm:$0xff]
      %v1385 = vld [vmem:[%s1248 + $0x52] sm:$0xff]
      %v1386 = vld [vmem:[%s1248 + $0x62] sm:$0xff]
      %v1387 = vld [vmem:[%s1248 + $0x72] sm:$0xff]
      %1396 = vrot.lane.b32.xlu0 %v1372, 4
      %v1397 = vpop.permute.xlu0 %1396
      %1398 = vrot.lane.b32.xlu0 %v1373, 4
      %v1399 = vpop.permute.xlu0 %1398
      %1400 = vrot.lane.b32.xlu0 %v1374, 4
      %v1401 = vpop.permute.xlu0 %1400
      %1402 = vrot.lane.b32.xlu0 %v1375, 4
      %v1403 = vpop.permute.xlu0 %1402
      %1404 = vrot.lane.b32.xlu0 %v1376, 4
      %v1405 = vpop.permute.xlu0 %1404
      %1406 = vrot.lane.b32.xlu0 %v1377, 4
      %v1407 = vpop.permute.xlu0 %1406
      %1408 = vrot.lane.b32.xlu0 %v1378, 4
      %v1409 = vpop.permute.xlu0 %1408
      %1410 = vrot.lane.b32.xlu0 %v1379, 4
      %v1411 = vpop.permute.xlu0 %1410
      %1428 = vrot.lane.b32.xlu0 %v1380, 8
      %v1429 = vpop.permute.xlu0 %1428
      %1430 = vrot.lane.b32.xlu0 %v1381, 8
      %v1431 = vpop.permute.xlu0 %1430
      %1432 = vrot.lane.b32.xlu0 %v1382, 8
      %v1433 = vpop.permute.xlu0 %1432
      %1434 = vrot.lane.b32.xlu0 %v1383, 8
      %v1435 = vpop.permute.xlu0 %1434
      %1436 = vrot.lane.b32.xlu0 %v1384, 8
      %v1437 = vpop.permute.xlu0 %1436
      %1438 = vrot.lane.b32.xlu0 %v1385, 8
      %v1439 = vpop.permute.xlu0 %1438
      %1440 = vrot.lane.b32.xlu0 %v1386, 8
      %v1441 = vpop.permute.xlu0 %1440
      %1442 = vrot.lane.b32.xlu0 %v1387, 8
      %v1443 = vpop.permute.xlu0 %1442
      %v1452 = vsel %vm1044, %v1364, %v1397
      %v1453 = vsel %vm1044, %v1365, %v1399
      %v1454 = vsel %vm1044, %v1366, %v1401
      %v1455 = vsel %vm1044, %v1367, %v1403
      %v1456 = vsel %vm1044, %v1368, %v1405
      %v1457 = vsel %vm1044, %v1369, %v1407
      %v1458 = vsel %vm1044, %v1370, %v1409
      %v1459 = vsel %vm1044, %v1371, %v1411
      %v1460 = vsel %vm1353, %v1452, %v1429
      %v1461 = vsel %vm1353, %v1453, %v1431
      %v1462 = vsel %vm1353, %v1454, %v1433
      %v1463 = vsel %vm1353, %v1455, %v1435
      %v1464 = vsel %vm1353, %v1456, %v1437
      %v1465 = vsel %vm1353, %v1457, %v1439
      %v1466 = vsel %vm1353, %v1458, %v1441
      %v1467 = vsel %vm1353, %v1459, %v1443
      %s1468 = scalar_lea.vmem %s1, 16
      %v1469 = vld [vmem:[%s1468] sm:$0xff]
      %v1470 = vld [vmem:[%s1468 + $0x8] sm:$0xf]
      %vm1471 = vcmask 97280
      %v1473 = vsel %vm1471, %v1460, 0
      %v1476 = vsel %vm1471, %v1461, 0
      %v1479 = vsel %vm1471, %v1462, 0
      %v1482 = vsel %vm1471, %v1463, 0
      %v1485 = vsel %vm1471, %v1464, 0
      %v1488 = vsel %vm1471, %v1465, 0
      %v1491 = vsel %vm1471, %v1466, 0
      %v1494 = vsel %vm1471, %v1467, 0
      %vm1496 = vcmask 1043456
      %v1498 = vsel %vm1496, %v1470, 0
      %1500 = vmatprep.subr.mxu0 0.0
      %1501 = vmatpush1.msra.mxu0 %v1469
      %1502 = vmatprep.subr.mxu0 0.0
      %1503 = vmatpush1.msra.mxu0 %v1498
      %1504 = vmatprep.subr.mxu0 0.0
      %1505 = vmatpush1.msra.mxu0 0.0
      %1506 = vmatprep.subr.mxu0 0.0
      %1507 = vmatpush1.msra.mxu0 0.0
      %1508 = vmatprep.subr.mxu0 0.0
      %1509 = vmatpush1.msra.mxu0 0.0
      %1510 = vmatprep.subr.mxu0 0.0
      %1511 = vmatpush1.msra.mxu0 0.0
      %1512 = vmatprep.subr.mxu0 0.0
      %1513 = vmatpush1.msra.mxu0 0.0
      %1514 = vmatprep.subr.mxu0 0.0
      %1515 = vmatpush1.msra.mxu0 0.0
      %1516 = vmatprep.subr.mxu0 0.0
      %1517 = vmatpush1.msra.mxu0 0.0
      %1518 = vmatprep.subr.mxu0 0.0
      %1519 = vmatpush1.msra.mxu0 0.0
      %1520 = vmatprep.subr.mxu0 0.0
      %1521 = vmatpush1.msra.mxu0 0.0
      %1522 = vmatprep.subr.mxu0 0.0
      %1523 = vmatpush1.msra.mxu0 0.0
      %1524 = vmatprep.subr.mxu0 0.0
      %1525 = vmatpush1.msra.mxu0 0.0
      %1526 = vmatprep.subr.mxu0 0.0
      %1527 = vmatpush1.msra.mxu0 0.0
      %1528 = vmatprep.subr.mxu0 0.0
      %1529 = vmatpush1.msra.mxu0 0.0
      %1530 = vmatprep.subr.mxu0 0.0
      %1531 = vmatpush1.msra.mxu0 0.0
      %1532 = vmatprep.subr.mxu0 0.0
      %1533 = vmatpush1.msra.mxu0 0.0
      %1534 = vmatprep.subr.mxu0 0.0
      %1535 = vmatpush1.msra.mxu0 0.0
      %1536 = vmatprep.subr.mxu0 0.0
      %1537 = vmatpush1.msra.mxu0 0.0
      %1538 = vmatprep.subr.mxu0 0.0
      %1539 = vmatpush1.msra.mxu0 0.0
      %1540 = vmatprep.subr.mxu0 0.0
      %1541 = vmatpush1.msra.mxu0 0.0
      %1542 = vmatprep.subr.mxu0 0.0
      %1543 = vmatpush1.msra.mxu0 0.0
      %1544 = vmatprep.subr.mxu0 0.0
      %1545 = vmatpush1.msra.mxu0 0.0
      %1546 = vmatprep.subr.mxu0 0.0
      %1547 = vmatpush1.msra.mxu0 0.0
      %1548 = vmatprep.subr.mxu0 0.0
      %1549 = vmatpush1.msra.mxu0 0.0
      %1550 = vmatprep.subr.mxu0 0.0
      %1551 = vmatpush1.msra.mxu0 0.0
      %1552 = vmatprep.subr.mxu0 0.0
      %1553 = vmatpush1.msra.mxu0 0.0
      %1554 = vmatprep.subr.mxu0 0.0
      %1555 = vmatpush1.msra.mxu0 0.0
      %1556 = vmatprep.subr.mxu0 0.0
      %1557 = vmatpush1.msra.mxu0 0.0
      %1558 = vmatprep.subr.mxu0 0.0
      %1559 = vmatpush1.msra.mxu0 0.0
      %1560 = vmatprep.subr.mxu0 0.0
      %1561 = vmatpush1.msra.mxu0 0.0
      %1562 = vmatprep.subr.mxu0 0.0
      %1563 = vmatpush1.msra.mxu0 0.0
      %1564 = vmatprep.mubr.f32.mxu0 0.0
      %1565 = vmatmul.mubr.f32.gmra.mrb[0].mxu0 %v1473
      %v1566 = vpop.f32.mrb[0].mxu0
      %v1567 = vadd.f32 0.0, %v1566
      %v1568 = vpop.f32.mrb[0].mxu0
      %1569 = vmatprep.mubr.f32.mxu0 0.0
      %1570 = vmatmul.mubr.f32.gmra.mrb[0].mxu0 %v1476
      %v1571 = vpop.f32.mrb[0].mxu0
      %v1572 = vadd.f32 0.0, %v1571
      %v1573 = vpop.f32.mrb[0].mxu0
      %1574 = vmatprep.mubr.f32.mxu0 0.0
      %1575 = vmatmul.mubr.f32.gmra.mrb[0].mxu0 %v1479
      %v1576 = vpop.f32.mrb[0].mxu0
      %v1577 = vadd.f32 0.0, %v1576
      %v1578 = vpop.f32.mrb[0].mxu0
      %1579 = vmatprep.mubr.f32.mxu0 0.0
      %1580 = vmatmul.mubr.f32.gmra.mrb[0].mxu0 %v1482
      %v1581 = vpop.f32.mrb[0].mxu0
      %v1582 = vadd.f32 0.0, %v1581
      %v1583 = vpop.f32.mrb[0].mxu0
      %1584 = vmatprep.mubr.f32.mxu0 0.0
      %1585 = vmatmul.mubr.f32.gmra.mrb[0].mxu0 %v1485
      %v1586 = vpop.f32.mrb[0].mxu0
      %v1587 = vadd.f32 0.0, %v1586
      %v1588 = vpop.f32.mrb[0].mxu0
      %1589 = vmatprep.mubr.f32.mxu0 0.0
      %1590 = vmatmul.mubr.f32.gmra.mrb[0].mxu0 %v1488
      %v1591 = vpop.f32.mrb[0].mxu0
      %v1592 = vadd.f32 0.0, %v1591
      %v1593 = vpop.f32.mrb[0].mxu0
      %1594 = vmatprep.mubr.f32.mxu0 0.0
      %1595 = vmatmul.mubr.f32.gmra.mrb[0].mxu0 %v1491
      %v1596 = vpop.f32.mrb[0].mxu0
      %v1597 = vadd.f32 0.0, %v1596
      %v1598 = vpop.f32.mrb[0].mxu0
      %1599 = vmatprep.mubr.f32.mxu0 0.0
      %1600 = vmatmul.mubr.f32.gmra.mrb[0].mxu0 %v1494
      %v1601 = vpop.f32.mrb[0].mxu0
      %v1602 = vadd.f32 0.0, %v1601
      %v1603 = vpop.f32.mrb[0].mxu0
      %1604 = vdwg.mxu0
      %v1606 = vsel %vm1471, %v1354, 0
      %v1609 = vsel %vm1471, %v1355, 0
      %v1612 = vsel %vm1471, %v1356, 0
      %v1615 = vsel %vm1471, %v1357, 0
      %v1618 = vsel %vm1471, %v1358, 0
      %v1621 = vsel %vm1471, %v1359, 0
      %v1624 = vsel %vm1471, %v1360, 0
      %v1627 = vsel %vm1471, %v1361, 0
      %v1630 = vsel %vm1496, %v1363, 0
      %1632 = vmatprep.subr.mxu0 0.0
      %1633 = vmatpush1.msra.mxu0 %v1362
      %1634 = vmatprep.subr.mxu0 0.0
      %1635 = vmatpush1.msra.mxu0 %v1630
      %1636 = vmatprep.subr.mxu0 0.0
      %1637 = vmatpush1.msra.mxu0 0.0
      %1638 = vmatprep.subr.mxu0 0.0
      %1639 = vmatpush1.msra.mxu0 0.0
      %1640 = vmatprep.subr.mxu0 0.0
      %1641 = vmatpush1.msra.mxu0 0.0
      %1642 = vmatprep.subr.mxu0 0.0
      %1643 = vmatpush1.msra.mxu0 0.0
      %1644 = vmatprep.subr.mxu0 0.0
      %1645 = vmatpush1.msra.mxu0 0.0
      %1646 = vmatprep.subr.mxu0 0.0
      %1647 = vmatpush1.msra.mxu0 0.0
      %1648 = vmatprep.subr.mxu0 0.0
      %1649 = vmatpush1.msra.mxu0 0.0
      %1650 = vmatprep.subr.mxu0 0.0
      %1651 = vmatpush1.msra.mxu0 0.0
      %1652 = vmatprep.subr.mxu0 0.0
      %1653 = vmatpush1.msra.mxu0 0.0
      %1654 = vmatprep.subr.mxu0 0.0
      %1655 = vmatpush1.msra.mxu0 0.0
      %1656 = vmatprep.subr.mxu0 0.0
      %1657 = vmatpush1.msra.mxu0 0.0
      %1658 = vmatprep.subr.mxu0 0.0
      %1659 = vmatpush1.msra.mxu0 0.0
      %1660 = vmatprep.subr.mxu0 0.0
      %1661 = vmatpush1.msra.mxu0 0.0
      %1662 = vmatprep.subr.mxu0 0.0
      %1663 = vmatpush1.msra.mxu0 0.0
      %1664 = vmatprep.subr.mxu0 0.0
      %1665 = vmatpush1.msra.mxu0 0.0
      %1666 = vmatprep.subr.mxu0 0.0
      %1667 = vmatpush1.msra.mxu0 0.0
      %1668 = vmatprep.subr.mxu0 0.0
      %1669 = vmatpush1.msra.mxu0 0.0
      %1670 = vmatprep.subr.mxu0 0.0
      %1671 = vmatpush1.msra.mxu0 0.0
      %1672 = vmatprep.subr.mxu0 0.0
      %1673 = vmatpush1.msra.mxu0 0.0
      %1674 = vmatprep.subr.mxu0 0.0
      %1675 = vmatpush1.msra.mxu0 0.0
      %1676 = vmatprep.subr.mxu0 0.0
      %1677 = vmatpush1.msra.mxu0 0.0
      %1678 = vmatprep.subr.mxu0 0.0
      %1679 = vmatpush1.msra.mxu0 0.0
      %1680 = vmatprep.subr.mxu0 0.0
      %1681 = vmatpush1.msra.mxu0 0.0
      %1682 = vmatprep.subr.mxu0 0.0
      %1683 = vmatpush1.msra.mxu0 0.0
      %1684 = vmatprep.subr.mxu0 0.0
      %1685 = vmatpush1.msra.mxu0 0.0
      %1686 = vmatprep.subr.mxu0 0.0
      %1687 = vmatpush1.msra.mxu0 0.0
      %1688 = vmatprep.subr.mxu0 0.0
      %1689 = vmatpush1.msra.mxu0 0.0
      %1690 = vmatprep.subr.mxu0 0.0
      %1691 = vmatpush1.msra.mxu0 0.0
      %1692 = vmatprep.subr.mxu0 0.0
      %1693 = vmatpush1.msra.mxu0 0.0
      %1694 = vmatprep.subr.mxu0 0.0
      %1695 = vmatpush1.msra.mxu0 0.0
      %1696 = vmatprep.mubr.f32.mxu0 0.0
      %1697 = vmatmul.mubr.f32.gmra.mrb[0].mxu0 %v1606
      %v1698 = vpop.f32.mrb[0].mxu0
      %v1699 = vadd.f32 %v1567, %v1698
      %v1700 = vpop.f32.mrb[0].mxu0
      %1701 = vmatprep.mubr.f32.mxu0 0.0
      %1702 = vmatmul.mubr.f32.gmra.mrb[0].mxu0 %v1609
      %v1703 = vpop.f32.mrb[0].mxu0
      %v1704 = vadd.f32 %v1572, %v1703
      %v1705 = vpop.f32.mrb[0].mxu0
      %1706 = vmatprep.mubr.f32.mxu0 0.0
      %1707 = vmatmul.mubr.f32.gmra.mrb[0].mxu0 %v1612
      %v1708 = vpop.f32.mrb[0].mxu0
      %v1709 = vadd.f32 %v1577, %v1708
      %v1710 = vpop.f32.mrb[0].mxu0
      %1711 = vmatprep.mubr.f32.mxu0 0.0
      %1712 = vmatmul.mubr.f32.gmra.mrb[0].mxu0 %v1615
      %v1713 = vpop.f32.mrb[0].mxu0
      %v1714 = vadd.f32 %v1582, %v1713
      %v1715 = vpop.f32.mrb[0].mxu0
      %1716 = vmatprep.mubr.f32.mxu0 0.0
      %1717 = vmatmul.mubr.f32.gmra.mrb[0].mxu0 %v1618
      %v1718 = vpop.f32.mrb[0].mxu0
      %v1719 = vadd.f32 %v1587, %v1718
      %v1720 = vpop.f32.mrb[0].mxu0
      %1721 = vmatprep.mubr.f32.mxu0 0.0
      %1722 = vmatmul.mubr.f32.gmra.mrb[0].mxu0 %v1621
      %v1723 = vpop.f32.mrb[0].mxu0
      %v1724 = vadd.f32 %v1592, %v1723
      %v1725 = vpop.f32.mrb[0].mxu0
      %1726 = vmatprep.mubr.f32.mxu0 0.0
      %1727 = vmatmul.mubr.f32.gmra.mrb[0].mxu0 %v1624
      %v1728 = vpop.f32.mrb[0].mxu0
      %v1729 = vadd.f32 %v1597, %v1728
      %v1730 = vpop.f32.mrb[0].mxu0
      %1731 = vmatprep.mubr.f32.mxu0 0.0
      %1732 = vmatmul.mubr.f32.gmra.mrb[0].mxu0 %v1627
      %v1733 = vpop.f32.mrb[0].mxu0
      %v1734 = vadd.f32 %v1602, %v1733
      %v1735 = vpop.f32.mrb[0].mxu0
      %1736 = vdwg.mxu0
      %s1737 = scalar_lea.vmem [#allocation2], 32
      %v1738 = vld [vmem:[%s1737] sm:$0xff]
      %v1739 = vld [vmem:[%s1737 + $0x10] sm:$0xff]
      %v1740 = vld [vmem:[%s1737 + $0x20] sm:$0xff]
      %v1741 = vld [vmem:[%s1737 + $0x30] sm:$0xff]
      %v1742 = vld [vmem:[%s1737 + $0x40] sm:$0xff]
      %v1743 = vld [vmem:[%s1737 + $0x50] sm:$0xff]
      %v1744 = vld [vmem:[%s1737 + $0x60] sm:$0xff]
      %v1745 = vld [vmem:[%s1737 + $0x70] sm:$0xff]
      %v1746 = vld [vmem:[%s1737 + $0x1] sm:$0xff]
      %v1747 = vld [vmem:[%s1737 + $0x11] sm:$0xff]
      %v1748 = vld [vmem:[%s1737 + $0x21] sm:$0xff]
      %v1749 = vld [vmem:[%s1737 + $0x31] sm:$0xff]
      %v1750 = vld [vmem:[%s1737 + $0x41] sm:$0xff]
      %v1751 = vld [vmem:[%s1737 + $0x51] sm:$0xff]
      %v1752 = vld [vmem:[%s1737 + $0x61] sm:$0xff]
      %v1753 = vld [vmem:[%s1737 + $0x71] sm:$0xff]
      %v1754 = vld [vmem:[%s1737 + $0x2] sm:$0xff]
      %v1755 = vld [vmem:[%s1737 + $0x12] sm:$0xff]
      %v1756 = vld [vmem:[%s1737 + $0x22] sm:$0xff]
      %v1757 = vld [vmem:[%s1737 + $0x32] sm:$0xff]
      %v1758 = vld [vmem:[%s1737 + $0x42] sm:$0xff]
      %v1759 = vld [vmem:[%s1737 + $0x52] sm:$0xff]
      %v1760 = vld [vmem:[%s1737 + $0x62] sm:$0xff]
      %v1761 = vld [vmem:[%s1737 + $0x72] sm:$0xff]
      %1770 = vrot.lane.b32.xlu0 %v1746, 4
      %v1771 = vpop.permute.xlu0 %1770
      %1772 = vrot.lane.b32.xlu0 %v1747, 4
      %v1773 = vpop.permute.xlu0 %1772
      %1774 = vrot.lane.b32.xlu0 %v1748, 4
      %v1775 = vpop.permute.xlu0 %1774
      %1776 = vrot.lane.b32.xlu0 %v1749, 4
      %v1777 = vpop.permute.xlu0 %1776
      %1778 = vrot.lane.b32.xlu0 %v1750, 4
      %v1779 = vpop.permute.xlu0 %1778
      %1780 = vrot.lane.b32.xlu0 %v1751, 4
      %v1781 = vpop.permute.xlu0 %1780
      %1782 = vrot.lane.b32.xlu0 %v1752, 4
      %v1783 = vpop.permute.xlu0 %1782
      %1784 = vrot.lane.b32.xlu0 %v1753, 4
      %v1785 = vpop.permute.xlu0 %1784
      %1802 = vrot.lane.b32.xlu0 %v1754, 8
      %v1803 = vpop.permute.xlu0 %1802
      %1804 = vrot.lane.b32.xlu0 %v1755, 8
      %v1805 = vpop.permute.xlu0 %1804
      %1806 = vrot.lane.b32.xlu0 %v1756, 8
      %v1807 = vpop.permute.xlu0 %1806
      %1808 = vrot.lane.b32.xlu0 %v1757, 8
      %v1809 = vpop.permute.xlu0 %1808
      %1810 = vrot.lane.b32.xlu0 %v1758, 8
      %v1811 = vpop.permute.xlu0 %1810
      %1812 = vrot.lane.b32.xlu0 %v1759, 8
      %v1813 = vpop.permute.xlu0 %1812
      %1814 = vrot.lane.b32.xlu0 %v1760, 8
      %v1815 = vpop.permute.xlu0 %1814
      %1816 = vrot.lane.b32.xlu0 %v1761, 8
      %v1817 = vpop.permute.xlu0 %1816
      %v1826 = vsel %vm1044, %v1738, %v1771
      %v1827 = vsel %vm1044, %v1739, %v1773
      %v1828 = vsel %vm1044, %v1740, %v1775
      %v1829 = vsel %vm1044, %v1741, %v1777
      %v1830 = vsel %vm1044, %v1742, %v1779
      %v1831 = vsel %vm1044, %v1743, %v1781
      %v1832 = vsel %vm1044, %v1744, %v1783
      %v1833 = vsel %vm1044, %v1745, %v1785
      %v1834 = vsel %vm1353, %v1826, %v1803
      %v1835 = vsel %vm1353, %v1827, %v1805
      %v1836 = vsel %vm1353, %v1828, %v1807
      %v1837 = vsel %vm1353, %v1829, %v1809
      %v1838 = vsel %vm1353, %v1830, %v1811
      %v1839 = vsel %vm1353, %v1831, %v1813
      %v1840 = vsel %vm1353, %v1832, %v1815
      %v1841 = vsel %vm1353, %v1833, %v1817
      %s1842 = scalar_lea.vmem %s1, 32
      %v1843 = vld [vmem:[%s1842] sm:$0xff]
      %v1844 = vld [vmem:[%s1842 + $0x8] sm:$0xf]
      %v1846 = vsel %vm1471, %v1834, 0
      %v1849 = vsel %vm1471, %v1835, 0
      %v1852 = vsel %vm1471, %v1836, 0
      %v1855 = vsel %vm1471, %v1837, 0
      %v1858 = vsel %vm1471, %v1838, 0
      %v1861 = vsel %vm1471, %v1839, 0
      %v1864 = vsel %vm1471, %v1840, 0
      %v1867 = vsel %vm1471, %v1841, 0
      %v1870 = vsel %vm1496, %v1844, 0
      %1872 = vmatprep.subr.mxu0 0.0
      %1873 = vmatpush1.msra.mxu0 %v1843
      %1874 = vmatprep.subr.mxu0 0.0
      %1875 = vmatpush1.msra.mxu0 %v1870
      %1876 = vmatprep.subr.mxu0 0.0
      %1877 = vmatpush1.msra.mxu0 0.0
      %1878 = vmatprep.subr.mxu0 0.0
      %1879 = vmatpush1.msra.mxu0 0.0
      %1880 = vmatprep.subr.mxu0 0.0
      %1881 = vmatpush1.msra.mxu0 0.0
      %1882 = vmatprep.subr.mxu0 0.0
      %1883 = vmatpush1.msra.mxu0 0.0
      %1884 = vmatprep.subr.mxu0 0.0
      %1885 = vmatpush1.msra.mxu0 0.0
      %1886 = vmatprep.subr.mxu0 0.0
      %1887 = vmatpush1.msra.mxu0 0.0
      %1888 = vmatprep.subr.mxu0 0.0
      %1889 = vmatpush1.msra.mxu0 0.0
      %1890 = vmatprep.subr.mxu0 0.0
      %1891 = vmatpush1.msra.mxu0 0.0
      %1892 = vmatprep.subr.mxu0 0.0
      %1893 = vmatpush1.msra.mxu0 0.0
      %1894 = vmatprep.subr.mxu0 0.0
      %1895 = vmatpush1.msra.mxu0 0.0
      %1896 = vmatprep.subr.mxu0 0.0
      %1897 = vmatpush1.msra.mxu0 0.0
      %1898 = vmatprep.subr.mxu0 0.0
      %1899 = vmatpush1.msra.mxu0 0.0
      %1900 = vmatprep.subr.mxu0 0.0
      %1901 = vmatpush1.msra.mxu0 0.0
      %1902 = vmatprep.subr.mxu0 0.0
      %1903 = vmatpush1.msra.mxu0 0.0
      %1904 = vmatprep.subr.mxu0 0.0
      %1905 = vmatpush1.msra.mxu0 0.0
      %1906 = vmatprep.subr.mxu0 0.0
      %1907 = vmatpush1.msra.mxu0 0.0
      %1908 = vmatprep.subr.mxu0 0.0
      %1909 = vmatpush1.msra.mxu0 0.0
      %1910 = vmatprep.subr.mxu0 0.0
      %1911 = vmatpush1.msra.mxu0 0.0
      %1912 = vmatprep.subr.mxu0 0.0
      %1913 = vmatpush1.msra.mxu0 0.0
      %1914 = vmatprep.subr.mxu0 0.0
      %1915 = vmatpush1.msra.mxu0 0.0
      %1916 = vmatprep.subr.mxu0 0.0
      %1917 = vmatpush1.msra.mxu0 0.0
      %1918 = vmatprep.subr.mxu0 0.0
      %1919 = vmatpush1.msra.mxu0 0.0
      %1920 = vmatprep.subr.mxu0 0.0
      %1921 = vmatpush1.msra.mxu0 0.0
      %1922 = vmatprep.subr.mxu0 0.0
      %1923 = vmatpush1.msra.mxu0 0.0
      %1924 = vmatprep.subr.mxu0 0.0
      %1925 = vmatpush1.msra.mxu0 0.0
      %1926 = vmatprep.subr.mxu0 0.0
      %1927 = vmatpush1.msra.mxu0 0.0
      %1928 = vmatprep.subr.mxu0 0.0
      %1929 = vmatpush1.msra.mxu0 0.0
      %1930 = vmatprep.subr.mxu0 0.0
      %1931 = vmatpush1.msra.mxu0 0.0
      %1932 = vmatprep.subr.mxu0 0.0
      %1933 = vmatpush1.msra.mxu0 0.0
      %1934 = vmatprep.subr.mxu0 0.0
      %1935 = vmatpush1.msra.mxu0 0.0
      %1936 = vmatprep.mubr.f32.mxu0 0.0
      %1937 = vmatmul.mubr.f32.gmra.mrb[0].mxu0 %v1846
      %v1938 = vpop.f32.mrb[0].mxu0
      %v1939 = vadd.f32 0.0, %v1938
      %v1940 = vpop.f32.mrb[0].mxu0
      %1941 = vmatprep.mubr.f32.mxu0 0.0
      %1942 = vmatmul.mubr.f32.gmra.mrb[0].mxu0 %v1849
      %v1943 = vpop.f32.mrb[0].mxu0
      %v1944 = vadd.f32 0.0, %v1943
      %v1945 = vpop.f32.mrb[0].mxu0
      %1946 = vmatprep.mubr.f32.mxu0 0.0
      %1947 = vmatmul.mubr.f32.gmra.mrb[0].mxu0 %v1852
      %v1948 = vpop.f32.mrb[0].mxu0
      %v1949 = vadd.f32 0.0, %v1948
      %v1950 = vpop.f32.mrb[0].mxu0
      %1951 = vmatprep.mubr.f32.mxu0 0.0
      %1952 = vmatmul.mubr.f32.gmra.mrb[0].mxu0 %v1855
      %v1953 = vpop.f32.mrb[0].mxu0
      %v1954 = vadd.f32 0.0, %v1953
      %v1955 = vpop.f32.mrb[0].mxu0
      %1956 = vmatprep.mubr.f32.mxu0 0.0
      %1957 = vmatmul.mubr.f32.gmra.mrb[0].mxu0 %v1858
      %v1958 = vpop.f32.mrb[0].mxu0
      %v1959 = vadd.f32 0.0, %v1958
      %v1960 = vpop.f32.mrb[0].mxu0
      %1961 = vmatprep.mubr.f32.mxu0 0.0
      %1962 = vmatmul.mubr.f32.gmra.mrb[0].mxu0 %v1861
      %v1963 = vpop.f32.mrb[0].mxu0
      %v1964 = vadd.f32 0.0, %v1963
      %v1965 = vpop.f32.mrb[0].mxu0
      %1966 = vmatprep.mubr.f32.mxu0 0.0
      %1967 = vmatmul.mubr.f32.gmra.mrb[0].mxu0 %v1864
      %v1968 = vpop.f32.mrb[0].mxu0
      %v1969 = vadd.f32 0.0, %v1968
      %v1970 = vpop.f32.mrb[0].mxu0
      %1971 = vmatprep.mubr.f32.mxu0 0.0
      %1972 = vmatmul.mubr.f32.gmra.mrb[0].mxu0 %v1867
      %v1973 = vpop.f32.mrb[0].mxu0
      %v1974 = vadd.f32 0.0, %v1973
      %v1975 = vpop.f32.mrb[0].mxu0
      %1976 = vdwg.mxu0
      %v1977 = vadd.f32 %v1699, %v1939
      %v1978 = vadd.f32 %v1704, %v1944
      %v1979 = vadd.f32 %v1709, %v1949
      %v1980 = vadd.f32 %v1714, %v1954
      %v1981 = vadd.f32 %v1719, %v1959
      %v1982 = vadd.f32 %v1724, %v1964
      %v1983 = vadd.f32 %v1729, %v1969
      %v1984 = vadd.f32 %v1734, %v1974
      %v1985 = vld [vmem:[%s2] sm:$0x1]
      %v1987 = vlaneseq
      %v1988 = vshrl.u32 %v1987, 7
      %v1989 = vsub.s32 0, %v1988
      %v1990 = vrot.slane %v1985, %v1989
      %v1992 = vmul.f32 %v1977, %v1990
      %v1993 = vmul.f32 %v1978, %v1990
      %v1994 = vmul.f32 %v1979, %v1990
      %v1995 = vmul.f32 %v1980, %v1990
      %v1996 = vmul.f32 %v1981, %v1990
      %v1997 = vmul.f32 %v1982, %v1990
      %v1998 = vmul.f32 %v1983, %v1990
      %v1999 = vmul.f32 %v1984, %v1990
      %v2000 = vld [vmem:[%s3] sm:$0x1]
      %v2002 = vlaneseq
      %v2003 = vshrl.u32 %v2002, 7
      %v2004 = vsub.s32 0, %v2003
      %v2005 = vrot.slane %v2000, %v2004
      %v2007 = vadd.f32 %v1992, %v2005
      %v2008 = vadd.f32 %v1993, %v2005
      %v2009 = vadd.f32 %v1994, %v2005
      %v2010 = vadd.f32 %v1995, %v2005
      %v2011 = vadd.f32 %v1996, %v2005
      %v2012 = vadd.f32 %v1997, %v2005
      %v2013 = vadd.f32 %v1998, %v2005
      %v2014 = vadd.f32 %v1999, %v2005
      %v2015 = vmax.f32 %v2007, 0.0
      %v2016 = vmax.f32 %v2008, 0.0
      %v2017 = vmax.f32 %v2009, 0.0
      %v2018 = vmax.f32 %v2010, 0.0
      %v2019 = vmax.f32 %v2011, 0.0
      %v2020 = vmax.f32 %v2012, 0.0
      %v2021 = vmax.f32 %v2013, 0.0
      %v2022 = vmax.f32 %v2014, 0.0
      %2023 = vst.msk [vmem:[#allocation3] sm:$0xff] %vm1353, 0.0
      %vm2024 = vcmask 58368
      %2025 = vst.msk [vmem:[#allocation3 + $0x8] sm:$0x3] %vm2024, 0.0
      %s2026 = scalar_lea.vmem [#allocation3], 144
      %2027 = vst.msk [vmem:[%s2026] sm:$0xff] %vm1353, 0.0
      %2028 = vst.msk [vmem:[%s2026 + $0x8] sm:$0x3] %vm2024, 0.0
      %vm2029 = vcmask 57344
      %2030 = vst.msk [vmem:[#allocation3] sm:$0x1] %vm2029, 0.0
      %2031 = vst.msk [vmem:[#allocation3 + $0x10] sm:$0x1] %vm2029, 0.0
      %2032 = vst.msk [vmem:[#allocation3 + $0x20] sm:$0x1] %vm2029, 0.0
      %2033 = vst.msk [vmem:[#allocation3 + $0x30] sm:$0x1] %vm2029, 0.0
      %2034 = vst.msk [vmem:[#allocation3 + $0x40] sm:$0x1] %vm2029, 0.0
      %2035 = vst.msk [vmem:[#allocation3 + $0x50] sm:$0x1] %vm2029, 0.0
      %2036 = vst.msk [vmem:[#allocation3 + $0x60] sm:$0x1] %vm2029, 0.0
      %2037 = vst.msk [vmem:[#allocation3 + $0x70] sm:$0x1] %vm2029, 0.0
      %2038 = vst.msk [vmem:[#allocation3 + $0x80] sm:$0x1] %vm2029, 0.0
      %2039 = vst.msk [vmem:[#allocation3 + $0x90] sm:$0x1] %vm2029, 0.0
      %2040 = vst.msk [vmem:[#allocation3 + $0x9] sm:$0x1] %vm2029, 0.0
      %2041 = vst.msk [vmem:[#allocation3 + $0x19] sm:$0x1] %vm2029, 0.0
      %2042 = vst.msk [vmem:[#allocation3 + $0x29] sm:$0x1] %vm2029, 0.0
      %2043 = vst.msk [vmem:[#allocation3 + $0x39] sm:$0x1] %vm2029, 0.0
      %2044 = vst.msk [vmem:[#allocation3 + $0x49] sm:$0x1] %vm2029, 0.0
      %2045 = vst.msk [vmem:[#allocation3 + $0x59] sm:$0x1] %vm2029, 0.0
      %2046 = vst.msk [vmem:[#allocation3 + $0x69] sm:$0x1] %vm2029, 0.0
      %2047 = vst.msk [vmem:[#allocation3 + $0x79] sm:$0x1] %vm2029, 0.0
      %2048 = vst.msk [vmem:[#allocation3 + $0x89] sm:$0x1] %vm2029, 0.0
      %2049 = vst.msk [vmem:[#allocation3 + $0x99] sm:$0x1] %vm2029, 0.0
      %s2050 = scalar_lea.vmem [#allocation3], 16
      %2051 = vst.msk [vmem:[%s2050 + $0x1] sm:$0xff] %vm1353, %v2015
      %2052 = vst.msk [vmem:[%s2050 + $0x11] sm:$0xff] %vm1353, %v2016
      %2053 = vst.msk [vmem:[%s2050 + $0x21] sm:$0xff] %vm1353, %v2017
      %2054 = vst.msk [vmem:[%s2050 + $0x31] sm:$0xff] %vm1353, %v2018
      %2055 = vst.msk [vmem:[%s2050 + $0x41] sm:$0xff] %vm1353, %v2019
      %2056 = vst.msk [vmem:[%s2050 + $0x51] sm:$0xff] %vm1353, %v2020
      %2057 = vst.msk [vmem:[%s2050 + $0x61] sm:$0xff] %vm1353, %v2021
      %2058 = vst.msk [vmem:[%s2050 + $0x71] sm:$0xff] %vm1353, %v2022
      %v2059 = vld [vmem:[#allocation3] sm:$0xff]
      %v2060 = vld [vmem:[#allocation3 + $0x10] sm:$0xff]
      %v2061 = vld [vmem:[#allocation3 + $0x20] sm:$0xff]
      %v2062 = vld [vmem:[#allocation3 + $0x30] sm:$0xff]
      %v2063 = vld [vmem:[#allocation3 + $0x40] sm:$0xff]
      %v2064 = vld [vmem:[#allocation3 + $0x50] sm:$0xff]
      %v2065 = vld [vmem:[#allocation3 + $0x60] sm:$0xff]
      %v2066 = vld [vmem:[#allocation3 + $0x70] sm:$0xff]
      %v2067 = vld [vmem:[#allocation3 + $0x1] sm:$0xff]
      %v2068 = vld [vmem:[#allocation3 + $0x11] sm:$0xff]
      %v2069 = vld [vmem:[#allocation3 + $0x21] sm:$0xff]
      %v2070 = vld [vmem:[#allocation3 + $0x31] sm:$0xff]
      %v2071 = vld [vmem:[#allocation3 + $0x41] sm:$0xff]
      %v2072 = vld [vmem:[#allocation3 + $0x51] sm:$0xff]
      %v2073 = vld [vmem:[#allocation3 + $0x61] sm:$0xff]
      %v2074 = vld [vmem:[#allocation3 + $0x71] sm:$0xff]
      %v2075 = vld [vmem:[#allocation3 + $0x2] sm:$0xff]
      %v2076 = vld [vmem:[#allocation3 + $0x12] sm:$0xff]
      %v2077 = vld [vmem:[#allocation3 + $0x22] sm:$0xff]
      %v2078 = vld [vmem:[#allocation3 + $0x32] sm:$0xff]
      %v2079 = vld [vmem:[#allocation3 + $0x42] sm:$0xff]
      %v2080 = vld [vmem:[#allocation3 + $0x52] sm:$0xff]
      %v2081 = vld [vmem:[#allocation3 + $0x62] sm:$0xff]
      %v2082 = vld [vmem:[#allocation3 + $0x72] sm:$0xff]
      %2091 = vrot.lane.b32.xlu0 %v2067, 8
      %v2092 = vpop.permute.xlu0 %2091
      %2093 = vrot.lane.b32.xlu0 %v2068, 8
      %v2094 = vpop.permute.xlu0 %2093
      %2095 = vrot.lane.b32.xlu0 %v2069, 8
      %v2096 = vpop.permute.xlu0 %2095
      %2097 = vrot.lane.b32.xlu0 %v2070, 8
      %v2098 = vpop.permute.xlu0 %2097
      %2099 = vrot.lane.b32.xlu0 %v2071, 8
      %v2100 = vpop.permute.xlu0 %2099
      %2101 = vrot.lane.b32.xlu0 %v2072, 8
      %v2102 = vpop.permute.xlu0 %2101
      %2103 = vrot.lane.b32.xlu0 %v2073, 8
      %v2104 = vpop.permute.xlu0 %2103
      %2105 = vrot.lane.b32.xlu0 %v2074, 8
      %v2106 = vpop.permute.xlu0 %2105
      %2123 = vrot.lane.b32.xlu0 %v2075, 16
      %v2124 = vpop.permute.xlu0 %2123
      %2125 = vrot.lane.b32.xlu0 %v2076, 16
      %v2126 = vpop.permute.xlu0 %2125
      %2127 = vrot.lane.b32.xlu0 %v2077, 16
      %v2128 = vpop.permute.xlu0 %2127
      %2129 = vrot.lane.b32.xlu0 %v2078, 16
      %v2130 = vpop.permute.xlu0 %2129
      %2131 = vrot.lane.b32.xlu0 %v2079, 16
      %v2132 = vpop.permute.xlu0 %2131
      %2133 = vrot.lane.b32.xlu0 %v2080, 16
      %v2134 = vpop.permute.xlu0 %2133
      %2135 = vrot.lane.b32.xlu0 %v2081, 16
      %v2136 = vpop.permute.xlu0 %2135
      %2137 = vrot.lane.b32.xlu0 %v2082, 16
      %v2138 = vpop.permute.xlu0 %2137
      %v2147 = vsel %vm1353, %v2059, %v2092
      %v2148 = vsel %vm1353, %v2060, %v2094
      %v2149 = vsel %vm1353, %v2061, %v2096
      %v2150 = vsel %vm1353, %v2062, %v2098
      %v2151 = vsel %vm1353, %v2063, %v2100
      %v2152 = vsel %vm1353, %v2064, %v2102
      %v2153 = vsel %vm1353, %v2065, %v2104
      %v2154 = vsel %vm1353, %v2066, %v2106
      %vm2155 = vcmask 130048
      %v2156 = vsel %vm2155, %v2147, %v2124
      %v2157 = vsel %vm2155, %v2148, %v2126
      %v2158 = vsel %vm2155, %v2149, %v2128
      %v2159 = vsel %vm2155, %v2150, %v2130
      %v2160 = vsel %vm2155, %v2151, %v2132
      %v2161 = vsel %vm2155, %v2152, %v2134
      %v2162 = vsel %vm2155, %v2153, %v2136
      %v2163 = vsel %vm2155, %v2154, %v2138
      %v2164 = vld [vmem:[%s4] sm:$0xff]
      %v2165 = vld [vmem:[%s4 + $0x8] sm:$0xff]
      %v2166 = vld [vmem:[%s4 + $0x10] sm:$0xff]
      %v2167 = vld [vmem:[%s2050] sm:$0xff]
      %v2168 = vld [vmem:[%s2050 + $0x10] sm:$0xff]
      %v2169 = vld [vmem:[%s2050 + $0x20] sm:$0xff]
      %v2170 = vld [vmem:[%s2050 + $0x30] sm:$0xff]
      %v2171 = vld [vmem:[%s2050 + $0x40] sm:$0xff]
      %v2172 = vld [vmem:[%s2050 + $0x50] sm:$0xff]
      %v2173 = vld [vmem:[%s2050 + $0x60] sm:$0xff]
      %v2174 = vld [vmem:[%s2050 + $0x70] sm:$0xff]
      %v2175 = vld [vmem:[%s2050 + $0x1] sm:$0xff]
      %v2176 = vld [vmem:[%s2050 + $0x11] sm:$0xff]
      %v2177 = vld [vmem:[%s2050 + $0x21] sm:$0xff]
      %v2178 = vld [vmem:[%s2050 + $0x31] sm:$0xff]
      %v2179 = vld [vmem:[%s2050 + $0x41] sm:$0xff]
      %v2180 = vld [vmem:[%s2050 + $0x51] sm:$0xff]
      %v2181 = vld [vmem:[%s2050 + $0x61] sm:$0xff]
      %v2182 = vld [vmem:[%s2050 + $0x71] sm:$0xff]
      %v2183 = vld [vmem:[%s2050 + $0x2] sm:$0xff]
      %v2184 = vld [vmem:[%s2050 + $0x12] sm:$0xff]
      %v2185 = vld [vmem:[%s2050 + $0x22] sm:$0xff]
      %v2186 = vld [vmem:[%s2050 + $0x32] sm:$0xff]
      %v2187 = vld [vmem:[%s2050 + $0x42] sm:$0xff]
      %v2188 = vld [vmem:[%s2050 + $0x52] sm:$0xff]
      %v2189 = vld [vmem:[%s2050 + $0x62] sm:$0xff]
      %v2190 = vld [vmem:[%s2050 + $0x72] sm:$0xff]
      %2199 = vrot.lane.b32.xlu0 %v2175, 8
      %v2200 = vpop.permute.xlu0 %2199
      %2201 = vrot.lane.b32.xlu0 %v2176, 8
      %v2202 = vpop.permute.xlu0 %2201
      %2203 = vrot.lane.b32.xlu0 %v2177, 8
      %v2204 = vpop.permute.xlu0 %2203
      %2205 = vrot.lane.b32.xlu0 %v2178, 8
      %v2206 = vpop.permute.xlu0 %2205
      %2207 = vrot.lane.b32.xlu0 %v2179, 8
      %v2208 = vpop.permute.xlu0 %2207
      %2209 = vrot.lane.b32.xlu0 %v2180, 8
      %v2210 = vpop.permute.xlu0 %2209
      %2211 = vrot.lane.b32.xlu0 %v2181, 8
      %v2212 = vpop.permute.xlu0 %2211
      %2213 = vrot.lane.b32.xlu0 %v2182, 8
      %v2214 = vpop.permute.xlu0 %2213
      %2231 = vrot.lane.b32.xlu0 %v2183, 16
      %v2232 = vpop.permute.xlu0 %2231
      %2233 = vrot.lane.b32.xlu0 %v2184, 16
      %v2234 = vpop.permute.xlu0 %2233
      %2235 = vrot.lane.b32.xlu0 %v2185, 16
      %v2236 = vpop.permute.xlu0 %2235
      %2237 = vrot.lane.b32.xlu0 %v2186, 16
      %v2238 = vpop.permute.xlu0 %2237
      %2239 = vrot.lane.b32.xlu0 %v2187, 16
      %v2240 = vpop.permute.xlu0 %2239
      %2241 = vrot.lane.b32.xlu0 %v2188, 16
      %v2242 = vpop.permute.xlu0 %2241
      %2243 = vrot.lane.b32.xlu0 %v2189, 16
      %v2244 = vpop.permute.xlu0 %2243
      %2245 = vrot.lane.b32.xlu0 %v2190, 16
      %v2246 = vpop.permute.xlu0 %2245
      %v2255 = vsel %vm1353, %v2167, %v2200
      %v2256 = vsel %vm1353, %v2168, %v2202
      %v2257 = vsel %vm1353, %v2169, %v2204
      %v2258 = vsel %vm1353, %v2170, %v2206
      %v2259 = vsel %vm1353, %v2171, %v2208
      %v2260 = vsel %vm1353, %v2172, %v2210
      %v2261 = vsel %vm1353, %v2173, %v2212
      %v2262 = vsel %vm1353, %v2174, %v2214
      %v2263 = vsel %vm2155, %v2255, %v2232
      %v2264 = vsel %vm2155, %v2256, %v2234
      %v2265 = vsel %vm2155, %v2257, %v2236
      %v2266 = vsel %vm2155, %v2258, %v2238
      %v2267 = vsel %vm2155, %v2259, %v2240
      %v2268 = vsel %vm2155, %v2260, %v2242
      %v2269 = vsel %vm2155, %v2261, %v2244
      %v2270 = vsel %vm2155, %v2262, %v2246
      %s2271 = scalar_lea.vmem %s4, 24
      %v2272 = vld [vmem:[%s2271] sm:$0xff]
      %v2273 = vld [vmem:[%s2271 + $0x8] sm:$0xff]
      %v2274 = vld [vmem:[%s2271 + $0x10] sm:$0xff]
      %vm2275 = vcmask 195584
      %v2277 = vsel %vm2275, %v2263, 0
      %v2280 = vsel %vm2275, %v2264, 0
      %v2283 = vsel %vm2275, %v2265, 0
      %v2286 = vsel %vm2275, %v2266, 0
      %v2289 = vsel %vm2275, %v2267, 0
      %v2292 = vsel %vm2275, %v2268, 0
      %v2295 = vsel %vm2275, %v2269, 0
      %v2298 = vsel %vm2275, %v2270, 0
      %2300 = vmatprep.subr.mxu0 0.0
      %2301 = vmatpush1.msra.mxu0 %v2272
      %2302 = vmatprep.subr.mxu0 0.0
      %2303 = vmatpush1.msra.mxu0 %v2273
      %2304 = vmatprep.subr.mxu0 0.0
      %2305 = vmatpush1.msra.mxu0 %v2274
      %2306 = vmatprep.subr.mxu0 0.0
      %2307 = vmatpush1.msra.mxu0 0.0
      %2308 = vmatprep.subr.mxu0 0.0
      %2309 = vmatpush1.msra.mxu0 0.0
      %2310 = vmatprep.subr.mxu0 0.0
      %2311 = vmatpush1.msra.mxu0 0.0
      %2312 = vmatprep.subr.mxu0 0.0
      %2313 = vmatpush1.msra.mxu0 0.0
      %2314 = vmatprep.subr.mxu0 0.0
      %2315 = vmatpush1.msra.mxu0 0.0
      %2316 = vmatprep.subr.mxu0 0.0
      %2317 = vmatpush1.msra.mxu0 0.0
      %2318 = vmatprep.subr.mxu0 0.0
      %2319 = vmatpush1.msra.mxu0 0.0
      %2320 = vmatprep.subr.mxu0 0.0
      %2321 = vmatpush1.msra.mxu0 0.0
      %2322 = vmatprep.subr.mxu0 0.0
      %2323 = vmatpush1.msra.mxu0 0.0
      %2324 = vmatprep.subr.mxu0 0.0
      %2325 = vmatpush1.msra.mxu0 0.0
      %2326 = vmatprep.subr.mxu0 0.0
      %2327 = vmatpush1.msra.mxu0 0.0
      %2328 = vmatprep.subr.mxu0 0.0
      %2329 = vmatpush1.msra.mxu0 0.0
      %2330 = vmatprep.subr.mxu0 0.0
      %2331 = vmatpush1.msra.mxu0 0.0
      %2332 = vmatprep.subr.mxu0 0.0
      %2333 = vmatpush1.msra.mxu0 0.0
      %2334 = vmatprep.subr.mxu0 0.0
      %2335 = vmatpush1.msra.mxu0 0.0
      %2336 = vmatprep.subr.mxu0 0.0
      %2337 = vmatpush1.msra.mxu0 0.0
      %2338 = vmatprep.subr.mxu0 0.0
      %2339 = vmatpush1.msra.mxu0 0.0
      %2340 = vmatprep.subr.mxu0 0.0
      %2341 = vmatpush1.msra.mxu0 0.0
      %2342 = vmatprep.subr.mxu0 0.0
      %2343 = vmatpush1.msra.mxu0 0.0
      %2344 = vmatprep.subr.mxu0 0.0
      %2345 = vmatpush1.msra.mxu0 0.0
      %2346 = vmatprep.subr.mxu0 0.0
      %2347 = vmatpush1.msra.mxu0 0.0
      %2348 = vmatprep.subr.mxu0 0.0
      %2349 = vmatpush1.msra.mxu0 0.0
      %2350 = vmatprep.subr.mxu0 0.0
      %2351 = vmatpush1.msra.mxu0 0.0
      %2352 = vmatprep.subr.mxu0 0.0
      %2353 = vmatpush1.msra.mxu0 0.0
      %2354 = vmatprep.subr.mxu0 0.0
      %2355 = vmatpush1.msra.mxu0 0.0
      %2356 = vmatprep.subr.mxu0 0.0
      %2357 = vmatpush1.msra.mxu0 0.0
      %2358 = vmatprep.subr.mxu0 0.0
      %2359 = vmatpush1.msra.mxu0 0.0
      %2360 = vmatprep.subr.mxu0 0.0
      %2361 = vmatpush1.msra.mxu0 0.0
      %2362 = vmatprep.subr.mxu0 0.0
      %2363 = vmatpush1.msra.mxu0 0.0
      %2364 = vmatprep.mubr.f32.mxu0 0.0
      %2365 = vmatmul.mubr.f32.gmra.mrb[0].mxu0 %v2277
      %v2366 = vpop.f32.mrb[0].mxu0
      %v2367 = vadd.f32 0.0, %v2366
      %v2368 = vpop.f32.mrb[0].mxu0
      %2369 = vmatprep.mubr.f32.mxu0 0.0
      %2370 = vmatmul.mubr.f32.gmra.mrb[0].mxu0 %v2280
      %v2371 = vpop.f32.mrb[0].mxu0
      %v2372 = vadd.f32 0.0, %v2371
      %v2373 = vpop.f32.mrb[0].mxu0
      %2374 = vmatprep.mubr.f32.mxu0 0.0
      %2375 = vmatmul.mubr.f32.gmra.mrb[0].mxu0 %v2283
      %v2376 = vpop.f32.mrb[0].mxu0
      %v2377 = vadd.f32 0.0, %v2376
      %v2378 = vpop.f32.mrb[0].mxu0
      %2379 = vmatprep.mubr.f32.mxu0 0.0
      %2380 = vmatmul.mubr.f32.gmra.mrb[0].mxu0 %v2286
      %v2381 = vpop.f32.mrb[0].mxu0
      %v2382 = vadd.f32 0.0, %v2381
      %v2383 = vpop.f32.mrb[0].mxu0
      %2384 = vmatprep.mubr.f32.mxu0 0.0
      %2385 = vmatmul.mubr.f32.gmra.mrb[0].mxu0 %v2289
      %v2386 = vpop.f32.mrb[0].mxu0
      %v2387 = vadd.f32 0.0, %v2386
      %v2388 = vpop.f32.mrb[0].mxu0
      %2389 = vmatprep.mubr.f32.mxu0 0.0
      %2390 = vmatmul.mubr.f32.gmra.mrb[0].mxu0 %v2292
      %v2391 = vpop.f32.mrb[0].mxu0
      %v2392 = vadd.f32 0.0, %v2391
      %v2393 = vpop.f32.mrb[0].mxu0
      %2394 = vmatprep.mubr.f32.mxu0 0.0
      %2395 = vmatmul.mubr.f32.gmra.mrb[0].mxu0 %v2295
      %v2396 = vpop.f32.mrb[0].mxu0
      %v2397 = vadd.f32 0.0, %v2396
      %v2398 = vpop.f32.mrb[0].mxu0
      %2399 = vmatprep.mubr.f32.mxu0 0.0
      %2400 = vmatmul.mubr.f32.gmra.mrb[0].mxu0 %v2298
      %v2401 = vpop.f32.mrb[0].mxu0
      %v2402 = vadd.f32 0.0, %v2401
      %v2403 = vpop.f32.mrb[0].mxu0
      %2404 = vdwg.mxu0
      %v2406 = vsel %vm2275, %v2156, 0
      %v2409 = vsel %vm2275, %v2157, 0
      %v2412 = vsel %vm2275, %v2158, 0
      %v2415 = vsel %vm2275, %v2159, 0
      %v2418 = vsel %vm2275, %v2160, 0
      %v2421 = vsel %vm2275, %v2161, 0
      %v2424 = vsel %vm2275, %v2162, 0
      %v2427 = vsel %vm2275, %v2163, 0
      %2429 = vmatprep.subr.mxu0 0.0
      %2430 = vmatpush1.msra.mxu0 %v2164
      %2431 = vmatprep.subr.mxu0 0.0
      %2432 = vmatpush1.msra.mxu0 %v2165
      %2433 = vmatprep.subr.mxu0 0.0
      %2434 = vmatpush1.msra.mxu0 %v2166
      %2435 = vmatprep.subr.mxu0 0.0
      %2436 = vmatpush1.msra.mxu0 0.0
      %2437 = vmatprep.subr.mxu0 0.0
      %2438 = vmatpush1.msra.mxu0 0.0
      %2439 = vmatprep.subr.mxu0 0.0
      %2440 = vmatpush1.msra.mxu0 0.0
      %2441 = vmatprep.subr.mxu0 0.0
      %2442 = vmatpush1.msra.mxu0 0.0
      %2443 = vmatprep.subr.mxu0 0.0
      %2444 = vmatpush1.msra.mxu0 0.0
      %2445 = vmatprep.subr.mxu0 0.0
      %2446 = vmatpush1.msra.mxu0 0.0
      %2447 = vmatprep.subr.mxu0 0.0
      %2448 = vmatpush1.msra.mxu0 0.0
      %2449 = vmatprep.subr.mxu0 0.0
      %2450 = vmatpush1.msra.mxu0 0.0
      %2451 = vmatprep.subr.mxu0 0.0
      %2452 = vmatpush1.msra.mxu0 0.0
      %2453 = vmatprep.subr.mxu0 0.0
      %2454 = vmatpush1.msra.mxu0 0.0
      %2455 = vmatprep.subr.mxu0 0.0
      %2456 = vmatpush1.msra.mxu0 0.0
      %2457 = vmatprep.subr.mxu0 0.0
      %2458 = vmatpush1.msra.mxu0 0.0
      %2459 = vmatprep.subr.mxu0 0.0
      %2460 = vmatpush1.msra.mxu0 0.0
      %2461 = vmatprep.subr.mxu0 0.0
      %2462 = vmatpush1.msra.mxu0 0.0
      %2463 = vmatprep.subr.mxu0 0.0
      %2464 = vmatpush1.msra.mxu0 0.0
      %2465 = vmatprep.subr.mxu0 0.0
      %2466 = vmatpush1.msra.mxu0 0.0
      %2467 = vmatprep.subr.mxu0 0.0
      %2468 = vmatpush1.msra.mxu0 0.0
      %2469 = vmatprep.subr.mxu0 0.0
      %2470 = vmatpush1.msra.mxu0 0.0
      %2471 = vmatprep.subr.mxu0 0.0
      %2472 = vmatpush1.msra.mxu0 0.0
      %2473 = vmatprep.subr.mxu0 0.0
      %2474 = vmatpush1.msra.mxu0 0.0
      %2475 = vmatprep.subr.mxu0 0.0
      %2476 = vmatpush1.msra.mxu0 0.0
      %2477 = vmatprep.subr.mxu0 0.0
      %2478 = vmatpush1.msra.mxu0 0.0
      %2479 = vmatprep.subr.mxu0 0.0
      %2480 = vmatpush1.msra.mxu0 0.0
      %2481 = vmatprep.subr.mxu0 0.0
      %2482 = vmatpush1.msra.mxu0 0.0
      %2483 = vmatprep.subr.mxu0 0.0
      %2484 = vmatpush1.msra.mxu0 0.0
      %2485 = vmatprep.subr.mxu0 0.0
      %2486 = vmatpush1.msra.mxu0 0.0
      %2487 = vmatprep.subr.mxu0 0.0
      %2488 = vmatpush1.msra.mxu0 0.0
      %2489 = vmatprep.subr.mxu0 0.0
      %2490 = vmatpush1.msra.mxu0 0.0
      %2491 = vmatprep.subr.mxu0 0.0
      %2492 = vmatpush1.msra.mxu0 0.0
      %2493 = vmatprep.mubr.f32.mxu0 0.0
      %2494 = vmatmul.mubr.f32.gmra.mrb[0].mxu0 %v2406
      %v2495 = vpop.f32.mrb[0].mxu0
      %v2496 = vadd.f32 %v2367, %v2495
      %v2497 = vpop.f32.mrb[0].mxu0
      %2498 = vmatprep.mubr.f32.mxu0 0.0
      %2499 = vmatmul.mubr.f32.gmra.mrb[0].mxu0 %v2409
      %v2500 = vpop.f32.mrb[0].mxu0
      %v2501 = vadd.f32 %v2372, %v2500
      %v2502 = vpop.f32.mrb[0].mxu0
      %2503 = vmatprep.mubr.f32.mxu0 0.0
      %2504 = vmatmul.mubr.f32.gmra.mrb[0].mxu0 %v2412
      %v2505 = vpop.f32.mrb[0].mxu0
      %v2506 = vadd.f32 %v2377, %v2505
      %v2507 = vpop.f32.mrb[0].mxu0
      %2508 = vmatprep.mubr.f32.mxu0 0.0
      %2509 = vmatmul.mubr.f32.gmra.mrb[0].mxu0 %v2415
      %v2510 = vpop.f32.mrb[0].mxu0
      %v2511 = vadd.f32 %v2382, %v2510
      %v2512 = vpop.f32.mrb[0].mxu0
      %2513 = vmatprep.mubr.f32.mxu0 0.0
      %2514 = vmatmul.mubr.f32.gmra.mrb[0].mxu0 %v2418
      %v2515 = vpop.f32.mrb[0].mxu0
      %v2516 = vadd.f32 %v2387, %v2515
      %v2517 = vpop.f32.mrb[0].mxu0
      %2518 = vmatprep.mubr.f32.mxu0 0.0
      %2519 = vmatmul.mubr.f32.gmra.mrb[0].mxu0 %v2421
      %v2520 = vpop.f32.mrb[0].mxu0
      %v2521 = vadd.f32 %v2392, %v2520
      %v2522 = vpop.f32.mrb[0].mxu0
      %2523 = vmatprep.mubr.f32.mxu0 0.0
      %2524 = vmatmul.mubr.f32.gmra.mrb[0].mxu0 %v2424
      %v2525 = vpop.f32.mrb[0].mxu0
      %v2526 = vadd.f32 %v2397, %v2525
      %v2527 = vpop.f32.mrb[0].mxu0
      %2528 = vmatprep.mubr.f32.mxu0 0.0
      %2529 = vmatmul.mubr.f32.gmra.mrb[0].mxu0 %v2427
      %v2530 = vpop.f32.mrb[0].mxu0
      %v2531 = vadd.f32 %v2402, %v2530
      %v2532 = vpop.f32.mrb[0].mxu0
      %2533 = vdwg.mxu0
      %s2534 = scalar_lea.vmem [#allocation3], 32
      %v2535 = vld [vmem:[%s2534] sm:$0xff]
      %v2536 = vld [vmem:[%s2534 + $0x10] sm:$0xff]
      %v2537 = vld [vmem:[%s2534 + $0x20] sm:$0xff]
      %v2538 = vld [vmem:[%s2534 + $0x30] sm:$0xff]
      %v2539 = vld [vmem:[%s2534 + $0x40] sm:$0xff]
      %v2540 = vld [vmem:[%s2534 + $0x50] sm:$0xff]
      %v2541 = vld [vmem:[%s2534 + $0x60] sm:$0xff]
      %v2542 = vld [vmem:[%s2534 + $0x70] sm:$0xff]
      %v2543 = vld [vmem:[%s2534 + $0x1] sm:$0xff]
      %v2544 = vld [vmem:[%s2534 + $0x11] sm:$0xff]
      %v2545 = vld [vmem:[%s2534 + $0x21] sm:$0xff]
      %v2546 = vld [vmem:[%s2534 + $0x31] sm:$0xff]
      %v2547 = vld [vmem:[%s2534 + $0x41] sm:$0xff]
      %v2548 = vld [vmem:[%s2534 + $0x51] sm:$0xff]
      %v2549 = vld [vmem:[%s2534 + $0x61] sm:$0xff]
      %v2550 = vld [vmem:[%s2534 + $0x71] sm:$0xff]
      %v2551 = vld [vmem:[%s2534 + $0x2] sm:$0xff]
      %v2552 = vld [vmem:[%s2534 + $0x12] sm:$0xff]
      %v2553 = vld [vmem:[%s2534 + $0x22] sm:$0xff]
      %v2554 = vld [vmem:[%s2534 + $0x32] sm:$0xff]
      %v2555 = vld [vmem:[%s2534 + $0x42] sm:$0xff]
      %v2556 = vld [vmem:[%s2534 + $0x52] sm:$0xff]
      %v2557 = vld [vmem:[%s2534 + $0x62] sm:$0xff]
      %v2558 = vld [vmem:[%s2534 + $0x72] sm:$0xff]
      %2567 = vrot.lane.b32.xlu0 %v2543, 8
      %v2568 = vpop.permute.xlu0 %2567
      %2569 = vrot.lane.b32.xlu0 %v2544, 8
      %v2570 = vpop.permute.xlu0 %2569
      %2571 = vrot.lane.b32.xlu0 %v2545, 8
      %v2572 = vpop.permute.xlu0 %2571
      %2573 = vrot.lane.b32.xlu0 %v2546, 8
      %v2574 = vpop.permute.xlu0 %2573
      %2575 = vrot.lane.b32.xlu0 %v2547, 8
      %v2576 = vpop.permute.xlu0 %2575
      %2577 = vrot.lane.b32.xlu0 %v2548, 8
      %v2578 = vpop.permute.xlu0 %2577
      %2579 = vrot.lane.b32.xlu0 %v2549, 8
      %v2580 = vpop.permute.xlu0 %2579
      %2581 = vrot.lane.b32.xlu0 %v2550, 8
      %v2582 = vpop.permute.xlu0 %2581
      %2599 = vrot.lane.b32.xlu0 %v2551, 16
      %v2600 = vpop.permute.xlu0 %2599
      %2601 = vrot.lane.b32.xlu0 %v2552, 16
      %v2602 = vpop.permute.xlu0 %2601
      %2603 = vrot.lane.b32.xlu0 %v2553, 16
      %v2604 = vpop.permute.xlu0 %2603
      %2605 = vrot.lane.b32.xlu0 %v2554, 16
      %v2606 = vpop.permute.xlu0 %2605
      %2607 = vrot.lane.b32.xlu0 %v2555, 16
      %v2608 = vpop.permute.xlu0 %2607
      %2609 = vrot.lane.b32.xlu0 %v2556, 16
      %v2610 = vpop.permute.xlu0 %2609
      %2611 = vrot.lane.b32.xlu0 %v2557, 16
      %v2612 = vpop.permute.xlu0 %2611
      %2613 = vrot.lane.b32.xlu0 %v2558, 16
      %v2614 = vpop.permute.xlu0 %2613
      %v2623 = vsel %vm1353, %v2535, %v2568
      %v2624 = vsel %vm1353, %v2536, %v2570
      %v2625 = vsel %vm1353, %v2537, %v2572
      %v2626 = vsel %vm1353, %v2538, %v2574
      %v2627 = vsel %vm1353, %v2539, %v2576
      %v2628 = vsel %vm1353, %v2540, %v2578
      %v2629 = vsel %vm1353, %v2541, %v2580
      %v2630 = vsel %vm1353, %v2542, %v2582
      %v2631 = vsel %vm2155, %v2623, %v2600
      %v2632 = vsel %vm2155, %v2624, %v2602
      %v2633 = vsel %vm2155, %v2625, %v2604
      %v2634 = vsel %vm2155, %v2626, %v2606
      %v2635 = vsel %vm2155, %v2627, %v2608
      %v2636 = vsel %vm2155, %v2628, %v2610
      %v2637 = vsel %vm2155, %v2629, %v2612
      %v2638 = vsel %vm2155, %v2630, %v2614
      %s2639 = scalar_lea.vmem %s4, 48
      %v2640 = vld [vmem:[%s2639] sm:$0xff]
      %v2641 = vld [vmem:[%s2639 + $0x8] sm:$0xff]
      %v2642 = vld [vmem:[%s2639 + $0x10] sm:$0xff]
      %v2644 = vsel %vm2275, %v2631, 0
      %v2647 = vsel %vm2275, %v2632, 0
      %v2650 = vsel %vm2275, %v2633, 0
      %v2653 = vsel %vm2275, %v2634, 0
      %v2656 = vsel %vm2275, %v2635, 0
      %v2659 = vsel %vm2275, %v2636, 0
      %v2662 = vsel %vm2275, %v2637, 0
      %v2665 = vsel %vm2275, %v2638, 0
      %2667 = vmatprep.subr.mxu0 0.0
      %2668 = vmatpush1.msra.mxu0 %v2640
      %2669 = vmatprep.subr.mxu0 0.0
      %2670 = vmatpush1.msra.mxu0 %v2641
      %2671 = vmatprep.subr.mxu0 0.0
      %2672 = vmatpush1.msra.mxu0 %v2642
      %2673 = vmatprep.subr.mxu0 0.0
      %2674 = vmatpush1.msra.mxu0 0.0
      %2675 = vmatprep.subr.mxu0 0.0
      %2676 = vmatpush1.msra.mxu0 0.0
      %2677 = vmatprep.subr.mxu0 0.0
      %2678 = vmatpush1.msra.mxu0 0.0
      %2679 = vmatprep.subr.mxu0 0.0
      %2680 = vmatpush1.msra.mxu0 0.0
      %2681 = vmatprep.subr.mxu0 0.0
      %2682 = vmatpush1.msra.mxu0 0.0
      %2683 = vmatprep.subr.mxu0 0.0
      %2684 = vmatpush1.msra.mxu0 0.0
      %2685 = vmatprep.subr.mxu0 0.0
      %2686 = vmatpush1.msra.mxu0 0.0
      %2687 = vmatprep.subr.mxu0 0.0
      %2688 = vmatpush1.msra.mxu0 0.0
      %2689 = vmatprep.subr.mxu0 0.0
      %2690 = vmatpush1.msra.mxu0 0.0
      %2691 = vmatprep.subr.mxu0 0.0
      %2692 = vmatpush1.msra.mxu0 0.0
      %2693 = vmatprep.subr.mxu0 0.0
      %2694 = vmatpush1.msra.mxu0 0.0
      %2695 = vmatprep.subr.mxu0 0.0
      %2696 = vmatpush1.msra.mxu0 0.0
      %2697 = vmatprep.subr.mxu0 0.0
      %2698 = vmatpush1.msra.mxu0 0.0
      %2699 = vmatprep.subr.mxu0 0.0
      %2700 = vmatpush1.msra.mxu0 0.0
      %2701 = vmatprep.subr.mxu0 0.0
      %2702 = vmatpush1.msra.mxu0 0.0
      %2703 = vmatprep.subr.mxu0 0.0
      %2704 = vmatpush1.msra.mxu0 0.0
      %2705 = vmatprep.subr.mxu0 0.0
      %2706 = vmatpush1.msra.mxu0 0.0
      %2707 = vmatprep.subr.mxu0 0.0
      %2708 = vmatpush1.msra.mxu0 0.0
      %2709 = vmatprep.subr.mxu0 0.0
      %2710 = vmatpush1.msra.mxu0 0.0
      %2711 = vmatprep.subr.mxu0 0.0
      %2712 = vmatpush1.msra.mxu0 0.0
      %2713 = vmatprep.subr.mxu0 0.0
      %2714 = vmatpush1.msra.mxu0 0.0
      %2715 = vmatprep.subr.mxu0 0.0
      %2716 = vmatpush1.msra.mxu0 0.0
      %2717 = vmatprep.subr.mxu0 0.0
      %2718 = vmatpush1.msra.mxu0 0.0
      %2719 = vmatprep.subr.mxu0 0.0
      %2720 = vmatpush1.msra.mxu0 0.0
      %2721 = vmatprep.subr.mxu0 0.0
      %2722 = vmatpush1.msra.mxu0 0.0
      %2723 = vmatprep.subr.mxu0 0.0
      %2724 = vmatpush1.msra.mxu0 0.0
      %2725 = vmatprep.subr.mxu0 0.0
      %2726 = vmatpush1.msra.mxu0 0.0
      %2727 = vmatprep.subr.mxu0 0.0
      %2728 = vmatpush1.msra.mxu0 0.0
      %2729 = vmatprep.subr.mxu0 0.0
      %2730 = vmatpush1.msra.mxu0 0.0
      %2731 = vmatprep.mubr.f32.mxu0 0.0
      %2732 = vmatmul.mubr.f32.gmra.mrb[0].mxu0 %v2644
      %v2733 = vpop.f32.mrb[0].mxu0
      %v2734 = vadd.f32 0.0, %v2733
      %v2735 = vpop.f32.mrb[0].mxu0
      %2736 = vmatprep.mubr.f32.mxu0 0.0
      %2737 = vmatmul.mubr.f32.gmra.mrb[0].mxu0 %v2647
      %v2738 = vpop.f32.mrb[0].mxu0
      %v2739 = vadd.f32 0.0, %v2738
      %v2740 = vpop.f32.mrb[0].mxu0
      %2741 = vmatprep.mubr.f32.mxu0 0.0
      %2742 = vmatmul.mubr.f32.gmra.mrb[0].mxu0 %v2650
      %v2743 = vpop.f32.mrb[0].mxu0
      %v2744 = vadd.f32 0.0, %v2743
      %v2745 = vpop.f32.mrb[0].mxu0
      %2746 = vmatprep.mubr.f32.mxu0 0.0
      %2747 = vmatmul.mubr.f32.gmra.mrb[0].mxu0 %v2653
      %v2748 = vpop.f32.mrb[0].mxu0
      %v2749 = vadd.f32 0.0, %v2748
      %v2750 = vpop.f32.mrb[0].mxu0
      %2751 = vmatprep.mubr.f32.mxu0 0.0
      %2752 = vmatmul.mubr.f32.gmra.mrb[0].mxu0 %v2656
      %v2753 = vpop.f32.mrb[0].mxu0
      %v2754 = vadd.f32 0.0, %v2753
      %v2755 = vpop.f32.mrb[0].mxu0
      %2756 = vmatprep.mubr.f32.mxu0 0.0
      %2757 = vmatmul.mubr.f32.gmra.mrb[0].mxu0 %v2659
      %v2758 = vpop.f32.mrb[0].mxu0
      %v2759 = vadd.f32 0.0, %v2758
      %v2760 = vpop.f32.mrb[0].mxu0
      %2761 = vmatprep.mubr.f32.mxu0 0.0
      %2762 = vmatmul.mubr.f32.gmra.mrb[0].mxu0 %v2662
      %v2763 = vpop.f32.mrb[0].mxu0
      %v2764 = vadd.f32 0.0, %v2763
      %v2765 = vpop.f32.mrb[0].mxu0
      %2766 = vmatprep.mubr.f32.mxu0 0.0
      %2767 = vmatmul.mubr.f32.gmra.mrb[0].mxu0 %v2665
      %v2768 = vpop.f32.mrb[0].mxu0
      %v2769 = vadd.f32 0.0, %v2768
      %v2770 = vpop.f32.mrb[0].mxu0
      %2771 = vdwg.mxu0
      %v2772 = vadd.f32 %v2496, %v2734
      %v2773 = vadd.f32 %v2501, %v2739
      %v2774 = vadd.f32 %v2506, %v2744
      %v2775 = vadd.f32 %v2511, %v2749
      %v2776 = vadd.f32 %v2516, %v2754
      %v2777 = vadd.f32 %v2521, %v2759
      %v2778 = vadd.f32 %v2526, %v2764
      %v2779 = vadd.f32 %v2531, %v2769
      %v2780 = vld [vmem:[%s5] sm:$0x1]
      %v2782 = vlaneseq
      %v2783 = vshrl.u32 %v2782, 7
      %v2784 = vsub.s32 0, %v2783
      %v2785 = vrot.slane %v2780, %v2784
      %v2787 = vmul.f32 %v2772, %v2785
      %v2788 = vmul.f32 %v2773, %v2785
      %v2789 = vmul.f32 %v2774, %v2785
      %v2790 = vmul.f32 %v2775, %v2785
      %v2791 = vmul.f32 %v2776, %v2785
      %v2792 = vmul.f32 %v2777, %v2785
      %v2793 = vmul.f32 %v2778, %v2785
      %v2794 = vmul.f32 %v2779, %v2785
      %v2795 = vld [vmem:[%s6] sm:$0x1]
      %v2797 = vlaneseq
      %v2798 = vshrl.u32 %v2797, 7
      %v2799 = vsub.s32 0, %v2798
      %v2800 = vrot.slane %v2795, %v2799
      %v2802 = vadd.f32 %v2787, %v2800
      %v2803 = vadd.f32 %v2788, %v2800
      %v2804 = vadd.f32 %v2789, %v2800
      %v2805 = vadd.f32 %v2790, %v2800
      %v2806 = vadd.f32 %v2791, %v2800
      %v2807 = vadd.f32 %v2792, %v2800
      %v2808 = vadd.f32 %v2793, %v2800
      %v2809 = vadd.f32 %v2794, %v2800
      %v2810 = vmax.f32 %v2802, 0.0
      %v2811 = vmax.f32 %v2803, 0.0
      %v2812 = vmax.f32 %v2804, 0.0
      %v2813 = vmax.f32 %v2805, 0.0
      %v2814 = vmax.f32 %v2806, 0.0
      %v2815 = vmax.f32 %v2807, 0.0
      %v2816 = vmax.f32 %v2808, 0.0
      %v2817 = vmax.f32 %v2809, 0.0
      %2818 = vst.msk [vmem:[%s278] sm:$0xff] %vm1353, %v2810
      %2819 = vst.msk [vmem:[%s278 + $0x8] sm:$0xff] %vm1353, %v2811
      %2820 = vst.msk [vmem:[%s278 + $0x10] sm:$0xff] %vm1353, %v2812
      %2821 = vst.msk [vmem:[%s278 + $0x18] sm:$0xff] %vm1353, %v2813
      %2822 = vst.msk [vmem:[%s278 + $0x20] sm:$0xff] %vm1353, %v2814
      %2823 = vst.msk [vmem:[%s278 + $0x28] sm:$0xff] %vm1353, %v2815
      %2824 = vst.msk [vmem:[%s278 + $0x30] sm:$0xff] %vm1353, %v2816
      %2825 = vst.msk [vmem:[%s278 + $0x38] sm:$0xff] %vm1353, %v2817
      %s2826 = smul.u32 8, %s18
      %p2827 = scmp.lt.s32.totalorder %s2826, 15
      %s2828 = scalar_select %p2827, %s2826, 15
      %s2829 = smul.addr %s2828, 8
      %s2830 = scalar_lea.vmem %s7, %s2829
      // Predicated region
      $region49: #{tpu_custom_call.1} parent=47 // pred_check
        %p2831 = pneg %p188
      $region50: #{tpu_custom_call.1} parent=47 // pred_check_branch
        %2833 = sbr.rel (%p2831) target = $region52
      $region51: #{tpu_custom_call.1} parent=47 // pred_region
        %s2834 = smul.u32 8, %s18
      $region52: #{tpu_custom_call.1} parent=47 // pred_fallthru
        _
    $region48: #{tpu_custom_call.1} parent=5 // pred_fallthru
      _
    %p2835 = scmp.le.s32.totalorder 2, %s13
    // Predicated region
    $region53: #{tpu_custom_call.1} parent=5 // pred_check
      %p2836 = pneg %p2835
    $region54: #{tpu_custom_call.1} parent=5 // pred_check_branch
      %2838 = sbr.rel (%p2836) target = $region56
    $region55: #{tpu_custom_call.1} parent=5 // pred_region
      %s2839 = ssub.s32 %s13, 2
      // Predicated region
      $region57: #{tpu_custom_call.1} parent=55 // pred_check
        %p2840 = pneg %p194
      $region58: #{tpu_custom_call.1} parent=55 // pred_check_branch
        %2842 = sbr.rel (%p2840) target = $region60
      $region59: #{tpu_custom_call.1} parent=55 // pred_region
        %s2843 = smul.u32 8, %s19
        %p2844 = scmp.lt.s32.totalorder %s2843, 15
        %s2845 = scalar_select %p2844, %s2843, 15
        %s2846 = smul.addr %s2845, 8
        %s2847 = scalar_lea.vmem %s7, %s2846
      $region60: #{tpu_custom_call.1} parent=55 // pred_fallthru
        _
    $region56: #{tpu_custom_call.1} parent=5 // pred_fallthru
      _
  $region6: #{tpu_custom_call.1} parent=0 // loop_footer
    %s17 = sadd.s32 1, %s13
  $region7: #{tpu_custom_call.1} parent=0 // loop_footer_branch
    %12 = sbr.rel target = $region3
  $region8: #{tpu_custom_call.1} parent=0 // loop_exit
    _

// kernel: tpu_custom_call.1
$region0: #{tpu_custom_call.1}
  #allocation0 [shape = 'u32[]', space=smem, size = 0x4, offset = 0x4, fixed_abs, tag = 'smem constant byte address 0x4 - core index']
  #allocation1 [shape = 'u32[144,128]{1,0:T(1,128)}', space=vmem, size = 0x12000, scoped, tag = 'internal scratch']
  #allocation2 [shape = 'f32[1,10,10,4]{3,2,1,0:T(8,128)}', space=vmem, size = 0x14000, scoped, tag = 'scratch operand']
  #allocation3 [shape = 'f32[1,10,10,8]{3,2,1,0:T(8,128)}', space=vmem, size = 0x14000, scoped, tag = 'scratch operand']
  %s0 = inlined_call_operand.vmem [shape: f32[2,16,64], index: 0, kind: input, shape index: {}]
  %s1 = inlined_call_operand.vmem [shape: f32[3,12,8], index: 1, kind: input, shape index: {}]
  %s2 = inlined_call_operand.vmem [shape: f32[1,8], index: 2, kind: input, shape index: {}]
  %s3 = inlined_call_operand.vmem [shape: f32[1,8], index: 3, kind: input, shape index: {}]
  %s4 = inlined_call_operand.vmem [shape: f32[3,24,8], index: 4, kind: input, shape index: {}]
  %s5 = inlined_call_operand.vmem [shape: f32[1,8], index: 5, kind: input, shape index: {}]
  %s6 = inlined_call_operand.vmem [shape: f32[1,8], index: 6, kind: input, shape index: {}]
  %s7 = inlined_call_operand.vmem [shape: f32[128,8], index: 7, kind: output, shape index: {}]
  %s8 = sld [smem:[#allocation0]]
  $region61: #{tpu_custom_call.1} parent=0
    _
  %s10 = ssub.s32 1, %s8
  %s11 = scalar_select 0, %s10, %s8
  loop: start=0, step=1, limit=4
  $region2: #{tpu_custom_call.1} parent=0 // loop_pre_header
    _
  $region3: #{tpu_custom_call.1} parent=0 // loop_header
    %s13 = sphi 0, %s17
    %p14 = scmp.ge.s32.totalorder %s13, 4
    %s23 = sphi 0, %s25
    %s26 = sphi 0, %s23
    %s27 = sphi 0, %s26
    %s43 = sphi 0, %s27
    %s47 = sphi 0, %s47
    %s49 = sphi 0, %s47
    %s50 = sphi 0, %s49
    %s64 = sphi 0, %s50
    %s68 = sphi 0, %s68
    %s70 = sphi 0, %s68
    %s71 = sphi 0, %s70
    %s85 = sphi 0, %s71
    %s89 = sphi 0, %s89
    %s91 = sphi 0, %s89
    %s92 = sphi 0, %s91
    %s106 = sphi 0, %s92
    %s110 = sphi 0, %s110
    %s112 = sphi 0, %s110
    %s113 = sphi 0, %s112
    %s127 = sphi 0, %s113
    %s131 = sphi 0, %s131
    %s133 = sphi 0, %s131
    %s134 = sphi 0, %s133
    %s148 = sphi 0, %s134
    %s152 = sphi 0, %s152
    %s154 = sphi 0, %s152
    %s155 = sphi 0, %s154
    %s169 = sphi 0, %s155
    %s175 = sphi 0, %s177
    %s178 = sphi 0, %s175
    %s179 = sphi 0, %s178
    %s195 = sphi 0, %s179
  $region4: #{tpu_custom_call.1} parent=0 // loop_header_branch
    %16 = sbr.rel (%p14) target = $region8
  $region5: #{tpu_custom_call.1} parent=0 // loop_body
    %s18 = ssub.s32 %s13, 1
    %s19 = ssub.s32 %s13, 2
    %s20 = sadd.s32 %s13, 1
    %s21 = ssub.s32 %s13, %s20
    %p22 = scmp.eq.s32.totalorder %s21, 0
    %s24 = sadd.s32 %s23, 1
    %s25 = scalar_select %p22, %s23, %s24
    %p28 = pneg %p22
    %p29 = scmp.eq.s32.totalorder %s13, 1
    %p30 = por %p28, %p29
    %p31 = scmp.ne.s32.totalorder %s23, %s26
    %p32 = scmp.eq.s32.totalorder %s13, 0
    %p33 = por %p31, %p32
    %p34 = scmp.ne.s32.totalorder %s23, %s26
    %p35 = scmp.eq.s32.totalorder %s18, 1
    %p36 = por %p34, %p35
    %p37 = scmp.ne.s32.totalorder %s26, %s27
    %p38 = scmp.eq.s32.totalorder %s18, 0
    %p39 = por %p37, %p38
    %p40 = scmp.ne.s32.totalorder %s26, %s27
    %p41 = scmp.eq.s32.totalorder %s19, 1
    %p42 = por %p40, %p41
    %p44 = scmp.ne.s32.totalorder %s27, %s43
    %p45 = scmp.eq.s32.totalorder %s19, 0
    %p46 = por %p44, %p45
    %s48 = sadd.s32 %s47, 1
    %p51 = scmp.eq.s32.totalorder %s13, 1
    %p52 = scmp.ne.s32.totalorder %s47, %s49
    %p53 = scmp.eq.s32.totalorder %s13, 0
    %p54 = por %p52, %p53
    %p55 = scmp.ne.s32.totalorder %s47, %s49
    %p56 = scmp.eq.s32.totalorder %s18, 1
    %p57 = por %p55, %p56
    %p58 = scmp.ne.s32.totalorder %s49, %s50
    %p59 = scmp.eq.s32.totalorder %s18, 0
    %p60 = por %p58, %p59
    %p61 = scmp.ne.s32.totalorder %s49, %s50
    %p62 = scmp.eq.s32.totalorder %s19, 1
    %p63 = por %p61, %p62
    %p65 = scmp.ne.s32.totalorder %s50, %s64
    %p66 = scmp.eq.s32.totalorder %s19, 0
    %p67 = por %p65, %p66
    %s69 = sadd.s32 %s68, 1
    %p72 = scmp.eq.s32.totalorder %s13, 1
    %p73 = scmp.ne.s32.totalorder %s68, %s70
    %p74 = scmp.eq.s32.totalorder %s13, 0
    %p75 = por %p73, %p74
    %p76 = scmp.ne.s32.totalorder %s68, %s70
    %p77 = scmp.eq.s32.totalorder %s18, 1
    %p78 = por %p76, %p77
    %p79 = scmp.ne.s32.totalorder %s70, %s71
    %p80 = scmp.eq.s32.totalorder %s18, 0
    %p81 = por %p79, %p80
    %p82 = scmp.ne.s32.totalorder %s70, %s71
    %p83 = scmp.eq.s32.totalorder %s19, 1
    %p84 = por %p82, %p83
    %p86 = scmp.ne.s32.totalorder %s71, %s85
    %p87 = scmp.eq.s32.totalorder %s19, 0
    %p88 = por %p86, %p87
    %s90 = sadd.s32 %s89, 1
    %p93 = scmp.eq.s32.totalorder %s13, 1
    %p94 = scmp.ne.s32.totalorder %s89, %s91
    %p95 = scmp.eq.s32.totalorder %s13, 0
    %p96 = por %p94, %p95
    %p97 = scmp.ne.s32.totalorder %s89, %s91
    %p98 = scmp.eq.s32.totalorder %s18, 1
    %p99 = por %p97, %p98
    %p100 = scmp.ne.s32.totalorder %s91, %s92
    %p101 = scmp.eq.s32.totalorder %s18, 0
    %p102 = por %p100, %p101
    %p103 = scmp.ne.s32.totalorder %s91, %s92
    %p104 = scmp.eq.s32.totalorder %s19, 1
    %p105 = por %p103, %p104
    %p107 = scmp.ne.s32.totalorder %s92, %s106
    %p108 = scmp.eq.s32.totalorder %s19, 0
    %p109 = por %p107, %p108
    %s111 = sadd.s32 %s110, 1
    %p114 = scmp.eq.s32.totalorder %s13, 1
    %p115 = scmp.ne.s32.totalorder %s110, %s112
    %p116 = scmp.eq.s32.totalorder %s13, 0
    %p117 = por %p115, %p116
    %p118 = scmp.ne.s32.totalorder %s110, %s112
    %p119 = scmp.eq.s32.totalorder %s18, 1
    %p120 = por %p118, %p119
    %p121 = scmp.ne.s32.totalorder %s112, %s113
    %p122 = scmp.eq.s32.totalorder %s18, 0
    %p123 = por %p121, %p122
    %p124 = scmp.ne.s32.totalorder %s112, %s113
    %p125 = scmp.eq.s32.totalorder %s19, 1
    %p126 = por %p124, %p125
    %p128 = scmp.ne.s32.totalorder %s113, %s127
    %p129 = scmp.eq.s32.totalorder %s19, 0
    %p130 = por %p128, %p129
    %s132 = sadd.s32 %s131, 1
    %p135 = scmp.eq.s32.totalorder %s13, 1
    %p136 = scmp.ne.s32.totalorder %s131, %s133
    %p137 = scmp.eq.s32.totalorder %s13, 0
    %p138 = por %p136, %p137
    %p139 = scmp.ne.s32.totalorder %s131, %s133
    %p140 = scmp.eq.s32.totalorder %s18, 1
    %p141 = por %p139, %p140
    %p142 = scmp.ne.s32.totalorder %s133, %s134
    %p143 = scmp.eq.s32.totalorder %s18, 0
    %p144 = por %p142, %p143
    %p145 = scmp.ne.s32.totalorder %s133, %s134
    %p146 = scmp.eq.s32.totalorder %s19, 1
    %p147 = por %p145, %p146
    %p149 = scmp.ne.s32.totalorder %s134, %s148
    %p150 = scmp.eq.s32.totalorder %s19, 0
    %p151 = por %p149, %p150
    %s153 = sadd.s32 %s152, 1
    %p156 = scmp.eq.s32.totalorder %s13, 1
    %p157 = scmp.ne.s32.totalorder %s152, %s154
    %p158 = scmp.eq.s32.totalorder %s13, 0
    %p159 = por %p157, %p158
    %p160 = scmp.ne.s32.totalorder %s152, %s154
    %p161 = scmp.eq.s32.totalorder %s18, 1
    %p162 = por %p160, %p161
    %p163 = scmp.ne.s32.totalorder %s154, %s155
    %p164 = scmp.eq.s32.totalorder %s18, 0
    %p165 = por %p163, %p164
    %p166 = scmp.ne.s32.totalorder %s154, %s155
    %p167 = scmp.eq.s32.totalorder %s19, 1
    %p168 = por %p166, %p167
    %p170 = scmp.ne.s32.totalorder %s155, %s169
    %p171 = scmp.eq.s32.totalorder %s19, 0
    %p172 = por %p170, %p171
    %s173 = ssub.s32 %s13, %s20
    %p174 = scmp.eq.s32.totalorder %s173, 0
    %s176 = sadd.s32 %s175, 1
    %s177 = scalar_select %p174, %s175, %s176
    %p180 = pneg %p174
    %p181 = scmp.eq.s32.totalorder %s13, 1
    %p182 = por %p180, %p181
    %p183 = scmp.ne.s32.totalorder %s175, %s178
    %p184 = scmp.eq.s32.totalorder %s13, 0
    %p185 = por %p183, %p184
    %p186 = scmp.ne.s32.totalorder %s175, %s178
    %p187 = scmp.eq.s32.totalorder %s18, 1
    %p188 = por %p186, %p187
    %p189 = scmp.ne.s32.totalorder %s178, %s179
    %p190 = scmp.eq.s32.totalorder %s18, 0
    %p191 = por %p189, %p190
    %p192 = scmp.ne.s32.totalorder %s178, %s179
    %p193 = scmp.eq.s32.totalorder %s19, 1
    %p194 = por %p192, %p193
    %p196 = scmp.ne.s32.totalorder %s179, %s195
    %p197 = scmp.eq.s32.totalorder %s19, 0
    %p198 = por %p196, %p197
    %p199 = scmp.le.s32.totalorder 1, %s13
    %p200 = scmp.lt.s32.totalorder %s13, 3
    %p201 = pnand %p199, %p200
    %p202 = pneg %p201
    // Predicated region
    $region9: #{tpu_custom_call.1} parent=5 // pred_check
      _
    $region10: #{tpu_custom_call.1} parent=5 // pred_check_branch
      %204 = sbr.rel (%p201) target = $region12
    $region11: #{tpu_custom_call.1} parent=5 // pred_region
      %s205 = ssub.s32 %s13, 1
      // Predicated region
      $region13: #{tpu_custom_call.1} parent=11 // pred_check
        %p206 = pneg %p60
      $region14: #{tpu_custom_call.1} parent=11 // pred_check_branch
        %208 = sbr.rel (%p206) target = $region16
      $region15: #{tpu_custom_call.1} parent=11 // pred_region
        _
      $region16: #{tpu_custom_call.1} parent=11 // pred_fallthru
        _
      // Predicated region
      $region17: #{tpu_custom_call.1} parent=11 // pred_check
        %p209 = pneg %p81
      $region18: #{tpu_custom_call.1} parent=11 // pred_check_branch
        %211 = sbr.rel (%p209) target = $region20
      $region19: #{tpu_custom_call.1} parent=11 // pred_region
        _
      $region20: #{tpu_custom_call.1} parent=11 // pred_fallthru
        _
      // Predicated region
      $region21: #{tpu_custom_call.1} parent=11 // pred_check
        %p212 = pneg %p102
      $region22: #{tpu_custom_call.1} parent=11 // pred_check_branch
        %214 = sbr.rel (%p212) target = $region24
      $region23: #{tpu_custom_call.1} parent=11 // pred_region
        _
      $region24: #{tpu_custom_call.1} parent=11 // pred_fallthru
        _
      // Predicated region
      $region25: #{tpu_custom_call.1} parent=11 // pred_check
        %p215 = pneg %p123
      $region26: #{tpu_custom_call.1} parent=11 // pred_check_branch
        %217 = sbr.rel (%p215) target = $region28
      $region27: #{tpu_custom_call.1} parent=11 // pred_region
        _
      $region28: #{tpu_custom_call.1} parent=11 // pred_fallthru
        _
      // Predicated region
      $region29: #{tpu_custom_call.1} parent=11 // pred_check
        %p218 = pneg %p144
      $region30: #{tpu_custom_call.1} parent=11 // pred_check_branch
        %220 = sbr.rel (%p218) target = $region32
      $region31: #{tpu_custom_call.1} parent=11 // pred_region
        _
      $region32: #{tpu_custom_call.1} parent=11 // pred_fallthru
        _
      // Predicated region
      $region33: #{tpu_custom_call.1} parent=11 // pred_check
        %p221 = pneg %p165
      $region34: #{tpu_custom_call.1} parent=11 // pred_check_branch
        %223 = sbr.rel (%p221) target = $region36
      $region35: #{tpu_custom_call.1} parent=11 // pred_region
        _
      $region36: #{tpu_custom_call.1} parent=11 // pred_fallthru
        _
    $region12: #{tpu_custom_call.1} parent=5 // pred_fallthru
      _
    %p224 = scmp.lt.s32.totalorder %s13, 2
    // Predicated region
    $region37: #{tpu_custom_call.1} parent=5 // pred_check
      %p225 = pneg %p224
    $region38: #{tpu_custom_call.1} parent=5 // pred_check_branch
      %227 = sbr.rel (%p225) target = $region40
    $region39: #{tpu_custom_call.1} parent=5 // pred_region
      // Predicated region
      $region41: #{tpu_custom_call.1} parent=39 // pred_check
        %p228 = pneg %p33
      $region42: #{tpu_custom_call.1} parent=39 // pred_check_branch
        %230 = sbr.rel (%p228) target = $region44
      $region43: #{tpu_custom_call.1} parent=39 // pred_region
        %p231 = scmp.lt.s32.totalorder %s13, 1
        %s232 = scalar_select %p231, %s13, 1
        %s233 = smul.addr %s232, 2
        %s234 = smul.addr %s233, 8
        %s235 = scalar_lea.vmem %s0, %s234
      $region44: #{tpu_custom_call.1} parent=39 // pred_fallthru
        _
    $region40: #{tpu_custom_call.1} parent=5 // pred_fallthru
      _
    %p236 = scmp.le.s32.totalorder 1, %s13
    %p237 = scmp.lt.s32.totalorder %s13, 3
    %p238 = pnand %p236, %p237
    %p239 = pneg %p238
    // Predicated region
    $region45: #{tpu_custom_call.1} parent=5 // pred_check
      _
    $region46: #{tpu_custom_call.1} parent=5 // pred_check_branch
      %241 = sbr.rel (%p238) target = $region48
    $region47: #{tpu_custom_call.1} parent=5 // pred_region
      %s242 = ssub.s32 %s13, 1
      %p243 = scmp.lt.s32.totalorder %s18, 1
      %s244 = scalar_select %p243, %s18, 1
      %s245 = smul.addr %s244, 2
      %s246 = smul.addr %s245, 8
      %s247 = scalar_lea.vmem %s0, %s246
      %p248 = pneg %p39
      %p249 = pneg %p36
      %p250 = pneg %p60
      %p251 = pneg %p57
      %p252 = pneg %p81
      %p253 = pneg %p78
      %p254 = pneg %p102
      %p255 = pneg %p99
      %p256 = pneg %p123
      %p257 = pneg %p120
      %p258 = pneg %p144
      %p259 = pneg %p141
      %p260 = pneg %p165
      %p261 = pneg %p162
      %p262 = pneg %p191
      %p263 = pneg %p188
      %s264 = smul.u32 8, %s18
      %p265 = scmp.lt.s32.totalorder %s264, 15
      %s266 = scalar_select %p265, %s264, 15
      %s267 = smul.addr %s266, 8
      %s268 = scalar_lea.vmem %s7, %s267
      %p269 = scmp.lt.s32.totalorder %s18, 1
      %s270 = scalar_select %p269, %s18, 1
      %s271 = smul.addr %s270, 2
      %s272 = smul.addr %s271, 8
      %s273 = scalar_lea.vmem %s0, %s272
      %s274 = smul.u32 8, %s18
      %p275 = scmp.lt.s32.totalorder %s274, 15
      %s276 = scalar_select %p275, %s274, 15
      %s277 = smul.addr %s276, 8
      %s278 = scalar_lea.vmem %s7, %s277
      %s279 = smul.u32 8, %s18
      %v280 = vld [vmem:[%s273] sm:$0xff]
      %v281 = vld [vmem:[%s273 + $0x8] sm:$0xff]
      %v284 = vcombine.high %v280, %v280
      %v286 = vunpack.c.l.s4 1983009808
      %v287 = vunpack.c.0.s8 %v286
      %v288 = vlaneseq
      %v289 = vshrl.u32 %v288, 7
      %v290 = vsub.s32 %v287, %v289
      %v291 = vrot.slane %v280, %v290
      %v293 = vunpack.c.l.s4 1983009808
      %v294 = vunpack.c.0.s8 %v293
      %v295 = vlaneseq
      %v296 = vshrl.u32 %v295, 7
      %v297 = vsub.s32 %v294, %v296
      %v298 = vrot.slane %v284, %v297
      %v299 = vcombine.high %v291, %v291
      %v300 = vcombine.high %v298, %v298
      %v301 = vcombine.high %v281, %v281
      %v303 = vunpack.c.l.s4 1983009808
      %v304 = vunpack.c.0.s8 %v303
      %v305 = vlaneseq
      %v306 = vshrl.u32 %v305, 7
      %v307 = vsub.s32 %v304, %v306
      %v308 = vrot.slane %v281, %v307
      %v310 = vunpack.c.l.s4 1983009808
      %v311 = vunpack.c.0.s8 %v310
      %v312 = vlaneseq
      %v313 = vshrl.u32 %v312, 7
      %v314 = vsub.s32 %v311, %v313
      %v315 = vrot.slane %v301, %v314
      %v316 = vcombine.high %v308, %v308
      %v317 = vcombine.high %v315, %v315
      %v326 = vrot.slane %v291, 7
      %v327 = vrot.slane %v326, 2
      %v328 = vrot.slane %v299, 7
      %v329 = vrot.slane %v328, 2
      %v330 = vrot.slane %v298, 7
      %v331 = vrot.slane %v330, 2
      %v332 = vrot.slane %v300, 7
      %v333 = vrot.slane %v332, 2
      %v334 = vrot.slane %v308, 7
      %v335 = vrot.slane %v334, 2
      %v336 = vrot.slane %v316, 7
      %v337 = vrot.slane %v336, 2
      %v338 = vrot.slane %v315, 7
      %v339 = vrot.slane %v338, 2
      %v340 = vrot.slane %v317, 7
      %v341 = vrot.slane %v340, 2
      %v350 = vadd.f32 %v291, %v327
      %v351 = vadd.f32 %v299, %v329
      %v352 = vadd.f32 %v298, %v331
      %v353 = vadd.f32 %v300, %v333
      %v354 = vadd.f32 %v308, %v335
      %v355 = vadd.f32 %v316, %v337
      %v356 = vadd.f32 %v315, %v339
      %v357 = vadd.f32 %v317, %v341
      %366 = vrot.lane.b32.xlu0 %v350, 120
      %v367 = vpop.permute.xlu0 %366
      %368 = vrot.lane.b32.xlu0 %v351, 120
      %v369 = vpop.permute.xlu0 %368
      %370 = vrot.lane.b32.xlu0 %v352, 120
      %v371 = vpop.permute.xlu0 %370
      %372 = vrot.lane.b32.xlu0 %v353, 120
      %v373 = vpop.permute.xlu0 %372
      %374 = vrot.lane.b32.xlu0 %v354, 120
      %v375 = vpop.permute.xlu0 %374
      %376 = vrot.lane.b32.xlu0 %v355, 120
      %v377 = vpop.permute.xlu0 %376
      %378 = vrot.lane.b32.xlu0 %v356, 120
      %v379 = vpop.permute.xlu0 %378
      %380 = vrot.lane.b32.xlu0 %v357, 120
      %v381 = vpop.permute.xlu0 %380
      %382 = vrot.lane.b32.xlu0 %v350, 112
      %v383 = vpop.permute.xlu0 %382
      %384 = vrot.lane.b32.xlu0 %v351, 112
      %v385 = vpop.permute.xlu0 %384
      %386 = vrot.lane.b32.xlu0 %v352, 112
      %v387 = vpop.permute.xlu0 %386
      %388 = vrot.lane.b32.xlu0 %v353, 112
      %v389 = vpop.permute.xlu0 %388
      %390 = vrot.lane.b32.xlu0 %v354, 112
      %v391 = vpop.permute.xlu0 %390
      %392 = vrot.lane.b32.xlu0 %v355, 112
      %v393 = vpop.permute.xlu0 %392
      %394 = vrot.lane.b32.xlu0 %v356, 112
      %v395 = vpop.permute.xlu0 %394
      %396 = vrot.lane.b32.xlu0 %v357, 112
      %v397 = vpop.permute.xlu0 %396
      %398 = vrot.lane.b32.xlu0 %v350, 104
      %v399 = vpop.permute.xlu0 %398
      %400 = vrot.lane.b32.xlu0 %v351, 104
      %v401 = vpop.permute.xlu0 %400
      %402 = vrot.lane.b32.xlu0 %v352, 104
      %v403 = vpop.permute.xlu0 %402
      %404 = vrot.lane.b32.xlu0 %v353, 104
      %v405 = vpop.permute.xlu0 %404
      %406 = vrot.lane.b32.xlu0 %v354, 104
      %v407 = vpop.permute.xlu0 %406
      %408 = vrot.lane.b32.xlu0 %v355, 104
      %v409 = vpop.permute.xlu0 %408
      %410 = vrot.lane.b32.xlu0 %v356, 104
      %v411 = vpop.permute.xlu0 %410
      %412 = vrot.lane.b32.xlu0 %v357, 104
      %v413 = vpop.permute.xlu0 %412
      %414 = vrot.lane.b32.xlu0 %v350, 96
      %v415 = vpop.permute.xlu0 %414
      %416 = vrot.lane.b32.xlu0 %v351, 96
      %v417 = vpop.permute.xlu0 %416
      %418 = vrot.lane.b32.xlu0 %v352, 96
      %v419 = vpop.permute.xlu0 %418
      %420 = vrot.lane.b32.xlu0 %v353, 96
      %v421 = vpop.permute.xlu0 %420
      %422 = vrot.lane.b32.xlu0 %v354, 96
      %v423 = vpop.permute.xlu0 %422
      %424 = vrot.lane.b32.xlu0 %v355, 96
      %v425 = vpop.permute.xlu0 %424
      %426 = vrot.lane.b32.xlu0 %v356, 96
      %v427 = vpop.permute.xlu0 %426
      %428 = vrot.lane.b32.xlu0 %v357, 96
      %v429 = vpop.permute.xlu0 %428
      %430 = vrot.lane.b32.xlu0 %v350, 88
      %v431 = vpop.permute.xlu0 %430
      %432 = vrot.lane.b32.xlu0 %v351, 88
      %v433 = vpop.permute.xlu0 %432
      %434 = vrot.lane.b32.xlu0 %v352, 88
      %v435 = vpop.permute.xlu0 %434
      %436 = vrot.lane.b32.xlu0 %v353, 88
      %v437 = vpop.permute.xlu0 %436
      %438 = vrot.lane.b32.xlu0 %v354, 88
      %v439 = vpop.permute.xlu0 %438
      %440 = vrot.lane.b32.xlu0 %v355, 88
      %v441 = vpop.permute.xlu0 %440
      %442 = vrot.lane.b32.xlu0 %v356, 88
      %v443 = vpop.permute.xlu0 %442
      %444 = vrot.lane.b32.xlu0 %v357, 88
      %v445 = vpop.permute.xlu0 %444
      %446 = vrot.lane.b32.xlu0 %v350, 80
      %v447 = vpop.permute.xlu0 %446
      %448 = vrot.lane.b32.xlu0 %v351, 80
      %v449 = vpop.permute.xlu0 %448
      %450 = vrot.lane.b32.xlu0 %v352, 80
      %v451 = vpop.permute.xlu0 %450
      %452 = vrot.lane.b32.xlu0 %v353, 80
      %v453 = vpop.permute.xlu0 %452
      %454 = vrot.lane.b32.xlu0 %v354, 80
      %v455 = vpop.permute.xlu0 %454
      %456 = vrot.lane.b32.xlu0 %v355, 80
      %v457 = vpop.permute.xlu0 %456
      %458 = vrot.lane.b32.xlu0 %v356, 80
      %v459 = vpop.permute.xlu0 %458
      %460 = vrot.lane.b32.xlu0 %v357, 80
      %v461 = vpop.permute.xlu0 %460
      %462 = vrot.lane.b32.xlu0 %v350, 72
      %v463 = vpop.permute.xlu0 %462
      %464 = vrot.lane.b32.xlu0 %v351, 72
      %v465 = vpop.permute.xlu0 %464
      %466 = vrot.lane.b32.xlu0 %v352, 72
      %v467 = vpop.permute.xlu0 %466
      %468 = vrot.lane.b32.xlu0 %v353, 72
      %v469 = vpop.permute.xlu0 %468
      %470 = vrot.lane.b32.xlu0 %v354, 72
      %v471 = vpop.permute.xlu0 %470
      %472 = vrot.lane.b32.xlu0 %v355, 72
      %v473 = vpop.permute.xlu0 %472
      %474 = vrot.lane.b32.xlu0 %v356, 72
      %v475 = vpop.permute.xlu0 %474
      %476 = vrot.lane.b32.xlu0 %v357, 72
      %v477 = vpop.permute.xlu0 %476
      %vm478 = vcmask 1044484
      %v479 = vsel %vm478, %v350, %v350
      %vm480 = vcmask 1046534
      %v481 = vsel %vm480, %v350, %v479
      %v482 = vrot.slane %v351, 7
      %vm483 = vcmask 1041409
      %v484 = vsel %vm483, %v482, %v481
      %vm485 = vcmask 1043459
      %v486 = vsel %vm485, %v482, %v484
      %vm487 = vcmask 1045509
      %v488 = vsel %vm487, %v482, %v486
      %vm489 = vcmask 1047559
      %v490 = vsel %vm489, %v482, %v488
      %v491 = vsel %vm478, %v352, %v352
      %v492 = vsel %vm480, %v352, %v491
      %v493 = vrot.slane %v353, 7
      %v494 = vsel %vm483, %v493, %v492
      %v495 = vsel %vm485, %v493, %v494
      %v496 = vsel %vm487, %v493, %v495
      %v497 = vsel %vm489, %v493, %v496
      %v498 = vsel %vm478, %v354, %v354
      %v499 = vsel %vm480, %v354, %v498
      %v500 = vrot.slane %v355, 7
      %v501 = vsel %vm483, %v500, %v499
      %v502 = vsel %vm485, %v500, %v501
      %v503 = vsel %vm487, %v500, %v502
      %v504 = vsel %vm489, %v500, %v503
      %v505 = vsel %vm478, %v356, %v356
      %v506 = vsel %vm480, %v356, %v505
      %v507 = vrot.slane %v357, 7
      %v508 = vsel %vm483, %v507, %v506
      %v509 = vsel %vm485, %v507, %v508
      %v510 = vsel %vm487, %v507, %v509
      %v511 = vsel %vm489, %v507, %v510
      %v512 = vsel %vm478, %v367, %v367
      %v513 = vsel %vm480, %v367, %v512
      %v514 = vrot.slane %v369, 7
      %v515 = vsel %vm483, %v514, %v513
      %v516 = vsel %vm485, %v514, %v515
      %v517 = vsel %vm487, %v514, %v516
      %v518 = vsel %vm489, %v514, %v517
      %v519 = vsel %vm478, %v371, %v371
      %v520 = vsel %vm480, %v371, %v519
      %v521 = vrot.slane %v373, 7
      %v522 = vsel %vm483, %v521, %v520
      %v523 = vsel %vm485, %v521, %v522
      %v524 = vsel %vm487, %v521, %v523
      %v525 = vsel %vm489, %v521, %v524
      %v526 = vsel %vm478, %v375, %v375
      %v527 = vsel %vm480, %v375, %v526
      %v528 = vrot.slane %v377, 7
      %v529 = vsel %vm483, %v528, %v527
      %v530 = vsel %vm485, %v528, %v529
      %v531 = vsel %vm487, %v528, %v530
      %v532 = vsel %vm489, %v528, %v531
      %v533 = vsel %vm478, %v379, %v379
      %v534 = vsel %vm480, %v379, %v533
      %v535 = vrot.slane %v381, 7
      %v536 = vsel %vm483, %v535, %v534
      %v537 = vsel %vm485, %v535, %v536
      %v538 = vsel %vm487, %v535, %v537
      %v539 = vsel %vm489, %v535, %v538
      %v540 = vsel %vm478, %v383, %v383
      %v541 = vsel %vm480, %v383, %v540
      %v542 = vrot.slane %v385, 7
      %v543 = vsel %vm483, %v542, %v541
      %v544 = vsel %vm485, %v542, %v543
      %v545 = vsel %vm487, %v542, %v544
      %v546 = vsel %vm489, %v542, %v545
      %v547 = vsel %vm478, %v387, %v387
      %v548 = vsel %vm480, %v387, %v547
      %v549 = vrot.slane %v389, 7
      %v550 = vsel %vm483, %v549, %v548
      %v551 = vsel %vm485, %v549, %v550
      %v552 = vsel %vm487, %v549, %v551
      %v553 = vsel %vm489, %v549, %v552
      %v554 = vsel %vm478, %v391, %v391
      %v555 = vsel %vm480, %v391, %v554
      %v556 = vrot.slane %v393, 7
      %v557 = vsel %vm483, %v556, %v555
      %v558 = vsel %vm485, %v556, %v557
      %v559 = vsel %vm487, %v556, %v558
      %v560 = vsel %vm489, %v556, %v559
      %v561 = vsel %vm478, %v395, %v395
      %v562 = vsel %vm480, %v395, %v561
      %v563 = vrot.slane %v397, 7
      %v564 = vsel %vm483, %v563, %v562
      %v565 = vsel %vm485, %v563, %v564
      %v566 = vsel %vm487, %v563, %v565
      %v567 = vsel %vm489, %v563, %v566
      %v568 = vsel %vm478, %v399, %v399
      %v569 = vsel %vm480, %v399, %v568
      %v570 = vrot.slane %v401, 7
      %v571 = vsel %vm483, %v570, %v569
      %v572 = vsel %vm485, %v570, %v571
      %v573 = vsel %vm487, %v570, %v572
      %v574 = vsel %vm489, %v570, %v573
      %v575 = vsel %vm478, %v403, %v403
      %v576 = vsel %vm480, %v403, %v575
      %v577 = vrot.slane %v405, 7
      %v578 = vsel %vm483, %v577, %v576
      %v579 = vsel %vm485, %v577, %v578
      %v580 = vsel %vm487, %v577, %v579
      %v581 = vsel %vm489, %v577, %v580
      %v582 = vsel %vm478, %v407, %v407
      %v583 = vsel %vm480, %v407, %v582
      %v584 = vrot.slane %v409, 7
      %v585 = vsel %vm483, %v584, %v583
      %v586 = vsel %vm485, %v584, %v585
      %v587 = vsel %vm487, %v584, %v586
      %v588 = vsel %vm489, %v584, %v587
      %v589 = vsel %vm478, %v411, %v411
      %v590 = vsel %vm480, %v411, %v589
      %v591 = vrot.slane %v413, 7
      %v592 = vsel %vm483, %v591, %v590
      %v593 = vsel %vm485, %v591, %v592
      %v594 = vsel %vm487, %v591, %v593
      %v595 = vsel %vm489, %v591, %v594
      %v596 = vsel %vm478, %v415, %v415
      %v597 = vsel %vm480, %v415, %v596
      %v598 = vrot.slane %v417, 7
      %v599 = vsel %vm483, %v598, %v597
      %v600 = vsel %vm485, %v598, %v599
      %v601 = vsel %vm487, %v598, %v600
      %v602 = vsel %vm489, %v598, %v601
      %v603 = vsel %vm478, %v419, %v419
      %v604 = vsel %vm480, %v419, %v603
      %v605 = vrot.slane %v421, 7
      %v606 = vsel %vm483, %v605, %v604
      %v607 = vsel %vm485, %v605, %v606
      %v608 = vsel %vm487, %v605, %v607
      %v609 = vsel %vm489, %v605, %v608
      %v610 = vsel %vm478, %v423, %v423
      %v611 = vsel %vm480, %v423, %v610
      %v612 = vrot.slane %v425, 7
      %v613 = vsel %vm483, %v612, %v611
      %v614 = vsel %vm485, %v612, %v613
      %v615 = vsel %vm487, %v612, %v614
      %v616 = vsel %vm489, %v612, %v615
      %v617 = vsel %vm478, %v427, %v427
      %v618 = vsel %vm480, %v427, %v617
      %v619 = vrot.slane %v429, 7
      %v620 = vsel %vm483, %v619, %v618
      %v621 = vsel %vm485, %v619, %v620
      %v622 = vsel %vm487, %v619, %v621
      %v623 = vsel %vm489, %v619, %v622
      %v624 = vsel %vm478, %v431, %v431
      %v625 = vsel %vm480, %v431, %v624
      %v626 = vrot.slane %v433, 7
      %v627 = vsel %vm483, %v626, %v625
      %v628 = vsel %vm485, %v626, %v627
      %v629 = vsel %vm487, %v626, %v628
      %v630 = vsel %vm489, %v626, %v629
      %v631 = vsel %vm478, %v435, %v435
      %v632 = vsel %vm480, %v435, %v631
      %v633 = vrot.slane %v437, 7
      %v634 = vsel %vm483, %v633, %v632
      %v635 = vsel %vm485, %v633, %v634
      %v636 = vsel %vm487, %v633, %v635
      %v637 = vsel %vm489, %v633, %v636
      %v638 = vsel %vm478, %v439, %v439
      %v639 = vsel %vm480, %v439, %v638
      %v640 = vrot.slane %v441, 7
      %v641 = vsel %vm483, %v640, %v639
      %v642 = vsel %vm485, %v640, %v641
      %v643 = vsel %vm487, %v640, %v642
      %v644 = vsel %vm489, %v640, %v643
      %v645 = vsel %vm478, %v443, %v443
      %v646 = vsel %vm480, %v443, %v645
      %v647 = vrot.slane %v445, 7
      %v648 = vsel %vm483, %v647, %v646
      %v649 = vsel %vm485, %v647, %v648
      %v650 = vsel %vm487, %v647, %v649
      %v651 = vsel %vm489, %v647, %v650
      %v652 = vsel %vm478, %v447, %v447
      %v653 = vsel %vm480, %v447, %v652
      %v654 = vrot.slane %v449, 7
      %v655 = vsel %vm483, %v654, %v653
      %v656 = vsel %vm485, %v654, %v655
      %v657 = vsel %vm487, %v654, %v656
      %v658 = vsel %vm489, %v654, %v657
      %v659 = vsel %vm478, %v451, %v451
      %v660 = vsel %vm480, %v451, %v659
      %v661 = vrot.slane %v453, 7
      %v662 = vsel %vm483, %v661, %v660
      %v663 = vsel %vm485, %v661, %v662
      %v664 = vsel %vm487, %v661, %v663
      %v665 = vsel %vm489, %v661, %v664
      %v666 = vsel %vm478, %v455, %v455
      %v667 = vsel %vm480, %v455, %v666
      %v668 = vrot.slane %v457, 7
      %v669 = vsel %vm483, %v668, %v667
      %v670 = vsel %vm485, %v668, %v669
      %v671 = vsel %vm487, %v668, %v670
      %v672 = vsel %vm489, %v668, %v671
      %v673 = vsel %vm478, %v459, %v459
      %v674 = vsel %vm480, %v459, %v673
      %v675 = vrot.slane %v461, 7
      %v676 = vsel %vm483, %v675, %v674
      %v677 = vsel %vm485, %v675, %v676
      %v678 = vsel %vm487, %v675, %v677
      %v679 = vsel %vm489, %v675, %v678
      %v680 = vsel %vm478, %v463, %v463
      %v681 = vsel %vm480, %v463, %v680
      %v682 = vrot.slane %v465, 7
      %v683 = vsel %vm483, %v682, %v681
      %v684 = vsel %vm485, %v682, %v683
      %v685 = vsel %vm487, %v682, %v684
      %v686 = vsel %vm489, %v682, %v685
      %v687 = vsel %vm478, %v467, %v467
      %v688 = vsel %vm480, %v467, %v687
      %v689 = vrot.slane %v469, 7
      %v690 = vsel %vm483, %v689, %v688
      %v691 = vsel %vm485, %v689, %v690
      %v692 = vsel %vm487, %v689, %v691
      %v693 = vsel %vm489, %v689, %v692
      %v694 = vsel %vm478, %v471, %v471
      %v695 = vsel %vm480, %v471, %v694
      %v696 = vrot.slane %v473, 7
      %v697 = vsel %vm483, %v696, %v695
      %v698 = vsel %vm485, %v696, %v697
      %v699 = vsel %vm487, %v696, %v698
      %v700 = vsel %vm489, %v696, %v699
      %v701 = vsel %vm478, %v475, %v475
      %v702 = vsel %vm480, %v475, %v701
      %v703 = vrot.slane %v477, 7
      %v704 = vsel %vm483, %v703, %v702
      %v705 = vsel %vm485, %v703, %v704
      %v706 = vsel %vm487, %v703, %v705
      %v707 = vsel %vm489, %v703, %v706
      %v740 = vcombine.low %v490, %v518
      %v742 = vunpack.c.l.s4 1934713408
      %v743 = vunpack.c.0.s8 %v742
      %v744 = vlaneseq
      %v745 = vshrl.u32 %v744, 7
      %v746 = vsub.s32 %v743, %v745
      %v747 = vrot.slane %v740, %v746
      %v748 = vcombine.high %v747, 0.0
      %v749 = vcombine.low %v546, %v574
      %v751 = vunpack.c.l.s4 1934713408
      %v752 = vunpack.c.0.s8 %v751
      %v753 = vlaneseq
      %v754 = vshrl.u32 %v753, 7
      %v755 = vsub.s32 %v752, %v754
      %v756 = vrot.slane %v749, %v755
      %v757 = vcombine.high %v756, 0.0
      %v758 = vcombine.low %v602, %v630
      %v760 = vunpack.c.l.s4 1934713408
      %v761 = vunpack.c.0.s8 %v760
      %v762 = vlaneseq
      %v763 = vshrl.u32 %v762, 7
      %v764 = vsub.s32 %v761, %v763
      %v765 = vrot.slane %v758, %v764
      %v766 = vcombine.high %v765, 0.0
      %v767 = vcombine.low %v658, %v686
      %v769 = vunpack.c.l.s4 1934713408
      %v770 = vunpack.c.0.s8 %v769
      %v771 = vlaneseq
      %v772 = vshrl.u32 %v771, 7
      %v773 = vsub.s32 %v770, %v772
      %v774 = vrot.slane %v767, %v773
      %v775 = vcombine.high %v774, 0.0
      %v776 = vcombine.low %v497, %v525
      %v778 = vunpack.c.l.s4 1934713408
      %v779 = vunpack.c.0.s8 %v778
      %v780 = vlaneseq
      %v781 = vshrl.u32 %v780, 7
      %v782 = vsub.s32 %v779, %v781
      %v783 = vrot.slane %v776, %v782
      %v784 = vcombine.high %v783, 0.0
      %v785 = vcombine.low %v553, %v581
      %v787 = vunpack.c.l.s4 1934713408
      %v788 = vunpack.c.0.s8 %v787
      %v789 = vlaneseq
      %v790 = vshrl.u32 %v789, 7
      %v791 = vsub.s32 %v788, %v790
      %v792 = vrot.slane %v785, %v791
      %v793 = vcombine.high %v792, 0.0
      %v794 = vcombine.low %v609, %v637
      %v796 = vunpack.c.l.s4 1934713408
      %v797 = vunpack.c.0.s8 %v796
      %v798 = vlaneseq
      %v799 = vshrl.u32 %v798, 7
      %v800 = vsub.s32 %v797, %v799
      %v801 = vrot.slane %v794, %v800
      %v802 = vcombine.high %v801, 0.0
      %v803 = vcombine.low %v665, %v693
      %v805 = vunpack.c.l.s4 1934713408
      %v806 = vunpack.c.0.s8 %v805
      %v807 = vlaneseq
      %v808 = vshrl.u32 %v807, 7
      %v809 = vsub.s32 %v806, %v808
      %v810 = vrot.slane %v803, %v809
      %v811 = vcombine.high %v810, 0.0
      %v812 = vcombine.low %v504, %v532
      %v814 = vunpack.c.l.s4 1934713408
      %v815 = vunpack.c.0.s8 %v814
      %v816 = vlaneseq
      %v817 = vshrl.u32 %v816, 7
      %v818 = vsub.s32 %v815, %v817
      %v819 = vrot.slane %v812, %v818
      %v820 = vcombine.high %v819, 0.0
      %v821 = vcombine.low %v560, %v588
      %v823 = vunpack.c.l.s4 1934713408
      %v824 = vunpack.c.0.s8 %v823
      %v825 = vlaneseq
      %v826 = vshrl.u32 %v825, 7
      %v827 = vsub.s32 %v824, %v826
      %v828 = vrot.slane %v821, %v827
      %v829 = vcombine.high %v828, 0.0
      %v830 = vcombine.low %v616, %v644
      %v832 = vunpack.c.l.s4 1934713408
      %v833 = vunpack.c.0.s8 %v832
      %v834 = vlaneseq
      %v835 = vshrl.u32 %v834, 7
      %v836 = vsub.s32 %v833, %v835
      %v837 = vrot.slane %v830, %v836
      %v838 = vcombine.high %v837, 0.0
      %v839 = vcombine.low %v672, %v700
      %v841 = vunpack.c.l.s4 1934713408
      %v842 = vunpack.c.0.s8 %v841
      %v843 = vlaneseq
      %v844 = vshrl.u32 %v843, 7
      %v845 = vsub.s32 %v842, %v844
      %v846 = vrot.slane %v839, %v845
      %v847 = vcombine.high %v846, 0.0
      %v848 = vcombine.low %v511, %v539
      %v850 = vunpack.c.l.s4 1934713408
      %v851 = vunpack.c.0.s8 %v850
      %v852 = vlaneseq
      %v853 = vshrl.u32 %v852, 7
      %v854 = vsub.s32 %v851, %v853
      %v855 = vrot.slane %v848, %v854
      %v856 = vcombine.high %v855, 0.0
      %v857 = vcombine.low %v567, %v595
      %v859 = vunpack.c.l.s4 1934713408
      %v860 = vunpack.c.0.s8 %v859
      %v861 = vlaneseq
      %v862 = vshrl.u32 %v861, 7
      %v863 = vsub.s32 %v860, %v862
      %v864 = vrot.slane %v857, %v863
      %v865 = vcombine.high %v864, 0.0
      %v866 = vcombine.low %v623, %v651
      %v868 = vunpack.c.l.s4 1934713408
      %v869 = vunpack.c.0.s8 %v868
      %v870 = vlaneseq
      %v871 = vshrl.u32 %v870, 7
      %v872 = vsub.s32 %v869, %v871
      %v873 = vrot.slane %v866, %v872
      %v874 = vcombine.high %v873, 0.0
      %v875 = vcombine.low %v679, %v707
      %v877 = vunpack.c.l.s4 1934713408
      %v878 = vunpack.c.0.s8 %v877
      %v879 = vlaneseq
      %v880 = vshrl.u32 %v879, 7
      %v881 = vsub.s32 %v878, %v880
      %v882 = vrot.slane %v875, %v881
      %v883 = vcombine.high %v882, 0.0
      %916 = vrot.lane.b32.xlu0 %v747, 124
      %v917 = vpop.permute.xlu0 %916
      %918 = vrot.lane.b32.xlu0 %v756, 124
      %v919 = vpop.permute.xlu0 %918
      %920 = vrot.lane.b32.xlu0 %v765, 124
      %v921 = vpop.permute.xlu0 %920
      %922 = vrot.lane.b32.xlu0 %v774, 124
      %v923 = vpop.permute.xlu0 %922
      %924 = vrot.lane.b32.xlu0 %v748, 124
      %v925 = vpop.permute.xlu0 %924
      %926 = vrot.lane.b32.xlu0 %v757, 124
      %v927 = vpop.permute.xlu0 %926
      %928 = vrot.lane.b32.xlu0 %v766, 124
      %v929 = vpop.permute.xlu0 %928
      %930 = vrot.lane.b32.xlu0 %v775, 124
      %v931 = vpop.permute.xlu0 %930
      %932 = vrot.lane.b32.xlu0 %v783, 124
      %v933 = vpop.permute.xlu0 %932
      %934 = vrot.lane.b32.xlu0 %v792, 124
      %v935 = vpop.permute.xlu0 %934
      %936 = vrot.lane.b32.xlu0 %v801, 124
      %v937 = vpop.permute.xlu0 %936
      %938 = vrot.lane.b32.xlu0 %v810, 124
      %v939 = vpop.permute.xlu0 %938
      %940 = vrot.lane.b32.xlu0 %v784, 124
      %v941 = vpop.permute.xlu0 %940
      %942 = vrot.lane.b32.xlu0 %v793, 124
      %v943 = vpop.permute.xlu0 %942
      %944 = vrot.lane.b32.xlu0 %v802, 124
      %v945 = vpop.permute.xlu0 %944
      %946 = vrot.lane.b32.xlu0 %v811, 124
      %v947 = vpop.permute.xlu0 %946
      %948 = vrot.lane.b32.xlu0 %v819, 124
      %v949 = vpop.permute.xlu0 %948
      %950 = vrot.lane.b32.xlu0 %v828, 124
      %v951 = vpop.permute.xlu0 %950
      %952 = vrot.lane.b32.xlu0 %v837, 124
      %v953 = vpop.permute.xlu0 %952
      %954 = vrot.lane.b32.xlu0 %v846, 124
      %v955 = vpop.permute.xlu0 %954
      %956 = vrot.lane.b32.xlu0 %v820, 124
      %v957 = vpop.permute.xlu0 %956
      %958 = vrot.lane.b32.xlu0 %v829, 124
      %v959 = vpop.permute.xlu0 %958
      %960 = vrot.lane.b32.xlu0 %v838, 124
      %v961 = vpop.permute.xlu0 %960
      %962 = vrot.lane.b32.xlu0 %v847, 124
      %v963 = vpop.permute.xlu0 %962
      %964 = vrot.lane.b32.xlu0 %v855, 124
      %v965 = vpop.permute.xlu0 %964
      %966 = vrot.lane.b32.xlu0 %v864, 124
      %v967 = vpop.permute.xlu0 %966
      %968 = vrot.lane.b32.xlu0 %v873, 124
      %v969 = vpop.permute.xlu0 %968
      %970 = vrot.lane.b32.xlu0 %v882, 124
      %v971 = vpop.permute.xlu0 %970
      %972 = vrot.lane.b32.xlu0 %v856, 124
      %v973 = vpop.permute.xlu0 %972
      %974 = vrot.lane.b32.xlu0 %v865, 124
      %v975 = vpop.permute.xlu0 %974
      %976 = vrot.lane.b32.xlu0 %v874, 124
      %v977 = vpop.permute.xlu0 %976
      %978 = vrot.lane.b32.xlu0 %v883, 124
      %v979 = vpop.permute.xlu0 %978
      %v1012 = vadd.f32 %v747, %v917
      %v1013 = vadd.f32 %v756, %v919
      %v1014 = vadd.f32 %v765, %v921
      %v1015 = vadd.f32 %v774, %v923
      %v1016 = vadd.f32 %v748, %v925
      %v1017 = vadd.f32 %v757, %v927
      %v1018 = vadd.f32 %v766, %v929
      %v1019 = vadd.f32 %v775, %v931
      %v1020 = vadd.f32 %v783, %v933
      %v1021 = vadd.f32 %v792, %v935
      %v1022 = vadd.f32 %v801, %v937
      %v1023 = vadd.f32 %v810, %v939
      %v1024 = vadd.f32 %v784, %v941
      %v1025 = vadd.f32 %v793, %v943
      %v1026 = vadd.f32 %v802, %v945
      %v1027 = vadd.f32 %v811, %v947
      %v1028 = vadd.f32 %v819, %v949
      %v1029 = vadd.f32 %v828, %v951
      %v1030 = vadd.f32 %v837, %v953
      %v1031 = vadd.f32 %v846, %v955
      %v1032 = vadd.f32 %v820, %v957
      %v1033 = vadd.f32 %v829, %v959
      %v1034 = vadd.f32 %v838, %v961
      %v1035 = vadd.f32 %v847, %v963
      %v1036 = vadd.f32 %v855, %v965
      %v1037 = vadd.f32 %v864, %v967
      %v1038 = vadd.f32 %v873, %v969
      %v1039 = vadd.f32 %v882, %v971
      %v1040 = vadd.f32 %v856, %v973
      %v1041 = vadd.f32 %v865, %v975
      %v1042 = vadd.f32 %v874, %v977
      %v1043 = vadd.f32 %v883, %v979
      %vm1044 = vcmask 31744
      %1045 = vst.msk [vmem:[#allocation2] sm:$0xff] %vm1044, 0.0
      %vm1046 = vcmask 25600
      %1047 = vst.msk [vmem:[#allocation2 + $0x8] sm:$0x3] %vm1046, 0.0
      %s1048 = scalar_lea.vmem [#allocation2], 144
      %1049 = vst.msk [vmem:[%s1048] sm:$0xff] %vm1044, 0.0
      %1050 = vst.msk [vmem:[%s1048 + $0x8] sm:$0x3] %vm1046, 0.0
      %vm1051 = vcmask 24576
      %1052 = vst.msk [vmem:[#allocation2] sm:$0x1] %vm1051, 0.0
      %1053 = vst.msk [vmem:[#allocation2 + $0x10] sm:$0x1] %vm1051, 0.0
      %1054 = vst.msk [vmem:[#allocation2 + $0x20] sm:$0x1] %vm1051, 0.0
      %1055 = vst.msk [vmem:[#allocation2 + $0x30] sm:$0x1] %vm1051, 0.0
      %1056 = vst.msk [vmem:[#allocation2 + $0x40] sm:$0x1] %vm1051, 0.0
      %1057 = vst.msk [vmem:[#allocation2 + $0x50] sm:$0x1] %vm1051, 0.0
      %1058 = vst.msk [vmem:[#allocation2 + $0x60] sm:$0x1] %vm1051, 0.0
      %1059 = vst.msk [vmem:[#allocation2 + $0x70] sm:$0x1] %vm1051, 0.0
      %1060 = vst.msk [vmem:[#allocation2 + $0x80] sm:$0x1] %vm1051, 0.0
      %1061 = vst.msk [vmem:[#allocation2 + $0x90] sm:$0x1] %vm1051, 0.0
      %1062 = vst.msk [vmem:[#allocation2 + $0x9] sm:$0x1] %vm1051, 0.0
      %1063 = vst.msk [vmem:[#allocation2 + $0x19] sm:$0x1] %vm1051, 0.0
      %1064 = vst.msk [vmem:[#allocation2 + $0x29] sm:$0x1] %vm1051, 0.0
      %1065 = vst.msk [vmem:[#allocation2 + $0x39] sm:$0x1] %vm1051, 0.0
      %1066 = vst.msk [vmem:[#allocation2 + $0x49] sm:$0x1] %vm1051, 0.0
      %1067 = vst.msk [vmem:[#allocation2 + $0x59] sm:$0x1] %vm1051, 0.0
      %1068 = vst.msk [vmem:[#allocation2 + $0x69] sm:$0x1] %vm1051, 0.0
      %1069 = vst.msk [vmem:[#allocation2 + $0x79] sm:$0x1] %vm1051, 0.0
      %1070 = vst.msk [vmem:[#allocation2 + $0x89] sm:$0x1] %vm1051, 0.0
      %1071 = vst.msk [vmem:[#allocation2 + $0x99] sm:$0x1] %vm1051, 0.0
      %v1104 = vcombine.low %v1012, %v1013
      %v1105 = vcombine.low %v1014, %v1015
      %v1107 = vunpack.c.l.s4 1983009808
      %v1108 = vunpack.c.0.s8 %v1107
      %v1109 = vlaneseq
      %v1110 = vshrl.u32 %v1109, 7
      %v1111 = vsub.s32 %v1108, %v1110
      %v1112 = vrot.slane %v1104, %v1111
      %v1114 = vunpack.c.l.s4 1983009808
      %v1115 = vunpack.c.0.s8 %v1114
      %v1116 = vlaneseq
      %v1117 = vshrl.u32 %v1116, 7
      %v1118 = vsub.s32 %v1115, %v1117
      %v1119 = vrot.slane %v1105, %v1118
      %v1120 = vcombine.low %v1112, %v1119
      %v1121 = vcombine.low %v1016, %v1017
      %v1122 = vcombine.low %v1018, %v1019
      %v1124 = vunpack.c.l.s4 1983009808
      %v1125 = vunpack.c.0.s8 %v1124
      %v1126 = vlaneseq
      %v1127 = vshrl.u32 %v1126, 7
      %v1128 = vsub.s32 %v1125, %v1127
      %v1129 = vrot.slane %v1121, %v1128
      %v1131 = vunpack.c.l.s4 1983009808
      %v1132 = vunpack.c.0.s8 %v1131
      %v1133 = vlaneseq
      %v1134 = vshrl.u32 %v1133, 7
      %v1135 = vsub.s32 %v1132, %v1134
      %v1136 = vrot.slane %v1122, %v1135
      %v1137 = vcombine.low %v1129, %v1136
      %v1138 = vcombine.low %v1020, %v1021
      %v1139 = vcombine.low %v1022, %v1023
      %v1141 = vunpack.c.l.s4 1983009808
      %v1142 = vunpack.c.0.s8 %v1141
      %v1143 = vlaneseq
      %v1144 = vshrl.u32 %v1143, 7
      %v1145 = vsub.s32 %v1142, %v1144
      %v1146 = vrot.slane %v1138, %v1145
      %v1148 = vunpack.c.l.s4 1983009808
      %v1149 = vunpack.c.0.s8 %v1148
      %v1150 = vlaneseq
      %v1151 = vshrl.u32 %v1150, 7
      %v1152 = vsub.s32 %v1149, %v1151
      %v1153 = vrot.slane %v1139, %v1152
      %v1154 = vcombine.low %v1146, %v1153
      %v1155 = vcombine.low %v1024, %v1025
      %v1156 = vcombine.low %v1026, %v1027
      %v1158 = vunpack.c.l.s4 1983009808
      %v1159 = vunpack.c.0.s8 %v1158
      %v1160 = vlaneseq
      %v1161 = vshrl.u32 %v1160, 7
      %v1162 = vsub.s32 %v1159, %v1161
      %v1163 = vrot.slane %v1155, %v1162
      %v1165 = vunpack.c.l.s4 1983009808
      %v1166 = vunpack.c.0.s8 %v1165
      %v1167 = vlaneseq
      %v1168 = vshrl.u32 %v1167, 7
      %v1169 = vsub.s32 %v1166, %v1168
      %v1170 = vrot.slane %v1156, %v1169
      %v1171 = vcombine.low %v1163, %v1170
      %v1172 = vcombine.low %v1028, %v1029
      %v1173 = vcombine.low %v1030, %v1031
      %v1175 = vunpack.c.l.s4 1983009808
      %v1176 = vunpack.c.0.s8 %v1175
      %v1177 = vlaneseq
      %v1178 = vshrl.u32 %v1177, 7
      %v1179 = vsub.s32 %v1176, %v1178
      %v1180 = vrot.slane %v1172, %v1179
      %v1182 = vunpack.c.l.s4 1983009808
      %v1183 = vunpack.c.0.s8 %v1182
      %v1184 = vlaneseq
      %v1185 = vshrl.u32 %v1184, 7
      %v1186 = vsub.s32 %v1183, %v1185
      %v1187 = vrot.slane %v1173, %v1186
      %v1188 = vcombine.low %v1180, %v1187
      %v1189 = vcombine.low %v1032, %v1033
      %v1190 = vcombine.low %v1034, %v1035
      %v1192 = vunpack.c.l.s4 1983009808
      %v1193 = vunpack.c.0.s8 %v1192
      %v1194 = vlaneseq
      %v1195 = vshrl.u32 %v1194, 7
      %v1196 = vsub.s32 %v1193, %v1195
      %v1197 = vrot.slane %v1189, %v1196
      %v1199 = vunpack.c.l.s4 1983009808
      %v1200 = vunpack.c.0.s8 %v1199
      %v1201 = vlaneseq
      %v1202 = vshrl.u32 %v1201, 7
      %v1203 = vsub.s32 %v1200, %v1202
      %v1204 = vrot.slane %v1190, %v1203
      %v1205 = vcombine.low %v1197, %v1204
      %v1206 = vcombine.low %v1036, %v1037
      %v1207 = vcombine.low %v1038, %v1039
      %v1209 = vunpack.c.l.s4 1983009808
      %v1210 = vunpack.c.0.s8 %v1209
      %v1211 = vlaneseq
      %v1212 = vshrl.u32 %v1211, 7
      %v1213 = vsub.s32 %v1210, %v1212
      %v1214 = vrot.slane %v1206, %v1213
      %v1216 = vunpack.c.l.s4 1983009808
      %v1217 = vunpack.c.0.s8 %v1216
      %v1218 = vlaneseq
      %v1219 = vshrl.u32 %v1218, 7
      %v1220 = vsub.s32 %v1217, %v1219
      %v1221 = vrot.slane %v1207, %v1220
      %v1222 = vcombine.low %v1214, %v1221
      %v1223 = vcombine.low %v1040, %v1041
      %v1224 = vcombine.low %v1042, %v1043
      %v1226 = vunpack.c.l.s4 1983009808
      %v1227 = vunpack.c.0.s8 %v1226
      %v1228 = vlaneseq
      %v1229 = vshrl.u32 %v1228, 7
      %v1230 = vsub.s32 %v1227, %v1229
      %v1231 = vrot.slane %v1223, %v1230
      %v1233 = vunpack.c.l.s4 1983009808
      %v1234 = vunpack.c.0.s8 %v1233
      %v1235 = vlaneseq
      %v1236 = vshrl.u32 %v1235, 7
      %v1237 = vsub.s32 %v1234, %v1236
      %v1238 = vrot.slane %v1224, %v1237
      %v1239 = vcombine.low %v1231, %v1238
      %s1248 = scalar_lea.vmem [#allocation2], 16
      %1249 = vst.msk [vmem:[%s1248 + $0x1] sm:$0xff] %vm1044, %v1120
      %1250 = vst.msk [vmem:[%s1248 + $0x11] sm:$0xff] %vm1044, %v1137
      %1251 = vst.msk [vmem:[%s1248 + $0x21] sm:$0xff] %vm1044, %v1154
      %1252 = vst.msk [vmem:[%s1248 + $0x31] sm:$0xff] %vm1044, %v1171
      %1253 = vst.msk [vmem:[%s1248 + $0x41] sm:$0xff] %vm1044, %v1188
      %1254 = vst.msk [vmem:[%s1248 + $0x51] sm:$0xff] %vm1044, %v1205
      %1255 = vst.msk [vmem:[%s1248 + $0x61] sm:$0xff] %vm1044, %v1222
      %1256 = vst.msk [vmem:[%s1248 + $0x71] sm:$0xff] %vm1044, %v1239
      %v1257 = vld [vmem:[#allocation2] sm:$0xff]
      %v1258 = vld [vmem:[#allocation2 + $0x10] sm:$0xff]
      %v1259 = vld [vmem:[#allocation2 + $0x20] sm:$0xff]
      %v1260 = vld [vmem:[#allocation2 + $0x30] sm:$0xff]
      %v1261 = vld [vmem:[#allocation2 + $0x40] sm:$0xff]
      %v1262 = vld [vmem:[#allocation2 + $0x50] sm:$0xff]
      %v1263 = vld [vmem:[#allocation2 + $0x60] sm:$0xff]
      %v1264 = vld [vmem:[#allocation2 + $0x70] sm:$0xff]
      %v1265 = vld [vmem:[#allocation2 + $0x1] sm:$0xff]
      %v1266 = vld [vmem:[#allocation2 + $0x11] sm:$0xff]
      %v1267 = vld [vmem:[#allocation2 + $0x21] sm:$0xff]
      %v1268 = vld [vmem:[#allocation2 + $0x31] sm:$0xff]
      %v1269 = vld [vmem:[#allocation2 + $0x41] sm:$0xff]
      %v1270 = vld [vmem:[#allocation2 + $0x51] sm:$0xff]
      %v1271 = vld [vmem:[#allocation2 + $0x61] sm:$0xff]
      %v1272 = vld [vmem:[#allocation2 + $0x71] sm:$0xff]
      %v1273 = vld [vmem:[#allocation2 + $0x2] sm:$0xff]
      %v1274 = vld [vmem:[#allocation2 + $0x12] sm:$0xff]
      %v1275 = vld [vmem:[#allocation2 + $0x22] sm:$0xff]
      %v1276 = vld [vmem:[#allocation2 + $0x32] sm:$0xff]
      %v1277 = vld [vmem:[#allocation2 + $0x42] sm:$0xff]
      %v1278 = vld [vmem:[#allocation2 + $0x52] sm:$0xff]
      %v1279 = vld [vmem:[#allocation2 + $0x62] sm:$0xff]
      %v1280 = vld [vmem:[#allocation2 + $0x72] sm:$0xff]
      %1289 = vrot.lane.b32.xlu0 %v1265, 4
      %v1290 = vpop.permute.xlu0 %1289
      %1291 = vrot.lane.b32.xlu0 %v1266, 4
      %v1292 = vpop.permute.xlu0 %1291
      %1293 = vrot.lane.b32.xlu0 %v1267, 4
      %v1294 = vpop.permute.xlu0 %1293
      %1295 = vrot.lane.b32.xlu0 %v1268, 4
      %v1296 = vpop.permute.xlu0 %1295
      %1297 = vrot.lane.b32.xlu0 %v1269, 4
      %v1298 = vpop.permute.xlu0 %1297
      %1299 = vrot.lane.b32.xlu0 %v1270, 4
      %v1300 = vpop.permute.xlu0 %1299
      %1301 = vrot.lane.b32.xlu0 %v1271, 4
      %v1302 = vpop.permute.xlu0 %1301
      %1303 = vrot.lane.b32.xlu0 %v1272, 4
      %v1304 = vpop.permute.xlu0 %1303
      %1321 = vrot.lane.b32.xlu0 %v1273, 8
      %v1322 = vpop.permute.xlu0 %1321
      %1323 = vrot.lane.b32.xlu0 %v1274, 8
      %v1324 = vpop.permute.xlu0 %1323
      %1325 = vrot.lane.b32.xlu0 %v1275, 8
      %v1326 = vpop.permute.xlu0 %1325
      %1327 = vrot.lane.b32.xlu0 %v1276, 8
      %v1328 = vpop.permute.xlu0 %1327
      %1329 = vrot.lane.b32.xlu0 %v1277, 8
      %v1330 = vpop.permute.xlu0 %1329
      %1331 = vrot.lane.b32.xlu0 %v1278, 8
      %v1332 = vpop.permute.xlu0 %1331
      %1333 = vrot.lane.b32.xlu0 %v1279, 8
      %v1334 = vpop.permute.xlu0 %1333
      %1335 = vrot.lane.b32.xlu0 %v1280, 8
      %v1336 = vpop.permute.xlu0 %1335
      %v1345 = vsel %vm1044, %v1257, %v1290
      %v1346 = vsel %vm1044, %v1258, %v1292
      %v1347 = vsel %vm1044, %v1259, %v1294
      %v1348 = vsel %vm1044, %v1260, %v1296
      %v1349 = vsel %vm1044, %v1261, %v1298
      %v1350 = vsel %vm1044, %v1262, %v1300
      %v1351 = vsel %vm1044, %v1263, %v1302
      %v1352 = vsel %vm1044, %v1264, %v1304
      %vm1353 = vcmask 64512
      %v1354 = vsel %vm1353, %v1345, %v1322
      %v1355 = vsel %vm1353, %v1346, %v1324
      %v1356 = vsel %vm1353, %v1347, %v1326
      %v1357 = vsel %vm1353, %v1348, %v1328
      %v1358 = vsel %vm1353, %v1349, %v1330
      %v1359 = vsel %vm1353, %v1350, %v1332
      %v1360 = vsel %vm1353, %v1351, %v1334
      %v1361 = vsel %vm1353, %v1352, %v1336
      %v1362 = vld [vmem:[%s1] sm:$0xff]
      %v1363 = vld [vmem:[%s1 + $0x8] sm:$0xf]
      %v1364 = vld [vmem:[%s1248] sm:$0xff]
      %v1365 = vld [vmem:[%s1248 + $0x10] sm:$0xff]
      %v1366 = vld [vmem:[%s1248 + $0x20] sm:$0xff]
      %v1367 = vld [vmem:[%s1248 + $0x30] sm:$0xff]
      %v1368 = vld [vmem:[%s1248 + $0x40] sm:$0xff]
      %v1369 = vld [vmem:[%s1248 + $0x50] sm:$0xff]
      %v1370 = vld [vmem:[%s1248 + $0x60] sm:$0xff]
      %v1371 = vld [vmem:[%s1248 + $0x70] sm:$0xff]
      %v1372 = vld [vmem:[%s1248 + $0x1] sm:$0xff]
      %v1373 = vld [vmem:[%s1248 + $0x11] sm:$0xff]
      %v1374 = vld [vmem:[%s1248 + $0x21] sm:$0xff]
      %v1375 = vld [vmem:[%s1248 + $0x31] sm:$0xff]
      %v1376 = vld [vmem:[%s1248 + $0x41] sm:$0xff]
      %v1377 = vld [vmem:[%s1248 + $0x51] sm:$0xff]
      %v1378 = vld [vmem:[%s1248 + $0x61] sm:$0xff]
      %v1379 = vld [vmem:[%s1248 + $0x71] sm:$0xff]
      %v1380 = vld [vmem:[%s1248 + $0x2] sm:$0xff]
      %v1381 = vld [vmem:[%s1248 + $0x12] sm:$0xff]
      %v1382 = vld [vmem:[%s1248 + $0x22] sm:$0xff]
      %v1383 = vld [vmem:[%s1248 + $0x32] sm:$0xff]
      %v1384 = vld [vmem:[%s1248 + $0x42] sm:$0xff]
      %v1385 = vld [vmem:[%s1248 + $0x52] sm:$0xff]
      %v1386 = vld [vmem:[%s1248 + $0x62] sm:$0xff]
      %v1387 = vld [vmem:[%s1248 + $0x72] sm:$0xff]
      %1396 = vrot.lane.b32.xlu0 %v1372, 4
      %v1397 = vpop.permute.xlu0 %1396
      %1398 = vrot.lane.b32.xlu0 %v1373, 4
      %v1399 = vpop.permute.xlu0 %1398
      %1400 = vrot.lane.b32.xlu0 %v1374, 4
      %v1401 = vpop.permute.xlu0 %1400
      %1402 = vrot.lane.b32.xlu0 %v1375, 4
      %v1403 = vpop.permute.xlu0 %1402
      %1404 = vrot.lane.b32.xlu0 %v1376, 4
      %v1405 = vpop.permute.xlu0 %1404
      %1406 = vrot.lane.b32.xlu0 %v1377, 4
      %v1407 = vpop.permute.xlu0 %1406
      %1408 = vrot.lane.b32.xlu0 %v1378, 4
      %v1409 = vpop.permute.xlu0 %1408
      %1410 = vrot.lane.b32.xlu0 %v1379, 4
      %v1411 = vpop.permute.xlu0 %1410
      %1428 = vrot.lane.b32.xlu0 %v1380, 8
      %v1429 = vpop.permute.xlu0 %1428
      %1430 = vrot.lane.b32.xlu0 %v1381, 8
      %v1431 = vpop.permute.xlu0 %1430
      %1432 = vrot.lane.b32.xlu0 %v1382, 8
      %v1433 = vpop.permute.xlu0 %1432
      %1434 = vrot.lane.b32.xlu0 %v1383, 8
      %v1435 = vpop.permute.xlu0 %1434
      %1436 = vrot.lane.b32.xlu0 %v1384, 8
      %v1437 = vpop.permute.xlu0 %1436
      %1438 = vrot.lane.b32.xlu0 %v1385, 8
      %v1439 = vpop.permute.xlu0 %1438
      %1440 = vrot.lane.b32.xlu0 %v1386, 8
      %v1441 = vpop.permute.xlu0 %1440
      %1442 = vrot.lane.b32.xlu0 %v1387, 8
      %v1443 = vpop.permute.xlu0 %1442
      %v1452 = vsel %vm1044, %v1364, %v1397
      %v1453 = vsel %vm1044, %v1365, %v1399
      %v1454 = vsel %vm1044, %v1366, %v1401
      %v1455 = vsel %vm1044, %v1367, %v1403
      %v1456 = vsel %vm1044, %v1368, %v1405
      %v1457 = vsel %vm1044, %v1369, %v1407
      %v1458 = vsel %vm1044, %v1370, %v1409
      %v1459 = vsel %vm1044, %v1371, %v1411
      %v1460 = vsel %vm1353, %v1452, %v1429
      %v1461 = vsel %vm1353, %v1453, %v1431
      %v1462 = vsel %vm1353, %v1454, %v1433
      %v1463 = vsel %vm1353, %v1455, %v1435
      %v1464 = vsel %vm1353, %v1456, %v1437
      %v1465 = vsel %vm1353, %v1457, %v1439
      %v1466 = vsel %vm1353, %v1458, %v1441
      %v1467 = vsel %vm1353, %v1459, %v1443
      %s1468 = scalar_lea.vmem %s1, 16
      %v1469 = vld [vmem:[%s1468] sm:$0xff]
      %v1470 = vld [vmem:[%s1468 + $0x8] sm:$0xf]
      %vm1471 = vcmask 97280
      %v1473 = vsel %vm1471, %v1460, 0
      %v1476 = vsel %vm1471, %v1461, 0
      %v1479 = vsel %vm1471, %v1462, 0
      %v1482 = vsel %vm1471, %v1463, 0
      %v1485 = vsel %vm1471, %v1464, 0
      %v1488 = vsel %vm1471, %v1465, 0
      %v1491 = vsel %vm1471, %v1466, 0
      %v1494 = vsel %vm1471, %v1467, 0
      %vm1496 = vcmask 1043456
      %v1498 = vsel %vm1496, %v1470, 0
      %1500 = vmatprep.subr.mxu0 0.0
      %1501 = vmatpush1.msra.mxu0 %v1469
      %1502 = vmatprep.subr.mxu0 0.0
      %1503 = vmatpush1.msra.mxu0 %v1498
      %1504 = vmatprep.subr.mxu0 0.0
      %1505 = vmatpush1.msra.mxu0 0.0
      %1506 = vmatprep.subr.mxu0 0.0
      %1507 = vmatpush1.msra.mxu0 0.0
      %1508 = vmatprep.subr.mxu0 0.0
      %1509 = vmatpush1.msra.mxu0 0.0
      %1510 = vmatprep.subr.mxu0 0.0
      %1511 = vmatpush1.msra.mxu0 0.0
      %1512 = vmatprep.subr.mxu0 0.0
      %1513 = vmatpush1.msra.mxu0 0.0
      %1514 = vmatprep.subr.mxu0 0.0
      %1515 = vmatpush1.msra.mxu0 0.0
      %1516 = vmatprep.subr.mxu0 0.0
      %1517 = vmatpush1.msra.mxu0 0.0
      %1518 = vmatprep.subr.mxu0 0.0
      %1519 = vmatpush1.msra.mxu0 0.0
      %1520 = vmatprep.subr.mxu0 0.0
      %1521 = vmatpush1.msra.mxu0 0.0
      %1522 = vmatprep.subr.mxu0 0.0
      %1523 = vmatpush1.msra.mxu0 0.0
      %1524 = vmatprep.subr.mxu0 0.0
      %1525 = vmatpush1.msra.mxu0 0.0
      %1526 = vmatprep.subr.mxu0 0.0
      %1527 = vmatpush1.msra.mxu0 0.0
      %1528 = vmatprep.subr.mxu0 0.0
      %1529 = vmatpush1.msra.mxu0 0.0
      %1530 = vmatprep.subr.mxu0 0.0
      %1531 = vmatpush1.msra.mxu0 0.0
      %1532 = vmatprep.subr.mxu0 0.0
      %1533 = vmatpush1.msra.mxu0 0.0
      %1534 = vmatprep.subr.mxu0 0.0
      %1535 = vmatpush1.msra.mxu0 0.0
      %1536 = vmatprep.subr.mxu0 0.0
      %1537 = vmatpush1.msra.mxu0 0.0
      %1538 = vmatprep.subr.mxu0 0.0
      %1539 = vmatpush1.msra.mxu0 0.0
      %1540 = vmatprep.subr.mxu0 0.0
      %1541 = vmatpush1.msra.mxu0 0.0
      %1542 = vmatprep.subr.mxu0 0.0
      %1543 = vmatpush1.msra.mxu0 0.0
      %1544 = vmatprep.subr.mxu0 0.0
      %1545 = vmatpush1.msra.mxu0 0.0
      %1546 = vmatprep.subr.mxu0 0.0
      %1547 = vmatpush1.msra.mxu0 0.0
      %1548 = vmatprep.subr.mxu0 0.0
      %1549 = vmatpush1.msra.mxu0 0.0
      %1550 = vmatprep.subr.mxu0 0.0
      %1551 = vmatpush1.msra.mxu0 0.0
      %1552 = vmatprep.subr.mxu0 0.0
      %1553 = vmatpush1.msra.mxu0 0.0
      %1554 = vmatprep.subr.mxu0 0.0
      %1555 = vmatpush1.msra.mxu0 0.0
      %1556 = vmatprep.subr.mxu0 0.0
      %1557 = vmatpush1.msra.mxu0 0.0
      %1558 = vmatprep.subr.mxu0 0.0
      %1559 = vmatpush1.msra.mxu0 0.0
      %1560 = vmatprep.subr.mxu0 0.0
      %1561 = vmatpush1.msra.mxu0 0.0
      %1562 = vmatprep.subr.mxu0 0.0
      %1563 = vmatpush1.msra.mxu0 0.0
      %1564 = vmatprep.mubr.f32.mxu0 0.0
      %1565 = vmatmul.mubr.f32.gmra.mrb[0].mxu0 %v1473
      %v1566 = vpop.f32.mrb[0].mxu0
      %v1567 = vadd.f32 0.0, %v1566
      %v1568 = vpop.f32.mrb[0].mxu0
      %1569 = vmatprep.mubr.f32.mxu0 0.0
      %1570 = vmatmul.mubr.f32.gmra.mrb[0].mxu0 %v1476
      %v1571 = vpop.f32.mrb[0].mxu0
      %v1572 = vadd.f32 0.0, %v1571
      %v1573 = vpop.f32.mrb[0].mxu0
      %1574 = vmatprep.mubr.f32.mxu0 0.0
      %1575 = vmatmul.mubr.f32.gmra.mrb[0].mxu0 %v1479
      %v1576 = vpop.f32.mrb[0].mxu0
      %v1577 = vadd.f32 0.0, %v1576
      %v1578 = vpop.f32.mrb[0].mxu0
      %1579 = vmatprep.mubr.f32.mxu0 0.0
      %1580 = vmatmul.mubr.f32.gmra.mrb[0].mxu0 %v1482
      %v1581 = vpop.f32.mrb[0].mxu0
      %v1582 = vadd.f32 0.0, %v1581
      %v1583 = vpop.f32.mrb[0].mxu0
      %1584 = vmatprep.mubr.f32.mxu0 0.0
      %1585 = vmatmul.mubr.f32.gmra.mrb[0].mxu0 %v1485
      %v1586 = vpop.f32.mrb[0].mxu0
      %v1587 = vadd.f32 0.0, %v1586
      %v1588 = vpop.f32.mrb[0].mxu0
      %1589 = vmatprep.mubr.f32.mxu0 0.0
      %1590 = vmatmul.mubr.f32.gmra.mrb[0].mxu0 %v1488
      %v1591 = vpop.f32.mrb[0].mxu0
      %v1592 = vadd.f32 0.0, %v1591
      %v1593 = vpop.f32.mrb[0].mxu0
      %1594 = vmatprep.mubr.f32.mxu0 0.0
      %1595 = vmatmul.mubr.f32.gmra.mrb[0].mxu0 %v1491
      %v1596 = vpop.f32.mrb[0].mxu0
      %v1597 = vadd.f32 0.0, %v1596
      %v1598 = vpop.f32.mrb[0].mxu0
      %1599 = vmatprep.mubr.f32.mxu0 0.0
      %1600 = vmatmul.mubr.f32.gmra.mrb[0].mxu0 %v1494
      %v1601 = vpop.f32.mrb[0].mxu0
      %v1602 = vadd.f32 0.0, %v1601
      %v1603 = vpop.f32.mrb[0].mxu0
      %1604 = vdwg.mxu0
      %v1606 = vsel %vm1471, %v1354, 0
      %v1609 = vsel %vm1471, %v1355, 0
      %v1612 = vsel %vm1471, %v1356, 0
      %v1615 = vsel %vm1471, %v1357, 0
      %v1618 = vsel %vm1471, %v1358, 0
      %v1621 = vsel %vm1471, %v1359, 0
      %v1624 = vsel %vm1471, %v1360, 0
      %v1627 = vsel %vm1471, %v1361, 0
      %v1630 = vsel %vm1496, %v1363, 0
      %1632 = vmatprep.subr.mxu0 0.0
      %1633 = vmatpush1.msra.mxu0 %v1362
      %1634 = vmatprep.subr.mxu0 0.0
      %1635 = vmatpush1.msra.mxu0 %v1630
      %1636 = vmatprep.subr.mxu0 0.0
      %1637 = vmatpush1.msra.mxu0 0.0
      %1638 = vmatprep.subr.mxu0 0.0
      %1639 = vmatpush1.msra.mxu0 0.0
      %1640 = vmatprep.subr.mxu0 0.0
      %1641 = vmatpush1.msra.mxu0 0.0
      %1642 = vmatprep.subr.mxu0 0.0
      %1643 = vmatpush1.msra.mxu0 0.0
      %1644 = vmatprep.subr.mxu0 0.0
      %1645 = vmatpush1.msra.mxu0 0.0
      %1646 = vmatprep.subr.mxu0 0.0
      %1647 = vmatpush1.msra.mxu0 0.0
      %1648 = vmatprep.subr.mxu0 0.0
      %1649 = vmatpush1.msra.mxu0 0.0
      %1650 = vmatprep.subr.mxu0 0.0
      %1651 = vmatpush1.msra.mxu0 0.0
      %1652 = vmatprep.subr.mxu0 0.0
      %1653 = vmatpush1.msra.mxu0 0.0
      %1654 = vmatprep.subr.mxu0 0.0
      %1655 = vmatpush1.msra.mxu0 0.0
      %1656 = vmatprep.subr.mxu0 0.0
      %1657 = vmatpush1.msra.mxu0 0.0
      %1658 = vmatprep.subr.mxu0 0.0
      %1659 = vmatpush1.msra.mxu0 0.0
      %1660 = vmatprep.subr.mxu0 0.0
      %1661 = vmatpush1.msra.mxu0 0.0
      %1662 = vmatprep.subr.mxu0 0.0
      %1663 = vmatpush1.msra.mxu0 0.0
      %1664 = vmatprep.subr.mxu0 0.0
      %1665 = vmatpush1.msra.mxu0 0.0
      %1666 = vmatprep.subr.mxu0 0.0
      %1667 = vmatpush1.msra.mxu0 0.0
      %1668 = vmatprep.subr.mxu0 0.0
      %1669 = vmatpush1.msra.mxu0 0.0
      %1670 = vmatprep.subr.mxu0 0.0
      %1671 = vmatpush1.msra.mxu0 0.0
      %1672 = vmatprep.subr.mxu0 0.0
      %1673 = vmatpush1.msra.mxu0 0.0
      %1674 = vmatprep.subr.mxu0 0.0
      %1675 = vmatpush1.msra.mxu0 0.0
      %1676 = vmatprep.subr.mxu0 0.0
      %1677 = vmatpush1.msra.mxu0 0.0
      %1678 = vmatprep.subr.mxu0 0.0
      %1679 = vmatpush1.msra.mxu0 0.0
      %1680 = vmatprep.subr.mxu0 0.0
      %1681 = vmatpush1.msra.mxu0 0.0
      %1682 = vmatprep.subr.mxu0 0.0
      %1683 = vmatpush1.msra.mxu0 0.0
      %1684 = vmatprep.subr.mxu0 0.0
      %1685 = vmatpush1.msra.mxu0 0.0
      %1686 = vmatprep.subr.mxu0 0.0
      %1687 = vmatpush1.msra.mxu0 0.0
      %1688 = vmatprep.subr.mxu0 0.0
      %1689 = vmatpush1.msra.mxu0 0.0
      %1690 = vmatprep.subr.mxu0 0.0
      %1691 = vmatpush1.msra.mxu0 0.0
      %1692 = vmatprep.subr.mxu0 0.0
      %1693 = vmatpush1.msra.mxu0 0.0
      %1694 = vmatprep.subr.mxu0 0.0
      %1695 = vmatpush1.msra.mxu0 0.0
      %1696 = vmatprep.mubr.f32.mxu0 0.0
      %1697 = vmatmul.mubr.f32.gmra.mrb[0].mxu0 %v1606
      %v1698 = vpop.f32.mrb[0].mxu0
      %v1699 = vadd.f32 %v1567, %v1698
      %v1700 = vpop.f32.mrb[0].mxu0
      %1701 = vmatprep.mubr.f32.mxu0 0.0
      %1702 = vmatmul.mubr.f32.gmra.mrb[0].mxu0 %v1609
      %v1703 = vpop.f32.mrb[0].mxu0
      %v1704 = vadd.f32 %v1572, %v1703
      %v1705 = vpop.f32.mrb[0].mxu0
      %1706 = vmatprep.mubr.f32.mxu0 0.0
      %1707 = vmatmul.mubr.f32.gmra.mrb[0].mxu0 %v1612
      %v1708 = vpop.f32.mrb[0].mxu0
      %v1709 = vadd.f32 %v1577, %v1708
      %v1710 = vpop.f32.mrb[0].mxu0
      %1711 = vmatprep.mubr.f32.mxu0 0.0
      %1712 = vmatmul.mubr.f32.gmra.mrb[0].mxu0 %v1615
      %v1713 = vpop.f32.mrb[0].mxu0
      %v1714 = vadd.f32 %v1582, %v1713
      %v1715 = vpop.f32.mrb[0].mxu0
      %1716 = vmatprep.mubr.f32.mxu0 0.0
      %1717 = vmatmul.mubr.f32.gmra.mrb[0].mxu0 %v1618
      %v1718 = vpop.f32.mrb[0].mxu0
      %v1719 = vadd.f32 %v1587, %v1718
      %v1720 = vpop.f32.mrb[0].mxu0
      %1721 = vmatprep.mubr.f32.mxu0 0.0
      %1722 = vmatmul.mubr.f32.gmra.mrb[0].mxu0 %v1621
      %v1723 = vpop.f32.mrb[0].mxu0
      %v1724 = vadd.f32 %v1592, %v1723
      %v1725 = vpop.f32.mrb[0].mxu0
      %1726 = vmatprep.mubr.f32.mxu0 0.0
      %1727 = vmatmul.mubr.f32.gmra.mrb[0].mxu0 %v1624
      %v1728 = vpop.f32.mrb[0].mxu0
      %v1729 = vadd.f32 %v1597, %v1728
      %v1730 = vpop.f32.mrb[0].mxu0
      %1731 = vmatprep.mubr.f32.mxu0 0.0
      %1732 = vmatmul.mubr.f32.gmra.mrb[0].mxu0 %v1627
      %v1733 = vpop.f32.mrb[0].mxu0
      %v1734 = vadd.f32 %v1602, %v1733
      %v1735 = vpop.f32.mrb[0].mxu0
      %1736 = vdwg.mxu0
      %s1737 = scalar_lea.vmem [#allocation2], 32
      %v1738 = vld [vmem:[%s1737] sm:$0xff]
      %v1739 = vld [vmem:[%s1737 + $0x10] sm:$0xff]
      %v1740 = vld [vmem:[%s1737 + $0x20] sm:$0xff]
      %v1741 = vld [vmem:[%s1737 + $0x30] sm:$0xff]
      %v1742 = vld [vmem:[%s1737 + $0x40] sm:$0xff]
      %v1743 = vld [vmem:[%s1737 + $0x50] sm:$0xff]
      %v1744 = vld [vmem:[%s1737 + $0x60] sm:$0xff]
      %v1745 = vld [vmem:[%s1737 + $0x70] sm:$0xff]
      %v1746 = vld [vmem:[%s1737 + $0x1] sm:$0xff]
      %v1747 = vld [vmem:[%s1737 + $0x11] sm:$0xff]
      %v1748 = vld [vmem:[%s1737 + $0x21] sm:$0xff]
      %v1749 = vld [vmem:[%s1737 + $0x31] sm:$0xff]
      %v1750 = vld [vmem:[%s1737 + $0x41] sm:$0xff]
      %v1751 = vld [vmem:[%s1737 + $0x51] sm:$0xff]
      %v1752 = vld [vmem:[%s1737 + $0x61] sm:$0xff]
      %v1753 = vld [vmem:[%s1737 + $0x71] sm:$0xff]
      %v1754 = vld [vmem:[%s1737 + $0x2] sm:$0xff]
      %v1755 = vld [vmem:[%s1737 + $0x12] sm:$0xff]
      %v1756 = vld [vmem:[%s1737 + $0x22] sm:$0xff]
      %v1757 = vld [vmem:[%s1737 + $0x32] sm:$0xff]
      %v1758 = vld [vmem:[%s1737 + $0x42] sm:$0xff]
      %v1759 = vld [vmem:[%s1737 + $0x52] sm:$0xff]
      %v1760 = vld [vmem:[%s1737 + $0x62] sm:$0xff]
      %v1761 = vld [vmem:[%s1737 + $0x72] sm:$0xff]
      %1770 = vrot.lane.b32.xlu0 %v1746, 4
      %v1771 = vpop.permute.xlu0 %1770
      %1772 = vrot.lane.b32.xlu0 %v1747, 4
      %v1773 = vpop.permute.xlu0 %1772
      %1774 = vrot.lane.b32.xlu0 %v1748, 4
      %v1775 = vpop.permute.xlu0 %1774
      %1776 = vrot.lane.b32.xlu0 %v1749, 4
      %v1777 = vpop.permute.xlu0 %1776
      %1778 = vrot.lane.b32.xlu0 %v1750, 4
      %v1779 = vpop.permute.xlu0 %1778
      %1780 = vrot.lane.b32.xlu0 %v1751, 4
      %v1781 = vpop.permute.xlu0 %1780
      %1782 = vrot.lane.b32.xlu0 %v1752, 4
      %v1783 = vpop.permute.xlu0 %1782
      %1784 = vrot.lane.b32.xlu0 %v1753, 4
      %v1785 = vpop.permute.xlu0 %1784
      %1802 = vrot.lane.b32.xlu0 %v1754, 8
      %v1803 = vpop.permute.xlu0 %1802
      %1804 = vrot.lane.b32.xlu0 %v1755, 8
      %v1805 = vpop.permute.xlu0 %1804
      %1806 = vrot.lane.b32.xlu0 %v1756, 8
      %v1807 = vpop.permute.xlu0 %1806
      %1808 = vrot.lane.b32.xlu0 %v1757, 8
      %v1809 = vpop.permute.xlu0 %1808
      %1810 = vrot.lane.b32.xlu0 %v1758, 8
      %v1811 = vpop.permute.xlu0 %1810
      %1812 = vrot.lane.b32.xlu0 %v1759, 8
      %v1813 = vpop.permute.xlu0 %1812
      %1814 = vrot.lane.b32.xlu0 %v1760, 8
      %v1815 = vpop.permute.xlu0 %1814
      %1816 = vrot.lane.b32.xlu0 %v1761, 8
      %v1817 = vpop.permute.xlu0 %1816
      %v1826 = vsel %vm1044, %v1738, %v1771
      %v1827 = vsel %vm1044, %v1739, %v1773
      %v1828 = vsel %vm1044, %v1740, %v1775
      %v1829 = vsel %vm1044, %v1741, %v1777
      %v1830 = vsel %vm1044, %v1742, %v1779
      %v1831 = vsel %vm1044, %v1743, %v1781
      %v1832 = vsel %vm1044, %v1744, %v1783
      %v1833 = vsel %vm1044, %v1745, %v1785
      %v1834 = vsel %vm1353, %v1826, %v1803
      %v1835 = vsel %vm1353, %v1827, %v1805
      %v1836 = vsel %vm1353, %v1828, %v1807
      %v1837 = vsel %vm1353, %v1829, %v1809
      %v1838 = vsel %vm1353, %v1830, %v1811
      %v1839 = vsel %vm1353, %v1831, %v1813
      %v1840 = vsel %vm1353, %v1832, %v1815
      %v1841 = vsel %vm1353, %v1833, %v1817
      %s1842 = scalar_lea.vmem %s1, 32
      %v1843 = vld [vmem:[%s1842] sm:$0xff]
      %v1844 = vld [vmem:[%s1842 + $0x8] sm:$0xf]
      %v1846 = vsel %vm1471, %v1834, 0
      %v1849 = vsel %vm1471, %v1835, 0
      %v1852 = vsel %vm1471, %v1836, 0
      %v1855 = vsel %vm1471, %v1837, 0
      %v1858 = vsel %vm1471, %v1838, 0
      %v1861 = vsel %vm1471, %v1839, 0
      %v1864 = vsel %vm1471, %v1840, 0
      %v1867 = vsel %vm1471, %v1841, 0
      %v1870 = vsel %vm1496, %v1844, 0
      %1872 = vmatprep.subr.mxu0 0.0
      %1873 = vmatpush1.msra.mxu0 %v1843
      %1874 = vmatprep.subr.mxu0 0.0
      %1875 = vmatpush1.msra.mxu0 %v1870
      %1876 = vmatprep.subr.mxu0 0.0
      %1877 = vmatpush1.msra.mxu0 0.0
      %1878 = vmatprep.subr.mxu0 0.0
      %1879 = vmatpush1.msra.mxu0 0.0
      %1880 = vmatprep.subr.mxu0 0.0
      %1881 = vmatpush1.msra.mxu0 0.0
      %1882 = vmatprep.subr.mxu0 0.0
      %1883 = vmatpush1.msra.mxu0 0.0
      %1884 = vmatprep.subr.mxu0 0.0
      %1885 = vmatpush1.msra.mxu0 0.0
      %1886 = vmatprep.subr.mxu0 0.0
      %1887 = vmatpush1.msra.mxu0 0.0
      %1888 = vmatprep.subr.mxu0 0.0
      %1889 = vmatpush1.msra.mxu0 0.0
      %1890 = vmatprep.subr.mxu0 0.0
      %1891 = vmatpush1.msra.mxu0 0.0
      %1892 = vmatprep.subr.mxu0 0.0
      %1893 = vmatpush1.msra.mxu0 0.0
      %1894 = vmatprep.subr.mxu0 0.0
      %1895 = vmatpush1.msra.mxu0 0.0
      %1896 = vmatprep.subr.mxu0 0.0
      %1897 = vmatpush1.msra.mxu0 0.0
      %1898 = vmatprep.subr.mxu0 0.0
      %1899 = vmatpush1.msra.mxu0 0.0
      %1900 = vmatprep.subr.mxu0 0.0
      %1901 = vmatpush1.msra.mxu0 0.0
      %1902 = vmatprep.subr.mxu0 0.0
      %1903 = vmatpush1.msra.mxu0 0.0
      %1904 = vmatprep.subr.mxu0 0.0
      %1905 = vmatpush1.msra.mxu0 0.0
      %1906 = vmatprep.subr.mxu0 0.0
      %1907 = vmatpush1.msra.mxu0 0.0
      %1908 = vmatprep.subr.mxu0 0.0
      %1909 = vmatpush1.msra.mxu0 0.0
      %1910 = vmatprep.subr.mxu0 0.0
      %1911 = vmatpush1.msra.mxu0 0.0
      %1912 = vmatprep.subr.mxu0 0.0
      %1913 = vmatpush1.msra.mxu0 0.0
      %1914 = vmatprep.subr.mxu0 0.0
      %1915 = vmatpush1.msra.mxu0 0.0
      %1916 = vmatprep.subr.mxu0 0.0
      %1917 = vmatpush1.msra.mxu0 0.0
      %1918 = vmatprep.subr.mxu0 0.0
      %1919 = vmatpush1.msra.mxu0 0.0
      %1920 = vmatprep.subr.mxu0 0.0
      %1921 = vmatpush1.msra.mxu0 0.0
      %1922 = vmatprep.subr.mxu0 0.0
      %1923 = vmatpush1.msra.mxu0 0.0
      %1924 = vmatprep.subr.mxu0 0.0
      %1925 = vmatpush1.msra.mxu0 0.0
      %1926 = vmatprep.subr.mxu0 0.0
      %1927 = vmatpush1.msra.mxu0 0.0
      %1928 = vmatprep.subr.mxu0 0.0
      %1929 = vmatpush1.msra.mxu0 0.0
      %1930 = vmatprep.subr.mxu0 0.0
      %1931 = vmatpush1.msra.mxu0 0.0
      %1932 = vmatprep.subr.mxu0 0.0
      %1933 = vmatpush1.msra.mxu0 0.0
      %1934 = vmatprep.subr.mxu0 0.0
      %1935 = vmatpush1.msra.mxu0 0.0
      %1936 = vmatprep.mubr.f32.mxu0 0.0
      %1937 = vmatmul.mubr.f32.gmra.mrb[0].mxu0 %v1846
      %v1938 = vpop.f32.mrb[0].mxu0
      %v1939 = vadd.f32 0.0, %v1938
      %v1940 = vpop.f32.mrb[0].mxu0
      %1941 = vmatprep.mubr.f32.mxu0 0.0
      %1942 = vmatmul.mubr.f32.gmra.mrb[0].mxu0 %v1849
      %v1943 = vpop.f32.mrb[0].mxu0
      %v1944 = vadd.f32 0.0, %v1943
      %v1945 = vpop.f32.mrb[0].mxu0
      %1946 = vmatprep.mubr.f32.mxu0 0.0
      %1947 = vmatmul.mubr.f32.gmra.mrb[0].mxu0 %v1852
      %v1948 = vpop.f32.mrb[0].mxu0
      %v1949 = vadd.f32 0.0, %v1948
      %v1950 = vpop.f32.mrb[0].mxu0
      %1951 = vmatprep.mubr.f32.mxu0 0.0
      %1952 = vmatmul.mubr.f32.gmra.mrb[0].mxu0 %v1855
      %v1953 = vpop.f32.mrb[0].mxu0
      %v1954 = vadd.f32 0.0, %v1953
      %v1955 = vpop.f32.mrb[0].mxu0
      %1956 = vmatprep.mubr.f32.mxu0 0.0
      %1957 = vmatmul.mubr.f32.gmra.mrb[0].mxu0 %v1858
      %v1958 = vpop.f32.mrb[0].mxu0
      %v1959 = vadd.f32 0.0, %v1958
      %v1960 = vpop.f32.mrb[0].mxu0
      %1961 = vmatprep.mubr.f32.mxu0 0.0
      %1962 = vmatmul.mubr.f32.gmra.mrb[0].mxu0 %v1861
      %v1963 = vpop.f32.mrb[0].mxu0
      %v1964 = vadd.f32 0.0, %v1963
      %v1965 = vpop.f32.mrb[0].mxu0
      %1966 = vmatprep.mubr.f32.mxu0 0.0
      %1967 = vmatmul.mubr.f32.gmra.mrb[0].mxu0 %v1864
      %v1968 = vpop.f32.mrb[0].mxu0
      %v1969 = vadd.f32 0.0, %v1968
      %v1970 = vpop.f32.mrb[0].mxu0
      %1971 = vmatprep.mubr.f32.mxu0 0.0
      %1972 = vmatmul.mubr.f32.gmra.mrb[0].mxu0 %v1867
      %v1973 = vpop.f32.mrb[0].mxu0
      %v1974 = vadd.f32 0.0, %v1973
      %v1975 = vpop.f32.mrb[0].mxu0
      %1976 = vdwg.mxu0
      %v1977 = vadd.f32 %v1699, %v1939
      %v1978 = vadd.f32 %v1704, %v1944
      %v1979 = vadd.f32 %v1709, %v1949
      %v1980 = vadd.f32 %v1714, %v1954
      %v1981 = vadd.f32 %v1719, %v1959
      %v1982 = vadd.f32 %v1724, %v1964
      %v1983 = vadd.f32 %v1729, %v1969
      %v1984 = vadd.f32 %v1734, %v1974
      %v1985 = vld [vmem:[%s2] sm:$0x1]
      %v1987 = vlaneseq
      %v1988 = vshrl.u32 %v1987, 7
      %v1989 = vsub.s32 0, %v1988
      %v1990 = vrot.slane %v1985, %v1989
      %v1992 = vmul.f32 %v1977, %v1990
      %v1993 = vmul.f32 %v1978, %v1990
      %v1994 = vmul.f32 %v1979, %v1990
      %v1995 = vmul.f32 %v1980, %v1990
      %v1996 = vmul.f32 %v1981, %v1990
      %v1997 = vmul.f32 %v1982, %v1990
      %v1998 = vmul.f32 %v1983, %v1990
      %v1999 = vmul.f32 %v1984, %v1990
      %v2000 = vld [vmem:[%s3] sm:$0x1]
      %v2002 = vlaneseq
      %v2003 = vshrl.u32 %v2002, 7
      %v2004 = vsub.s32 0, %v2003
      %v2005 = vrot.slane %v2000, %v2004
      %v2007 = vadd.f32 %v1992, %v2005
      %v2008 = vadd.f32 %v1993, %v2005
      %v2009 = vadd.f32 %v1994, %v2005
      %v2010 = vadd.f32 %v1995, %v2005
      %v2011 = vadd.f32 %v1996, %v2005
      %v2012 = vadd.f32 %v1997, %v2005
      %v2013 = vadd.f32 %v1998, %v2005
      %v2014 = vadd.f32 %v1999, %v2005
      %v2015 = vmax.f32 %v2007, 0.0
      %v2016 = vmax.f32 %v2008, 0.0
      %v2017 = vmax.f32 %v2009, 0.0
      %v2018 = vmax.f32 %v2010, 0.0
      %v2019 = vmax.f32 %v2011, 0.0
      %v2020 = vmax.f32 %v2012, 0.0
      %v2021 = vmax.f32 %v2013, 0.0
      %v2022 = vmax.f32 %v2014, 0.0
      %2023 = vst.msk [vmem:[#allocation3] sm:$0xff] %vm1353, 0.0
      %vm2024 = vcmask 58368
      %2025 = vst.msk [vmem:[#allocation3 + $0x8] sm:$0x3] %vm2024, 0.0
      %s2026 = scalar_lea.vmem [#allocation3], 144
      %2027 = vst.msk [vmem:[%s2026] sm:$0xff] %vm1353, 0.0
      %2028 = vst.msk [vmem:[%s2026 + $0x8] sm:$0x3] %vm2024, 0.0
      %vm2029 = vcmask 57344
      %2030 = vst.msk [vmem:[#allocation3] sm:$0x1] %vm2029, 0.0
      %2031 = vst.msk [vmem:[#allocation3 + $0x10] sm:$0x1] %vm2029, 0.0
      %2032 = vst.msk [vmem:[#allocation3 + $0x20] sm:$0x1] %vm2029, 0.0
      %2033 = vst.msk [vmem:[#allocation3 + $0x30] sm:$0x1] %vm2029, 0.0
      %2034 = vst.msk [vmem:[#allocation3 + $0x40] sm:$0x1] %vm2029, 0.0
      %2035 = vst.msk [vmem:[#allocation3 + $0x50] sm:$0x1] %vm2029, 0.0
      %2036 = vst.msk [vmem:[#allocation3 + $0x60] sm:$0x1] %vm2029, 0.0
      %2037 = vst.msk [vmem:[#allocation3 + $0x70] sm:$0x1] %vm2029, 0.0
      %2038 = vst.msk [vmem:[#allocation3 + $0x80] sm:$0x1] %vm2029, 0.0
      %2039 = vst.msk [vmem:[#allocation3 + $0x90] sm:$0x1] %vm2029, 0.0
      %2040 = vst.msk [vmem:[#allocation3 + $0x9] sm:$0x1] %vm2029, 0.0
      %2041 = vst.msk [vmem:[#allocation3 + $0x19] sm:$0x1] %vm2029, 0.0
      %2042 = vst.msk [vmem:[#allocation3 + $0x29] sm:$0x1] %vm2029, 0.0
      %2043 = vst.msk [vmem:[#allocation3 + $0x39] sm:$0x1] %vm2029, 0.0
      %2044 = vst.msk [vmem:[#allocation3 + $0x49] sm:$0x1] %vm2029, 0.0
      %2045 = vst.msk [vmem:[#allocation3 + $0x59] sm:$0x1] %vm2029, 0.0
      %2046 = vst.msk [vmem:[#allocation3 + $0x69] sm:$0x1] %vm2029, 0.0
      %2047 = vst.msk [vmem:[#allocation3 + $0x79] sm:$0x1] %vm2029, 0.0
      %2048 = vst.msk [vmem:[#allocation3 + $0x89] sm:$0x1] %vm2029, 0.0
      %2049 = vst.msk [vmem:[#allocation3 + $0x99] sm:$0x1] %vm2029, 0.0
      %s2050 = scalar_lea.vmem [#allocation3], 16
      %2051 = vst.msk [vmem:[%s2050 + $0x1] sm:$0xff] %vm1353, %v2015
      %2052 = vst.msk [vmem:[%s2050 + $0x11] sm:$0xff] %vm1353, %v2016
      %2053 = vst.msk [vmem:[%s2050 + $0x21] sm:$0xff] %vm1353, %v2017
      %2054 = vst.msk [vmem:[%s2050 + $0x31] sm:$0xff] %vm1353, %v2018
      %2055 = vst.msk [vmem:[%s2050 + $0x41] sm:$0xff] %vm1353, %v2019
      %2056 = vst.msk [vmem:[%s2050 + $0x51] sm:$0xff] %vm1353, %v2020
      %2057 = vst.msk [vmem:[%s2050 + $0x61] sm:$0xff] %vm1353, %v2021
      %2058 = vst.msk [vmem:[%s2050 + $0x71] sm:$0xff] %vm1353, %v2022
      %v2059 = vld [vmem:[#allocation3] sm:$0xff]
      %v2060 = vld [vmem:[#allocation3 + $0x10] sm:$0xff]
      %v2061 = vld [vmem:[#allocation3 + $0x20] sm:$0xff]
      %v2062 = vld [vmem:[#allocation3 + $0x30] sm:$0xff]
      %v2063 = vld [vmem:[#allocation3 + $0x40] sm:$0xff]
      %v2064 = vld [vmem:[#allocation3 + $0x50] sm:$0xff]
      %v2065 = vld [vmem:[#allocation3 + $0x60] sm:$0xff]
      %v2066 = vld [vmem:[#allocation3 + $0x70] sm:$0xff]
      %v2067 = vld [vmem:[#allocation3 + $0x1] sm:$0xff]
      %v2068 = vld [vmem:[#allocation3 + $0x11] sm:$0xff]
      %v2069 = vld [vmem:[#allocation3 + $0x21] sm:$0xff]
      %v2070 = vld [vmem:[#allocation3 + $0x31] sm:$0xff]
      %v2071 = vld [vmem:[#allocation3 + $0x41] sm:$0xff]
      %v2072 = vld [vmem:[#allocation3 + $0x51] sm:$0xff]
      %v2073 = vld [vmem:[#allocation3 + $0x61] sm:$0xff]
      %v2074 = vld [vmem:[#allocation3 + $0x71] sm:$0xff]
      %v2075 = vld [vmem:[#allocation3 + $0x2] sm:$0xff]
      %v2076 = vld [vmem:[#allocation3 + $0x12] sm:$0xff]
      %v2077 = vld [vmem:[#allocation3 + $0x22] sm:$0xff]
      %v2078 = vld [vmem:[#allocation3 + $0x32] sm:$0xff]
      %v2079 = vld [vmem:[#allocation3 + $0x42] sm:$0xff]
      %v2080 = vld [vmem:[#allocation3 + $0x52] sm:$0xff]
      %v2081 = vld [vmem:[#allocation3 + $0x62] sm:$0xff]
      %v2082 = vld [vmem:[#allocation3 + $0x72] sm:$0xff]
      %2091 = vrot.lane.b32.xlu0 %v2067, 8
      %v2092 = vpop.permute.xlu0 %2091
      %2093 = vrot.lane.b32.xlu0 %v2068, 8
      %v2094 = vpop.permute.xlu0 %2093
      %2095 = vrot.lane.b32.xlu0 %v2069, 8
      %v2096 = vpop.permute.xlu0 %2095
      %2097 = vrot.lane.b32.xlu0 %v2070, 8
      %v2098 = vpop.permute.xlu0 %2097
      %2099 = vrot.lane.b32.xlu0 %v2071, 8
      %v2100 = vpop.permute.xlu0 %2099
      %2101 = vrot.lane.b32.xlu0 %v2072, 8
      %v2102 = vpop.permute.xlu0 %2101
      %2103 = vrot.lane.b32.xlu0 %v2073, 8
      %v2104 = vpop.permute.xlu0 %2103
      %2105 = vrot.lane.b32.xlu0 %v2074, 8
      %v2106 = vpop.permute.xlu0 %2105
      %2123 = vrot.lane.b32.xlu0 %v2075, 16
      %v2124 = vpop.permute.xlu0 %2123
      %2125 = vrot.lane.b32.xlu0 %v2076, 16
      %v2126 = vpop.permute.xlu0 %2125
      %2127 = vrot.lane.b32.xlu0 %v2077, 16
      %v2128 = vpop.permute.xlu0 %2127
      %2129 = vrot.lane.b32.xlu0 %v2078, 16
      %v2130 = vpop.permute.xlu0 %2129
      %2131 = vrot.lane.b32.xlu0 %v2079, 16
      %v2132 = vpop.permute.xlu0 %2131
      %2133 = vrot.lane.b32.xlu0 %v2080, 16
      %v2134 = vpop.permute.xlu0 %2133
      %2135 = vrot.lane.b32.xlu0 %v2081, 16
      %v2136 = vpop.permute.xlu0 %2135
      %2137 = vrot.lane.b32.xlu0 %v2082, 16
      %v2138 = vpop.permute.xlu0 %2137
      %v2147 = vsel %vm1353, %v2059, %v2092
      %v2148 = vsel %vm1353, %v2060, %v2094
      %v2149 = vsel %vm1353, %v2061, %v2096
      %v2150 = vsel %vm1353, %v2062, %v2098
      %v2151 = vsel %vm1353, %v2063, %v2100
      %v2152 = vsel %vm1353, %v2064, %v2102
      %v2153 = vsel %vm1353, %v2065, %v2104
      %v2154 = vsel %vm1353, %v2066, %v2106
      %vm2155 = vcmask 130048
      %v2156 = vsel %vm2155, %v2147, %v2124
      %v2157 = vsel %vm2155, %v2148, %v2126
      %v2158 = vsel %vm2155, %v2149, %v2128
      %v2159 = vsel %vm2155, %v2150, %v2130
      %v2160 = vsel %vm2155, %v2151, %v2132
      %v2161 = vsel %vm2155, %v2152, %v2134
      %v2162 = vsel %vm2155, %v2153, %v2136
      %v2163 = vsel %vm2155, %v2154, %v2138
      %v2164 = vld [vmem:[%s4] sm:$0xff]
      %v2165 = vld [vmem:[%s4 + $0x8] sm:$0xff]
      %v2166 = vld [vmem:[%s4 + $0x10] sm:$0xff]
      %v2167 = vld [vmem:[%s2050] sm:$0xff]
      %v2168 = vld [vmem:[%s2050 + $0x10] sm:$0xff]
      %v2169 = vld [vmem:[%s2050 + $0x20] sm:$0xff]
      %v2170 = vld [vmem:[%s2050 + $0x30] sm:$0xff]
      %v2171 = vld [vmem:[%s2050 + $0x40] sm:$0xff]
      %v2172 = vld [vmem:[%s2050 + $0x50] sm:$0xff]
      %v2173 = vld [vmem:[%s2050 + $0x60] sm:$0xff]
      %v2174 = vld [vmem:[%s2050 + $0x70] sm:$0xff]
      %v2175 = vld [vmem:[%s2050 + $0x1] sm:$0xff]
      %v2176 = vld [vmem:[%s2050 + $0x11] sm:$0xff]
      %v2177 = vld [vmem:[%s2050 + $0x21] sm:$0xff]
      %v2178 = vld [vmem:[%s2050 + $0x31] sm:$0xff]
      %v2179 = vld [vmem:[%s2050 + $0x41] sm:$0xff]
      %v2180 = vld [vmem:[%s2050 + $0x51] sm:$0xff]
      %v2181 = vld [vmem:[%s2050 + $0x61] sm:$0xff]
      %v2182 = vld [vmem:[%s2050 + $0x71] sm:$0xff]
      %v2183 = vld [vmem:[%s2050 + $0x2] sm:$0xff]
      %v2184 = vld [vmem:[%s2050 + $0x12] sm:$0xff]
      %v2185 = vld [vmem:[%s2050 + $0x22] sm:$0xff]
      %v2186 = vld [vmem:[%s2050 + $0x32] sm:$0xff]
      %v2187 = vld [vmem:[%s2050 + $0x42] sm:$0xff]
      %v2188 = vld [vmem:[%s2050 + $0x52] sm:$0xff]
      %v2189 = vld [vmem:[%s2050 + $0x62] sm:$0xff]
      %v2190 = vld [vmem:[%s2050 + $0x72] sm:$0xff]
      %2199 = vrot.lane.b32.xlu0 %v2175, 8
      %v2200 = vpop.permute.xlu0 %2199
      %2201 = vrot.lane.b32.xlu0 %v2176, 8
      %v2202 = vpop.permute.xlu0 %2201
      %2203 = vrot.lane.b32.xlu0 %v2177, 8
      %v2204 = vpop.permute.xlu0 %2203
      %2205 = vrot.lane.b32.xlu0 %v2178, 8
      %v2206 = vpop.permute.xlu0 %2205
      %2207 = vrot.lane.b32.xlu0 %v2179, 8
      %v2208 = vpop.permute.xlu0 %2207
      %2209 = vrot.lane.b32.xlu0 %v2180, 8
      %v2210 = vpop.permute.xlu0 %2209
      %2211 = vrot.lane.b32.xlu0 %v2181, 8
      %v2212 = vpop.permute.xlu0 %2211
      %2213 = vrot.lane.b32.xlu0 %v2182, 8
      %v2214 = vpop.permute.xlu0 %2213
      %2231 = vrot.lane.b32.xlu0 %v2183, 16
      %v2232 = vpop.permute.xlu0 %2231
      %2233 = vrot.lane.b32.xlu0 %v2184, 16
      %v2234 = vpop.permute.xlu0 %2233
      %2235 = vrot.lane.b32.xlu0 %v2185, 16
      %v2236 = vpop.permute.xlu0 %2235
      %2237 = vrot.lane.b32.xlu0 %v2186, 16
      %v2238 = vpop.permute.xlu0 %2237
      %2239 = vrot.lane.b32.xlu0 %v2187, 16
      %v2240 = vpop.permute.xlu0 %2239
      %2241 = vrot.lane.b32.xlu0 %v2188, 16
      %v2242 = vpop.permute.xlu0 %2241
      %2243 = vrot.lane.b32.xlu0 %v2189, 16
      %v2244 = vpop.permute.xlu0 %2243
      %2245 = vrot.lane.b32.xlu0 %v2190, 16
      %v2246 = vpop.permute.xlu0 %2245
      %v2255 = vsel %vm1353, %v2167, %v2200
      %v2256 = vsel %vm1353, %v2168, %v2202
      %v2257 = vsel %vm1353, %v2169, %v2204
      %v2258 = vsel %vm1353, %v2170, %v2206
      %v2259 = vsel %vm1353, %v2171, %v2208
      %v2260 = vsel %vm1353, %v2172, %v2210
      %v2261 = vsel %vm1353, %v2173, %v2212
      %v2262 = vsel %vm1353, %v2174, %v2214
      %v2263 = vsel %vm2155, %v2255, %v2232
      %v2264 = vsel %vm2155, %v2256, %v2234
      %v2265 = vsel %vm2155, %v2257, %v2236
      %v2266 = vsel %vm2155, %v2258, %v2238
      %v2267 = vsel %vm2155, %v2259, %v2240
      %v2268 = vsel %vm2155, %v2260, %v2242
      %v2269 = vsel %vm2155, %v2261, %v2244
      %v2270 = vsel %vm2155, %v2262, %v2246
      %s2271 = scalar_lea.vmem %s4, 24
      %v2272 = vld [vmem:[%s2271] sm:$0xff]
      %v2273 = vld [vmem:[%s2271 + $0x8] sm:$0xff]
      %v2274 = vld [vmem:[%s2271 + $0x10] sm:$0xff]
      %vm2275 = vcmask 195584
      %v2277 = vsel %vm2275, %v2263, 0
      %v2280 = vsel %vm2275, %v2264, 0
      %v2283 = vsel %vm2275, %v2265, 0
      %v2286 = vsel %vm2275, %v2266, 0
      %v2289 = vsel %vm2275, %v2267, 0
      %v2292 = vsel %vm2275, %v2268, 0
      %v2295 = vsel %vm2275, %v2269, 0
      %v2298 = vsel %vm2275, %v2270, 0
      %2300 = vmatprep.subr.mxu0 0.0
      %2301 = vmatpush1.msra.mxu0 %v2272
      %2302 = vmatprep.subr.mxu0 0.0
      %2303 = vmatpush1.msra.mxu0 %v2273
      %2304 = vmatprep.subr.mxu0 0.0
      %2305 = vmatpush1.msra.mxu0 %v2274
      %2306 = vmatprep.subr.mxu0 0.0
      %2307 = vmatpush1.msra.mxu0 0.0
      %2308 = vmatprep.subr.mxu0 0.0
      %2309 = vmatpush1.msra.mxu0 0.0
      %2310 = vmatprep.subr.mxu0 0.0
      %2311 = vmatpush1.msra.mxu0 0.0
      %2312 = vmatprep.subr.mxu0 0.0
      %2313 = vmatpush1.msra.mxu0 0.0
      %2314 = vmatprep.subr.mxu0 0.0
      %2315 = vmatpush1.msra.mxu0 0.0
      %2316 = vmatprep.subr.mxu0 0.0
      %2317 = vmatpush1.msra.mxu0 0.0
      %2318 = vmatprep.subr.mxu0 0.0
      %2319 = vmatpush1.msra.mxu0 0.0
      %2320 = vmatprep.subr.mxu0 0.0
      %2321 = vmatpush1.msra.mxu0 0.0
      %2322 = vmatprep.subr.mxu0 0.0
      %2323 = vmatpush1.msra.mxu0 0.0
      %2324 = vmatprep.subr.mxu0 0.0
      %2325 = vmatpush1.msra.mxu0 0.0
      %2326 = vmatprep.subr.mxu0 0.0
      %2327 = vmatpush1.msra.mxu0 0.0
      %2328 = vmatprep.subr.mxu0 0.0
      %2329 = vmatpush1.msra.mxu0 0.0
      %2330 = vmatprep.subr.mxu0 0.0
      %2331 = vmatpush1.msra.mxu0 0.0
      %2332 = vmatprep.subr.mxu0 0.0
      %2333 = vmatpush1.msra.mxu0 0.0
      %2334 = vmatprep.subr.mxu0 0.0
      %2335 = vmatpush1.msra.mxu0 0.0
      %2336 = vmatprep.subr.mxu0 0.0
      %2337 = vmatpush1.msra.mxu0 0.0
      %2338 = vmatprep.subr.mxu0 0.0
      %2339 = vmatpush1.msra.mxu0 0.0
      %2340 = vmatprep.subr.mxu0 0.0
      %2341 = vmatpush1.msra.mxu0 0.0
      %2342 = vmatprep.subr.mxu0 0.0
      %2343 = vmatpush1.msra.mxu0 0.0
      %2344 = vmatprep.subr.mxu0 0.0
      %2345 = vmatpush1.msra.mxu0 0.0
      %2346 = vmatprep.subr.mxu0 0.0
      %2347 = vmatpush1.msra.mxu0 0.0
      %2348 = vmatprep.subr.mxu0 0.0
      %2349 = vmatpush1.msra.mxu0 0.0
      %2350 = vmatprep.subr.mxu0 0.0
      %2351 = vmatpush1.msra.mxu0 0.0
      %2352 = vmatprep.subr.mxu0 0.0
      %2353 = vmatpush1.msra.mxu0 0.0
      %2354 = vmatprep.subr.mxu0 0.0
      %2355 = vmatpush1.msra.mxu0 0.0
      %2356 = vmatprep.subr.mxu0 0.0
      %2357 = vmatpush1.msra.mxu0 0.0
      %2358 = vmatprep.subr.mxu0 0.0
      %2359 = vmatpush1.msra.mxu0 0.0
      %2360 = vmatprep.subr.mxu0 0.0
      %2361 = vmatpush1.msra.mxu0 0.0
      %2362 = vmatprep.subr.mxu0 0.0
      %2363 = vmatpush1.msra.mxu0 0.0
      %2364 = vmatprep.mubr.f32.mxu0 0.0
      %2365 = vmatmul.mubr.f32.gmra.mrb[0].mxu0 %v2277
      %v2366 = vpop.f32.mrb[0].mxu0
      %v2367 = vadd.f32 0.0, %v2366
      %v2368 = vpop.f32.mrb[0].mxu0
      %2369 = vmatprep.mubr.f32.mxu0 0.0
      %2370 = vmatmul.mubr.f32.gmra.mrb[0].mxu0 %v2280
      %v2371 = vpop.f32.mrb[0].mxu0
      %v2372 = vadd.f32 0.0, %v2371
      %v2373 = vpop.f32.mrb[0].mxu0
      %2374 = vmatprep.mubr.f32.mxu0 0.0
      %2375 = vmatmul.mubr.f32.gmra.mrb[0].mxu0 %v2283
      %v2376 = vpop.f32.mrb[0].mxu0
      %v2377 = vadd.f32 0.0, %v2376
      %v2378 = vpop.f32.mrb[0].mxu0
      %2379 = vmatprep.mubr.f32.mxu0 0.0
      %2380 = vmatmul.mubr.f32.gmra.mrb[0].mxu0 %v2286
      %v2381 = vpop.f32.mrb[0].mxu0
      %v2382 = vadd.f32 0.0, %v2381
      %v2383 = vpop.f32.mrb[0].mxu0
      %2384 = vmatprep.mubr.f32.mxu0 0.0
      %2385 = vmatmul.mubr.f32.gmra.mrb[0].mxu0 %v2289
      %v2386 = vpop.f32.mrb[0].mxu0
      %v2387 = vadd.f32 0.0, %v2386
      %v2388 = vpop.f32.mrb[0].mxu0
      %2389 = vmatprep.mubr.f32.mxu0 0.0
      %2390 = vmatmul.mubr.f32.gmra.mrb[0].mxu0 %v2292
      %v2391 = vpop.f32.mrb[0].mxu0
      %v2392 = vadd.f32 0.0, %v2391
      %v2393 = vpop.f32.mrb[0].mxu0
      %2394 = vmatprep.mubr.f32.mxu0 0.0
      %2395 = vmatmul.mubr.f32.gmra.mrb[0].mxu0 %v2295
      %v2396 = vpop.f32.mrb[0].mxu0
      %v2397 = vadd.f32 0.0, %v2396
      %v2398 = vpop.f32.mrb[0].mxu0
      %2399 = vmatprep.mubr.f32.mxu0 0.0
      %2400 = vmatmul.mubr.f32.gmra.mrb[0].mxu0 %v2298
      %v2401 = vpop.f32.mrb[0].mxu0
      %v2402 = vadd.f32 0.0, %v2401
      %v2403 = vpop.f32.mrb[0].mxu0
      %2404 = vdwg.mxu0
      %v2406 = vsel %vm2275, %v2156, 0
      %v2409 = vsel %vm2275, %v2157, 0
      %v2412 = vsel %vm2275, %v2158, 0
      %v2415 = vsel %vm2275, %v2159, 0
      %v2418 = vsel %vm2275, %v2160, 0
      %v2421 = vsel %vm2275, %v2161, 0
      %v2424 = vsel %vm2275, %v2162, 0
      %v2427 = vsel %vm2275, %v2163, 0
      %2429 = vmatprep.subr.mxu0 0.0
      %2430 = vmatpush1.msra.mxu0 %v2164
      %2431 = vmatprep.subr.mxu0 0.0
      %2432 = vmatpush1.msra.mxu0 %v2165
      %2433 = vmatprep.subr.mxu0 0.0
      %2434 = vmatpush1.msra.mxu0 %v2166
      %2435 = vmatprep.subr.mxu0 0.0
      %2436 = vmatpush1.msra.mxu0 0.0
      %2437 = vmatprep.subr.mxu0 0.0
      %2438 = vmatpush1.msra.mxu0 0.0
      %2439 = vmatprep.subr.mxu0 0.0
      %2440 = vmatpush1.msra.mxu0 0.0
      %2441 = vmatprep.subr.mxu0 0.0
      %2442 = vmatpush1.msra.mxu0 0.0
      %2443 = vmatprep.subr.mxu0 0.0
      %2444 = vmatpush1.msra.mxu0 0.0
      %2445 = vmatprep.subr.mxu0 0.0
      %2446 = vmatpush1.msra.mxu0 0.0
      %2447 = vmatprep.subr.mxu0 0.0
      %2448 = vmatpush1.msra.mxu0 0.0
      %2449 = vmatprep.subr.mxu0 0.0
      %2450 = vmatpush1.msra.mxu0 0.0
      %2451 = vmatprep.subr.mxu0 0.0
      %2452 = vmatpush1.msra.mxu0 0.0
      %2453 = vmatprep.subr.mxu0 0.0
      %2454 = vmatpush1.msra.mxu0 0.0
      %2455 = vmatprep.subr.mxu0 0.0
      %2456 = vmatpush1.msra.mxu0 0.0
      %2457 = vmatprep.subr.mxu0 0.0
      %2458 = vmatpush1.msra.mxu0 0.0
      %2459 = vmatprep.subr.mxu0 0.0
      %2460 = vmatpush1.msra.mxu0 0.0
      %2461 = vmatprep.subr.mxu0 0.0
      %2462 = vmatpush1.msra.mxu0 0.0
      %2463 = vmatprep.subr.mxu0 0.0
      %2464 = vmatpush1.msra.mxu0 0.0
      %2465 = vmatprep.subr.mxu0 0.0
      %2466 = vmatpush1.msra.mxu0 0.0
      %2467 = vmatprep.subr.mxu0 0.0
      %2468 = vmatpush1.msra.mxu0 0.0
      %2469 = vmatprep.subr.mxu0 0.0
      %2470 = vmatpush1.msra.mxu0 0.0
      %2471 = vmatprep.subr.mxu0 0.0
      %2472 = vmatpush1.msra.mxu0 0.0
      %2473 = vmatprep.subr.mxu0 0.0
      %2474 = vmatpush1.msra.mxu0 0.0
      %2475 = vmatprep.subr.mxu0 0.0
      %2476 = vmatpush1.msra.mxu0 0.0
      %2477 = vmatprep.subr.mxu0 0.0
      %2478 = vmatpush1.msra.mxu0 0.0
      %2479 = vmatprep.subr.mxu0 0.0
      %2480 = vmatpush1.msra.mxu0 0.0
      %2481 = vmatprep.subr.mxu0 0.0
      %2482 = vmatpush1.msra.mxu0 0.0
      %2483 = vmatprep.subr.mxu0 0.0
      %2484 = vmatpush1.msra.mxu0 0.0
      %2485 = vmatprep.subr.mxu0 0.0
      %2486 = vmatpush1.msra.mxu0 0.0
      %2487 = vmatprep.subr.mxu0 0.0
      %2488 = vmatpush1.msra.mxu0 0.0
      %2489 = vmatprep.subr.mxu0 0.0
      %2490 = vmatpush1.msra.mxu0 0.0
      %2491 = vmatprep.subr.mxu0 0.0
      %2492 = vmatpush1.msra.mxu0 0.0
      %2493 = vmatprep.mubr.f32.mxu0 0.0
      %2494 = vmatmul.mubr.f32.gmra.mrb[0].mxu0 %v2406
      %v2495 = vpop.f32.mrb[0].mxu0
      %v2496 = vadd.f32 %v2367, %v2495
      %v2497 = vpop.f32.mrb[0].mxu0
      %2498 = vmatprep.mubr.f32.mxu0 0.0
      %2499 = vmatmul.mubr.f32.gmra.mrb[0].mxu0 %v2409
      %v2500 = vpop.f32.mrb[0].mxu0
      %v2501 = vadd.f32 %v2372, %v2500
      %v2502 = vpop.f32.mrb[0].mxu0
      %2503 = vmatprep.mubr.f32.mxu0 0.0
      %2504 = vmatmul.mubr.f32.gmra.mrb[0].mxu0 %v2412
      %v2505 = vpop.f32.mrb[0].mxu0
      %v2506 = vadd.f32 %v2377, %v2505
      %v2507 = vpop.f32.mrb[0].mxu0
      %2508 = vmatprep.mubr.f32.mxu0 0.0
      %2509 = vmatmul.mubr.f32.gmra.mrb[0].mxu0 %v2415
      %v2510 = vpop.f32.mrb[0].mxu0
      %v2511 = vadd.f32 %v2382, %v2510
      %v2512 = vpop.f32.mrb[0].mxu0
      %2513 = vmatprep.mubr.f32.mxu0 0.0
      %2514 = vmatmul.mubr.f32.gmra.mrb[0].mxu0 %v2418
      %v2515 = vpop.f32.mrb[0].mxu0
      %v2516 = vadd.f32 %v2387, %v2515
      %v2517 = vpop.f32.mrb[0].mxu0
      %2518 = vmatprep.mubr.f32.mxu0 0.0
      %2519 = vmatmul.mubr.f32.gmra.mrb[0].mxu0 %v2421
      %v2520 = vpop.f32.mrb[0].mxu0
      %v2521 = vadd.f32 %v2392, %v2520
      %v2522 = vpop.f32.mrb[0].mxu0
      %2523 = vmatprep.mubr.f32.mxu0 0.0
      %2524 = vmatmul.mubr.f32.gmra.mrb[0].mxu0 %v2424
      %v2525 = vpop.f32.mrb[0].mxu0
      %v2526 = vadd.f32 %v2397, %v2525
      %v2527 = vpop.f32.mrb[0].mxu0
      %2528 = vmatprep.mubr.f32.mxu0 0.0
      %2529 = vmatmul.mubr.f32.gmra.mrb[0].mxu0 %v2427
      %v2530 = vpop.f32.mrb[0].mxu0
      %v2531 = vadd.f32 %v2402, %v2530
      %v2532 = vpop.f32.mrb[0].mxu0
      %2533 = vdwg.mxu0
      %s2534 = scalar_lea.vmem [#allocation3], 32
      %v2535 = vld [vmem:[%s2534] sm:$0xff]
      %v2536 = vld [vmem:[%s2534 + $0x10] sm:$0xff]
      %v2537 = vld [vmem:[%s2534 + $0x20] sm:$0xff]
      %v2538 = vld [vmem:[%s2534 + $0x30] sm:$0xff]
      %v2539 = vld [vmem:[%s2534 + $0x40] sm:$0xff]
      %v2540 = vld [vmem:[%s2534 + $0x50] sm:$0xff]
      %v2541 = vld [vmem:[%s2534 + $0x60] sm:$0xff]
      %v2542 = vld [vmem:[%s2534 + $0x70] sm:$0xff]
      %v2543 = vld [vmem:[%s2534 + $0x1] sm:$0xff]
      %v2544 = vld [vmem:[%s2534 + $0x11] sm:$0xff]
      %v2545 = vld [vmem:[%s2534 + $0x21] sm:$0xff]
      %v2546 = vld [vmem:[%s2534 + $0x31] sm:$0xff]
      %v2547 = vld [vmem:[%s2534 + $0x41] sm:$0xff]
      %v2548 = vld [vmem:[%s2534 + $0x51] sm:$0xff]
      %v2549 = vld [vmem:[%s2534 + $0x61] sm:$0xff]
      %v2550 = vld [vmem:[%s2534 + $0x71] sm:$0xff]
      %v2551 = vld [vmem:[%s2534 + $0x2] sm:$0xff]
      %v2552 = vld [vmem:[%s2534 + $0x12] sm:$0xff]
      %v2553 = vld [vmem:[%s2534 + $0x22] sm:$0xff]
      %v2554 = vld [vmem:[%s2534 + $0x32] sm:$0xff]
      %v2555 = vld [vmem:[%s2534 + $0x42] sm:$0xff]
      %v2556 = vld [vmem:[%s2534 + $0x52] sm:$0xff]
      %v2557 = vld [vmem:[%s2534 + $0x62] sm:$0xff]
      %v2558 = vld [vmem:[%s2534 + $0x72] sm:$0xff]
      %2567 = vrot.lane.b32.xlu0 %v2543, 8
      %v2568 = vpop.permute.xlu0 %2567
      %2569 = vrot.lane.b32.xlu0 %v2544, 8
      %v2570 = vpop.permute.xlu0 %2569
      %2571 = vrot.lane.b32.xlu0 %v2545, 8
      %v2572 = vpop.permute.xlu0 %2571
      %2573 = vrot.lane.b32.xlu0 %v2546, 8
      %v2574 = vpop.permute.xlu0 %2573
      %2575 = vrot.lane.b32.xlu0 %v2547, 8
      %v2576 = vpop.permute.xlu0 %2575
      %2577 = vrot.lane.b32.xlu0 %v2548, 8
      %v2578 = vpop.permute.xlu0 %2577
      %2579 = vrot.lane.b32.xlu0 %v2549, 8
      %v2580 = vpop.permute.xlu0 %2579
      %2581 = vrot.lane.b32.xlu0 %v2550, 8
      %v2582 = vpop.permute.xlu0 %2581
      %2599 = vrot.lane.b32.xlu0 %v2551, 16
      %v2600 = vpop.permute.xlu0 %2599
      %2601 = vrot.lane.b32.xlu0 %v2552, 16
      %v2602 = vpop.permute.xlu0 %2601
      %2603 = vrot.lane.b32.xlu0 %v2553, 16
      %v2604 = vpop.permute.xlu0 %2603
      %2605 = vrot.lane.b32.xlu0 %v2554, 16
      %v2606 = vpop.permute.xlu0 %2605
      %2607 = vrot.lane.b32.xlu0 %v2555, 16
      %v2608 = vpop.permute.xlu0 %2607
      %2609 = vrot.lane.b32.xlu0 %v2556, 16
      %v2610 = vpop.permute.xlu0 %2609
      %2611 = vrot.lane.b32.xlu0 %v2557, 16
      %v2612 = vpop.permute.xlu0 %2611
      %2613 = vrot.lane.b32.xlu0 %v2558, 16
      %v2614 = vpop.permute.xlu0 %2613
      %v2623 = vsel %vm1353, %v2535, %v2568
      %v2624 = vsel %vm1353, %v2536, %v2570
      %v2625 = vsel %vm1353, %v2537, %v2572
      %v2626 = vsel %vm1353, %v2538, %v2574
      %v2627 = vsel %vm1353, %v2539, %v2576
      %v2628 = vsel %vm1353, %v2540, %v2578
      %v2629 = vsel %vm1353, %v2541, %v2580
      %v2630 = vsel %vm1353, %v2542, %v2582
      %v2631 = vsel %vm2155, %v2623, %v2600
      %v2632 = vsel %vm2155, %v2624, %v2602
      %v2633 = vsel %vm2155, %v2625, %v2604
      %v2634 = vsel %vm2155, %v2626, %v2606
      %v2635 = vsel %vm2155, %v2627, %v2608
      %v2636 = vsel %vm2155, %v2628, %v2610
      %v2637 = vsel %vm2155, %v2629, %v2612
      %v2638 = vsel %vm2155, %v2630, %v2614
      %s2639 = scalar_lea.vmem %s4, 48
      %v2640 = vld [vmem:[%s2639] sm:$0xff]
      %v2641 = vld [vmem:[%s2639 + $0x8] sm:$0xff]
      %v2642 = vld [vmem:[%s2639 + $0x10] sm:$0xff]
      %v2644 = vsel %vm2275, %v2631, 0
      %v2647 = vsel %vm2275, %v2632, 0
      %v2650 = vsel %vm2275, %v2633, 0
      %v2653 = vsel %vm2275, %v2634, 0
      %v2656 = vsel %vm2275, %v2635, 0
      %v2659 = vsel %vm2275, %v2636, 0
      %v2662 = vsel %vm2275, %v2637, 0
      %v2665 = vsel %vm2275, %v2638, 0
      %2667 = vmatprep.subr.mxu0 0.0
      %2668 = vmatpush1.msra.mxu0 %v2640
      %2669 = vmatprep.subr.mxu0 0.0
      %2670 = vmatpush1.msra.mxu0 %v2641
      %2671 = vmatprep.subr.mxu0 0.0
      %2672 = vmatpush1.msra.mxu0 %v2642
      %2673 = vmatprep.subr.mxu0 0.0
      %2674 = vmatpush1.msra.mxu0 0.0
      %2675 = vmatprep.subr.mxu0 0.0
      %2676 = vmatpush1.msra.mxu0 0.0
      %2677 = vmatprep.subr.mxu0 0.0
      %2678 = vmatpush1.msra.mxu0 0.0
      %2679 = vmatprep.subr.mxu0 0.0
      %2680 = vmatpush1.msra.mxu0 0.0
      %2681 = vmatprep.subr.mxu0 0.0
      %2682 = vmatpush1.msra.mxu0 0.0
      %2683 = vmatprep.subr.mxu0 0.0
      %2684 = vmatpush1.msra.mxu0 0.0
      %2685 = vmatprep.subr.mxu0 0.0
      %2686 = vmatpush1.msra.mxu0 0.0
      %2687 = vmatprep.subr.mxu0 0.0
      %2688 = vmatpush1.msra.mxu0 0.0
      %2689 = vmatprep.subr.mxu0 0.0
      %2690 = vmatpush1.msra.mxu0 0.0
      %2691 = vmatprep.subr.mxu0 0.0
      %2692 = vmatpush1.msra.mxu0 0.0
      %2693 = vmatprep.subr.mxu0 0.0
      %2694 = vmatpush1.msra.mxu0 0.0
      %2695 = vmatprep.subr.mxu0 0.0
      %2696 = vmatpush1.msra.mxu0 0.0
      %2697 = vmatprep.subr.mxu0 0.0
      %2698 = vmatpush1.msra.mxu0 0.0
      %2699 = vmatprep.subr.mxu0 0.0
      %2700 = vmatpush1.msra.mxu0 0.0
      %2701 = vmatprep.subr.mxu0 0.0
      %2702 = vmatpush1.msra.mxu0 0.0
      %2703 = vmatprep.subr.mxu0 0.0
      %2704 = vmatpush1.msra.mxu0 0.0
      %2705 = vmatprep.subr.mxu0 0.0
      %2706 = vmatpush1.msra.mxu0 0.0
      %2707 = vmatprep.subr.mxu0 0.0
      %2708 = vmatpush1.msra.mxu0 0.0
      %2709 = vmatprep.subr.mxu0 0.0
      %2710 = vmatpush1.msra.mxu0 0.0
      %2711 = vmatprep.subr.mxu0 0.0
      %2712 = vmatpush1.msra.mxu0 0.0
      %2713 = vmatprep.subr.mxu0 0.0
      %2714 = vmatpush1.msra.mxu0 0.0
      %2715 = vmatprep.subr.mxu0 0.0
      %2716 = vmatpush1.msra.mxu0 0.0
      %2717 = vmatprep.subr.mxu0 0.0
      %2718 = vmatpush1.msra.mxu0 0.0
      %2719 = vmatprep.subr.mxu0 0.0
      %2720 = vmatpush1.msra.mxu0 0.0
      %2721 = vmatprep.subr.mxu0 0.0
      %2722 = vmatpush1.msra.mxu0 0.0
      %2723 = vmatprep.subr.mxu0 0.0
      %2724 = vmatpush1.msra.mxu0 0.0
      %2725 = vmatprep.subr.mxu0 0.0
      %2726 = vmatpush1.msra.mxu0 0.0
      %2727 = vmatprep.subr.mxu0 0.0
      %2728 = vmatpush1.msra.mxu0 0.0
      %2729 = vmatprep.subr.mxu0 0.0
      %2730 = vmatpush1.msra.mxu0 0.0
      %2731 = vmatprep.mubr.f32.mxu0 0.0
      %2732 = vmatmul.mubr.f32.gmra.mrb[0].mxu0 %v2644
      %v2733 = vpop.f32.mrb[0].mxu0
      %v2734 = vadd.f32 0.0, %v2733
      %v2735 = vpop.f32.mrb[0].mxu0
      %2736 = vmatprep.mubr.f32.mxu0 0.0
      %2737 = vmatmul.mubr.f32.gmra.mrb[0].mxu0 %v2647
      %v2738 = vpop.f32.mrb[0].mxu0
      %v2739 = vadd.f32 0.0, %v2738
      %v2740 = vpop.f32.mrb[0].mxu0
      %2741 = vmatprep.mubr.f32.mxu0 0.0
      %2742 = vmatmul.mubr.f32.gmra.mrb[0].mxu0 %v2650
      %v2743 = vpop.f32.mrb[0].mxu0
      %v2744 = vadd.f32 0.0, %v2743
      %v2745 = vpop.f32.mrb[0].mxu0
      %2746 = vmatprep.mubr.f32.mxu0 0.0
      %2747 = vmatmul.mubr.f32.gmra.mrb[0].mxu0 %v2653
      %v2748 = vpop.f32.mrb[0].mxu0
      %v2749 = vadd.f32 0.0, %v2748
      %v2750 = vpop.f32.mrb[0].mxu0
      %2751 = vmatprep.mubr.f32.mxu0 0.0
      %2752 = vmatmul.mubr.f32.gmra.mrb[0].mxu0 %v2656
      %v2753 = vpop.f32.mrb[0].mxu0
      %v2754 = vadd.f32 0.0, %v2753
      %v2755 = vpop.f32.mrb[0].mxu0
      %2756 = vmatprep.mubr.f32.mxu0 0.0
      %2757 = vmatmul.mubr.f32.gmra.mrb[0].mxu0 %v2659
      %v2758 = vpop.f32.mrb[0].mxu0
      %v2759 = vadd.f32 0.0, %v2758
      %v2760 = vpop.f32.mrb[0].mxu0
      %2761 = vmatprep.mubr.f32.mxu0 0.0
      %2762 = vmatmul.mubr.f32.gmra.mrb[0].mxu0 %v2662
      %v2763 = vpop.f32.mrb[0].mxu0
      %v2764 = vadd.f32 0.0, %v2763
      %v2765 = vpop.f32.mrb[0].mxu0
      %2766 = vmatprep.mubr.f32.mxu0 0.0
      %2767 = vmatmul.mubr.f32.gmra.mrb[0].mxu0 %v2665
      %v2768 = vpop.f32.mrb[0].mxu0
      %v2769 = vadd.f32 0.0, %v2768
      %v2770 = vpop.f32.mrb[0].mxu0
      %2771 = vdwg.mxu0
      %v2772 = vadd.f32 %v2496, %v2734
      %v2773 = vadd.f32 %v2501, %v2739
      %v2774 = vadd.f32 %v2506, %v2744
      %v2775 = vadd.f32 %v2511, %v2749
      %v2776 = vadd.f32 %v2516, %v2754
      %v2777 = vadd.f32 %v2521, %v2759
      %v2778 = vadd.f32 %v2526, %v2764
      %v2779 = vadd.f32 %v2531, %v2769
      %v2780 = vld [vmem:[%s5] sm:$0x1]
      %v2782 = vlaneseq
      %v2783 = vshrl.u32 %v2782, 7
      %v2784 = vsub.s32 0, %v2783
      %v2785 = vrot.slane %v2780, %v2784
      %v2787 = vmul.f32 %v2772, %v2785
      %v2788 = vmul.f32 %v2773, %v2785
      %v2789 = vmul.f32 %v2774, %v2785
      %v2790 = vmul.f32 %v2775, %v2785
      %v2791 = vmul.f32 %v2776, %v2785
      %v2792 = vmul.f32 %v2777, %v2785
      %v2793 = vmul.f32 %v2778, %v2785
      %v2794 = vmul.f32 %v2779, %v2785
      %v2795 = vld [vmem:[%s6] sm:$0x1]
      %v2797 = vlaneseq
      %v2798 = vshrl.u32 %v2797, 7
      %v2799 = vsub.s32 0, %v2798
      %v2800 = vrot.slane %v2795, %v2799
      %v2802 = vadd.f32 %v2787, %v2800
      %v2803 = vadd.f32 %v2788, %v2800
      %v2804 = vadd.f32 %v2789, %v2800
      %v2805 = vadd.f32 %v2790, %v2800
      %v2806 = vadd.f32 %v2791, %v2800
      %v2807 = vadd.f32 %v2792, %v2800
      %v2808 = vadd.f32 %v2793, %v2800
      %v2809 = vadd.f32 %v2794, %v2800
      %v2810 = vmax.f32 %v2802, 0.0
      %v2811 = vmax.f32 %v2803, 0.0
      %v2812 = vmax.f32 %v2804, 0.0
      %v2813 = vmax.f32 %v2805, 0.0
      %v2814 = vmax.f32 %v2806, 0.0
      %v2815 = vmax.f32 %v2807, 0.0
      %v2816 = vmax.f32 %v2808, 0.0
      %v2817 = vmax.f32 %v2809, 0.0
      %2818 = vst.msk [vmem:[%s278] sm:$0xff] %vm1353, %v2810
      %2819 = vst.msk [vmem:[%s278 + $0x8] sm:$0xff] %vm1353, %v2811
      %2820 = vst.msk [vmem:[%s278 + $0x10] sm:$0xff] %vm1353, %v2812
      %2821 = vst.msk [vmem:[%s278 + $0x18] sm:$0xff] %vm1353, %v2813
      %2822 = vst.msk [vmem:[%s278 + $0x20] sm:$0xff] %vm1353, %v2814
      %2823 = vst.msk [vmem:[%s278 + $0x28] sm:$0xff] %vm1353, %v2815
      %2824 = vst.msk [vmem:[%s278 + $0x30] sm:$0xff] %vm1353, %v2816
      %2825 = vst.msk [vmem:[%s278 + $0x38] sm:$0xff] %vm1353, %v2817
      %s2826 = smul.u32 8, %s18
      %p2827 = scmp.lt.s32.totalorder %s2826, 15
      %s2828 = scalar_select %p2827, %s2826, 15
      %s2829 = smul.addr %s2828, 8
      %s2830 = scalar_lea.vmem %s7, %s2829
      // Predicated region
      $region49: #{tpu_custom_call.1} parent=47 // pred_check
        %p2831 = pneg %p188
      $region50: #{tpu_custom_call.1} parent=47 // pred_check_branch
        %2833 = sbr.rel (%p2831) target = $region52
      $region51: #{tpu_custom_call.1} parent=47 // pred_region
        %s2834 = smul.u32 8, %s18
      $region52: #{tpu_custom_call.1} parent=47 // pred_fallthru
        _
    $region48: #{tpu_custom_call.1} parent=5 // pred_fallthru
      _
    %p2835 = scmp.le.s32.totalorder 2, %s13
    // Predicated region
    $region53: #{tpu_custom_call.1} parent=5 // pred_check
      %p2836 = pneg %p2835
    $region54: #{tpu_custom_call.1} parent=5 // pred_check_branch
      %2838 = sbr.rel (%p2836) target = $region56
    $region55: #{tpu_custom_call.1} parent=5 // pred_region
      %s2839 = ssub.s32 %s13, 2
      // Predicated region
      $region57: #{tpu_custom_call.1} parent=55 // pred_check
        %p2840 = pneg %p194
      $region58: #{tpu_custom_call.1} parent=55 // pred_check_branch
        %2842 = sbr.rel (%p2840) target = $region60
      $region59: #{tpu_custom_call.1} parent=55 // pred_region
        %s2843 = smul.u32 8, %s19
        %p2844 = scmp.lt.s32.totalorder %s2843, 15
        %s2845 = scalar_select %p2844, %s2843, 15
        %s2846 = smul.addr %s2845, 8
        %s2847 = scalar_lea.vmem %s7, %s2846
      $region60: #{tpu_custom_call.1} parent=55 // pred_fallthru
        _
    $region56: #{tpu_custom_call.1} parent=5 // pred_fallthru
      _
  $region6: #{tpu_custom_call.1} parent=0 // loop_footer
    %s17 = sadd.s32 1, %s13
  $region7: #{tpu_custom_call.1} parent=0 // loop_footer_branch
    %12 = sbr.rel target = $region3
  $region8: #{tpu_custom_call.1} parent=0 // loop_exit
    _

</llo_original>
